<compile_context>
chip_gen: v6e
topology: v6e:2x2x1
jax: 0.10.0
libtpu: 0.0.40
codegen_flags: <defaults>
</compile_context>

<pallas_src>
import functools
import math

import jax
import jax.numpy as jnp
import numpy as np
from jax import lax
from jax.experimental import pallas as pl
from jax.experimental.pallas import tpu as pltpu

_LANE = 128


def _c2g_kernel(emb_ref,
                pre_w_ref, pre_b_ref, pre_bhn_ref,
                gru_wih_ref, gru_bh_ref, gru_bin_ref, gru_whh_ref,
                wbig_ref, bbig_ref, x1_ref,
                out_ref):
    n_frames, B, Op = out_ref.shape          # Op = 128-padded output width
    Hp = x1_ref.shape[1]                     # 128-padded hidden width
    dot = functools.partial(jnp.dot, preferred_element_type=jnp.float32)

    # ---- pre_gru over a length-1 sequence with zero initial hidden ----------
    # h0 == 0, so the recurrent matmuls vanish; r/z h-biases are pre-folded
    # into pre_b, only the n-gate h-bias (multiplied by r) stays separate.
    xg = dot(emb_ref[...], pre_w_ref[...]) + pre_b_ref[...]          # (B, 3Hp)
    r = jax.nn.sigmoid(xg[:, :Hp])
    z = jax.nn.sigmoid(xg[:, Hp:2 * Hp])
    g = jnp.tanh(xg[:, 2 * Hp:] + r * pre_bhn_ref[...])
    enc = (1.0 - z) * g                                              # (B, Hp)

    # ---- decoder hidden never updates -> hoist the h-side pre-activations.
    # r/z input biases already folded into gru_bh (loop-invariant).
    hg = dot(enc, gru_whh_ref[...]) + gru_bh_ref[...]                # (B, 3Hp)
    hg_r = hg[:, :Hp]
    hg_z = hg[:, Hp:2 * Hp]
    hg_n = hg[:, 2 * Hp:]
    # hoisted broadcasts (done once, off the per-step critical path)
    bin_b = jnp.broadcast_to(gru_bin_ref[...], (B, Hp))              # n input bias
    bbig_b = jnp.broadcast_to(bbig_ref[...], (B, Op + Hp))           # fused out bias
    x1 = jnp.broadcast_to(x1_ref[...], (B, Hp))                      # relu(b_x)

    # frame 0 is never written by the torch loop -> zero only frame 0.
    out_ref[0] = jnp.zeros((B, Op), jnp.float32)

    def body(t, x):
        # fused GRU input gates: one (B,Hp) @ (Hp,3Hp) MXU push per step
        xg = dot(x, gru_wih_ref[...])                                # (B, 3Hp)
        r = jax.nn.sigmoid(xg[:, :Hp] + hg_r)
        z = jax.nn.sigmoid(xg[:, Hp:2 * Hp] + hg_z)
        n = jnp.tanh(xg[:, 2 * Hp:] + bin_b + r * hg_n)
        d = (1.0 - z) * n + z * enc                                  # (B, Hp)
        # fused out_layer | (pre_linear·BN)∘out_layer: one (B,Hp)@(Hp,Op+Hp)
        comb = dot(d, wbig_ref[...]) + bbig_b                        # (B, Op+Hp)
        out_ref[t] = comb[:, :Op]                                    # lane-dense
        return jnp.maximum(comb[:, Op:], 0.0)                        # next x

    if n_frames > 1:
        lax.fori_loop(1, n_frames, body, x1, unroll=min(n_frames - 1, 8))


def _pad_cols(w, width):
    return jnp.pad(w, ((0, 0), (0, width - w.shape[1])))


def _pad_rows(w, height):
    return jnp.pad(w, ((0, height - w.shape[0]), (0, 0)))


def _fuse_params(params, Hp, Op):
    """One-time algebraic weight fusion + 128-lane segment padding (in XLA)."""
    eps = 1e-5

    # ---- pre_gru: fuse gates, fold r/z biases (h0 == 0) ---------------------
    pre_w = jnp.concatenate(
        [_pad_cols(params["pre_wih"][g], Hp) for g in range(3)], axis=1)      # (H, 3Hp)
    pre_b = jnp.concatenate([
        _pad_cols(params["pre_bih"][0] + params["pre_bhh"][0], Hp),
        _pad_cols(params["pre_bih"][1] + params["pre_bhh"][1], Hp),
        _pad_cols(params["pre_bih"][2], Hp)], axis=1)                         # (1, 3Hp)
    pre_bhn = _pad_cols(params["pre_bhh"][2], Hp)                             # (1, Hp)

    # ---- decoder GRU: fuse gates, pad rows (inputs are Hp-wide) -------------
    gru_wih = jnp.concatenate(
        [_pad_rows(_pad_cols(params["gru_wih"][g], Hp), Hp) for g in range(3)], axis=1)
    gru_whh = jnp.concatenate(
        [_pad_rows(_pad_cols(params["gru_whh"][g], Hp), Hp) for g in range(3)], axis=1)
    gru_bh = jnp.concatenate([
        _pad_cols(params["gru_bih"][0] + params["gru_bhh"][0], Hp),
        _pad_cols(params["gru_bih"][1] + params["gru_bhh"][1], Hp),
        _pad_cols(params["gru_bhh"][2], Hp)], axis=1)                         # (1, 3Hp)
    gru_bin = _pad_cols(params["gru_bih"][2], Hp)                             # (1, Hp)

    # ---- BN(eval) folded into pre_linear, composed with out_layer -----------
    bn_scale = params["bn_g"] * lax.rsqrt(params["bn_v"] + eps)               # (1, H)
    bn_shift = params["bn_b"] - params["bn_m"] * bn_scale
    lin_w_s = params["lin_w"] * bn_scale                                      # (O, H)
    b_x = params["lin_b"] * bn_scale + bn_shift                               # (1, H)
    w_comb = params["out_w"] @ lin_w_s                                        # (H, H)
    b_comb = params["out_b"] @ lin_w_s + b_x                                  # (1, H)

    wbig = jnp.concatenate([_pad_rows(_pad_cols(params["out_w"], Op), Hp),
                            _pad_rows(_pad_cols(w_comb, Hp), Hp)], axis=1)    # (Hp, Op+Hp)
    bbig = jnp.concatenate([_pad_cols(params["out_b"], Op),
                            _pad_cols(b_comb, Hp)], axis=1)                   # (1, Op+Hp)
    x1 = _pad_cols(jnp.maximum(b_x, 0.0), Hp)                                 # (1, Hp)

    return (pre_w, pre_b, pre_bhn,
            gru_wih, gru_bh, gru_bin, gru_whh,
            wbig, bbig, x1)


def cluster2gesture_forward(params, input_cluster, out_poses):
    """Matches cluster2gesture_model.forward(input_cluster, out_poses).

    The kernel is latency-bound on the serial time recurrence; batch size can
    be scaled to ~128-256 sequences at essentially unchanged wall-clock.
    """
    B, n_frames, O = out_poses.shape
    H = params["embedding"].shape[1]
    Hp = ((H + _LANE - 1) // _LANE) * _LANE
    Op = ((O + _LANE - 1) // _LANE) * _LANE

    # embedding row-gather stays in XLA/HBM: the table never enters VMEM.
    embedded = jnp.take(params["embedding"], input_cluster, axis=0).astype(jnp.float32)
    args = (embedded,) + _fuse_params(params, Hp, Op)

    vmem = pl.BlockSpec(memory_space=pltpu.MemorySpace.VMEM)
    out_tbo = pl.pallas_call(
        _c2g_kernel,
        out_shape=jax.ShapeDtypeStruct((n_frames, B, Op), jnp.float32),
        in_specs=[vmem] * len(args),
        out_specs=vmem,
    )(*args)
    # slice the lane padding off and go back to (B, T, O)
    return jnp.transpose(out_tbo[:, :, :O], (1, 0, 2))


# ----------------------------- pure-JAX reference ----------------------------
def _gru_cell_ref(x, h, wih, whh, bih, bhh):
    r = jax.nn.sigmoid(x @ wih[0] + bih[0] + h @ whh[0] + bhh[0])
    z = jax.nn.sigmoid(x @ wih[1] + bih[1] + h @ whh[1] + bhh[1])
    n = jnp.tanh(x @ wih[2] + bih[2] + r * (h @ whh[2] + bhh[2]))
    return (1.0 - z) * n + z * h


def reference_forward(params, input_cluster, out_poses):
    B, T, O = out_poses.shape
    emb = params["embedding"][input_cluster]
    h0 = jnp.zeros((B, params["embedding"].shape[1]), jnp.float32)
    enc_hidden = _gru_cell_ref(emb, h0, params["pre_wih"], params["pre_whh"],
                               params["pre_bih"], params["pre_bhh"])
    eps = 1e-5
    scale = params["bn_g"] / jnp.sqrt(params["bn_v"] + eps)
    shift = params["bn_b"] - params["bn_m"] * scale
    outputs = jnp.zeros((B, T, O), jnp.float32)
    dec_in = jnp.zeros((B, O), jnp.float32)
    for t in range(1, T):
        x = jnp.maximum((dec_in @ params["lin_w"] + params["lin_b"]) * scale + shift, 0.0)
        d_out = _gru_cell_ref(x, enc_hidden, params["gru_wih"], params["gru_whh"],
                              params["gru_bih"], params["gru_bhh"])
        out = d_out @ params["out_w"] + params["out_b"]
        outputs = outputs.at[:, t, :].set(out)
        dec_in = out
    return outputs


# ------------------------------- param init ----------------------------------
def init_params(key, input_size, hidden_size, output_size):
    H, O = hidden_size, output_size
    ks = jax.random.split(key, 12)
    sg = 1.0 / math.sqrt(H)     # GRU / out_layer init scale (PyTorch style)
    sl = 1.0 / math.sqrt(O)     # pre_linear init scale

    def u(k, shape, s):
        return jax.random.uniform(k, shape, jnp.float32, -s, s)

    return {
        "embedding": jax.random.normal(ks[0], (input_size, H), jnp.float32),
        "pre_wih": u(ks[1], (3, H, H), sg), "pre_whh": u(ks[2], (3, H, H), sg),
        "pre_bih": u(ks[3], (3, 1, H), sg), "pre_bhh": u(ks[4], (3, 1, H), sg),
        "lin_w": u(ks[5], (O, H), sl), "lin_b": u(ks[6], (1, H), sl),
        "bn_g": jnp.ones((1, H), jnp.float32), "bn_b": jnp.zeros((1, H), jnp.float32),
        "bn_m": jnp.zeros((1, H), jnp.float32), "bn_v": jnp.ones((1, H), jnp.float32),
        "gru_wih": u(ks[7], (3, H, H), sg), "gru_whh": u(ks[8], (3, H, H), sg),
        "gru_bih": u(ks[9], (3, 1, H), sg), "gru_bhh": u(ks[10], (3, 1, H), sg),
        "out_w": u(ks[11], (H, O), sg), "out_b": jnp.zeros((1, O), jnp.float32),
    }


if __name__ == "__main__":
    B, input_size, H, O, n_frames = 2, 10, 32, 16, 8

    key = jax.random.PRNGKey(0)
    kp, kc, ko = jax.random.split(key, 3)
    params = init_params(kp, input_size, H, O)
    input_cluster = jax.random.randint(kc, (B,), 0, input_size)
    out_poses = jax.random.normal(ko, (B, n_frames, O), jnp.float32)  # shape-only input

    fwd = jax.jit(cluster2gesture_forward)
    result = jax.block_until_ready(fwd(params, input_cluster, out_poses))
    ref = jax.block_until_ready(reference_forward(params, input_cluster, out_poses))

    # tolerance covers the (mathematically identical) f32 re-association from
    # the out_layer∘pre_linear weight pre-composition and bias folding.
    np.testing.assert_allclose(np.asarray(result), np.asarray(ref), atol=2e-4, rtol=2e-4)
    assert result.shape == out_poses.shape
    print("KERNEL_OK")
</pallas_src>

<mosaic_0001>
module attributes {stable_mosaic.version = 11 : i64} {
  func.func @_c2g_kernel(%arg0: memref<2x32xf32, #tpu.memory_space<vmem>>, %arg1: memref<32x384xf32, #tpu.memory_space<vmem>>, %arg2: memref<1x384xf32, #tpu.memory_space<vmem>>, %arg3: memref<1x128xf32, #tpu.memory_space<vmem>>, %arg4: memref<128x384xf32, #tpu.memory_space<vmem>>, %arg5: memref<1x384xf32, #tpu.memory_space<vmem>>, %arg6: memref<1x128xf32, #tpu.memory_space<vmem>>, %arg7: memref<128x384xf32, #tpu.memory_space<vmem>>, %arg8: memref<128x256xf32, #tpu.memory_space<vmem>>, %arg9: memref<1x256xf32, #tpu.memory_space<vmem>>, %arg10: memref<1x128xf32, #tpu.memory_space<vmem>>, %arg11: memref<8x2x128xf32, #tpu.memory_space<vmem>>) attributes {dimension_semantics = [], scalar_prefetch = 0 : i64, scratch_operands = 0 : i64, tpu.core_type = #tpu.core_type<tc>} {
    %c0 = arith.constant 0 : index
    %c0_0 = arith.constant 0 : index
    %0 = vector.load %arg0[%c0, %c0_0] : memref<2x32xf32, #tpu.memory_space<vmem>>, vector<2x32xf32>
    %c0_1 = arith.constant 0 : index
    %c0_2 = arith.constant 0 : index
    %1 = vector.load %arg1[%c0_1, %c0_2] : memref<32x384xf32, #tpu.memory_space<vmem>>, vector<32x384xf32>
    %cst = arith.constant dense<0.000000e+00> : vector<2x384xf32>
    %2 = tpu.matmul %0, %1, %cst {dimension_numbers = #tpu.dot_dimension_numbers<[1], [0], [0], [1], [0, 0, 1, 1], [], []>} : vector<2x32xf32>, vector<32x384xf32>, vector<2x384xf32> -> vector<2x384xf32>
    %c0_3 = arith.constant 0 : index
    %c0_4 = arith.constant 0 : index
    %3 = vector.load %arg2[%c0_3, %c0_4] : memref<1x384xf32, #tpu.memory_space<vmem>>, vector<1x384xf32>
    %4 = vector.broadcast %3 : vector<1x384xf32> to vector<2x384xf32>
    %5 = arith.addf %2, %4 : vector<2x384xf32>
    %6 = vector.extract_strided_slice %5 {offsets = [0, 0], sizes = [2, 128], strides = [1, 1]} : vector<2x384xf32> to vector<2x128xf32>
    %7 = arith.negf %6 : vector<2x128xf32>
    %8 = math.exp %7 : vector<2x128xf32>
    %cst_5 = arith.constant 1.000000e+00 : f32
    %9 = vector.broadcast %cst_5 : f32 to vector<2x128xf32>
    %10 = arith.addf %9, %8 : vector<2x128xf32>
    %11 = arith.divf %9, %10 : vector<2x128xf32>
    %12 = vector.extract_strided_slice %5 {offsets = [0, 128], sizes = [2, 128], strides = [1, 1]} : vector<2x384xf32> to vector<2x128xf32>
    %13 = arith.negf %12 : vector<2x128xf32>
    %14 = math.exp %13 : vector<2x128xf32>
    %cst_6 = arith.constant 1.000000e+00 : f32
    %15 = vector.broadcast %cst_6 : f32 to vector<2x128xf32>
    %16 = arith.addf %15, %14 : vector<2x128xf32>
    %17 = arith.divf %15, %16 : vector<2x128xf32>
    %18 = vector.extract_strided_slice %5 {offsets = [0, 256], sizes = [2, 128], strides = [1, 1]} : vector<2x384xf32> to vector<2x128xf32>
    %c0_7 = arith.constant 0 : index
    %c0_8 = arith.constant 0 : index
    %19 = vector.load %arg3[%c0_7, %c0_8] : memref<1x128xf32, #tpu.memory_space<vmem>>, vector<1x128xf32>
    %20 = vector.broadcast %19 : vector<1x128xf32> to vector<2x128xf32>
    %21 = arith.mulf %11, %20 : vector<2x128xf32>
    %22 = arith.addf %18, %21 : vector<2x128xf32>
    %23 = math.tanh %22 : vector<2x128xf32>
    %cst_9 = arith.constant 1.000000e+00 : f32
    %24 = vector.broadcast %cst_9 : f32 to vector<2x128xf32>
    %25 = arith.subf %24, %17 : vector<2x128xf32>
    %26 = arith.mulf %25, %23 : vector<2x128xf32>
    %c0_10 = arith.constant 0 : index
    %c0_11 = arith.constant 0 : index
    %27 = vector.load %arg7[%c0_10, %c0_11] : memref<128x384xf32, #tpu.memory_space<vmem>>, vector<128x384xf32>
    %cst_12 = arith.constant dense<0.000000e+00> : vector<2x384xf32>
    %28 = tpu.matmul %26, %27, %cst_12 {dimension_numbers = #tpu.dot_dimension_numbers<[1], [0], [0], [1], [0, 0, 1, 1], [], []>} : vector<2x128xf32>, vector<128x384xf32>, vector<2x384xf32> -> vector<2x384xf32>
    %c0_13 = arith.constant 0 : index
    %c0_14 = arith.constant 0 : index
    %29 = vector.load %arg5[%c0_13, %c0_14] : memref<1x384xf32, #tpu.memory_space<vmem>>, vector<1x384xf32>
    %30 = vector.broadcast %29 : vector<1x384xf32> to vector<2x384xf32>
    %31 = arith.addf %28, %30 : vector<2x384xf32>
    %32 = vector.extract_strided_slice %31 {offsets = [0, 0], sizes = [2, 128], strides = [1, 1]} : vector<2x384xf32> to vector<2x128xf32>
    %33 = vector.extract_strided_slice %31 {offsets = [0, 128], sizes = [2, 128], strides = [1, 1]} : vector<2x384xf32> to vector<2x128xf32>
    %34 = vector.extract_strided_slice %31 {offsets = [0, 256], sizes = [2, 128], strides = [1, 1]} : vector<2x384xf32> to vector<2x128xf32>
    %c0_15 = arith.constant 0 : index
    %c0_16 = arith.constant 0 : index
    %35 = vector.load %arg6[%c0_15, %c0_16] : memref<1x128xf32, #tpu.memory_space<vmem>>, vector<1x128xf32>
    %36 = vector.shape_cast %35 : vector<1x128xf32> to vector<1x128xf32>
    %37 = vector.broadcast %36 : vector<1x128xf32> to vector<2x128xf32>
    %c0_17 = arith.constant 0 : index
    %c0_18 = arith.constant 0 : index
    %38 = vector.load %arg9[%c0_17, %c0_18] : memref<1x256xf32, #tpu.memory_space<vmem>>, vector<1x256xf32>
    %39 = vector.shape_cast %38 : vector<1x256xf32> to vector<1x256xf32>
    %40 = vector.broadcast %39 : vector<1x256xf32> to vector<2x256xf32>
    %c0_19 = arith.constant 0 : index
    %c0_20 = arith.constant 0 : index
    %41 = vector.load %arg10[%c0_19, %c0_20] : memref<1x128xf32, #tpu.memory_space<vmem>>, vector<1x128xf32>
    %42 = vector.shape_cast %41 : vector<1x128xf32> to vector<1x128xf32>
    %43 = vector.broadcast %42 : vector<1x128xf32> to vector<2x128xf32>
    %cst_21 = arith.constant 0.000000e+00 : f32
    %44 = vector.broadcast %cst_21 : f32 to vector<2x128xf32>
    %c0_22 = arith.constant 0 : index
    %c0_23 = arith.constant 0 : index
    %c0_24 = arith.constant 0 : index
    %45 = vector.load %arg11[%c0_22, %c0_23, %c0_24] : memref<8x2x128xf32, #tpu.memory_space<vmem>>, vector<1x2x128xf32>
    %46 = vector.shape_cast %45 : vector<1x2x128xf32> to vector<2x128xf32>
    %47 = vector.shape_cast %44 : vector<2x128xf32> to vector<1x2x128xf32>
    tpu.vector_store %arg11[%c0_22, %c0_23, %c0_24], %47 {strides = array<i32>} : memref<8x2x128xf32, #tpu.memory_space<vmem>>, vector<1x2x128xf32>,
    %c1_i32 = arith.constant 1 : i32
    %c0_25 = arith.constant 0 : index
    %c0_26 = arith.constant 0 : index
    %48 = vector.load %arg4[%c0_25, %c0_26] : memref<128x384xf32, #tpu.memory_space<vmem>>, vector<128x384xf32>
    %cst_27 = arith.constant dense<0.000000e+00> : vector<2x384xf32>
    %49 = tpu.matmul %43, %48, %cst_27 {dimension_numbers = #tpu.dot_dimension_numbers<[1], [0], [0], [1], [0, 0, 1, 1], [], []>} : vector<2x128xf32>, vector<128x384xf32>, vector<2x384xf32> -> vector<2x384xf32>
    %50 = vector.extract_strided_slice %49 {offsets = [0, 0], sizes = [2, 128], strides = [1, 1]} : vector<2x384xf32> to vector<2x128xf32>
    %51 = arith.addf %50, %32 : vector<2x128xf32>
    %52 = arith.negf %51 : vector<2x128xf32>
    %53 = math.exp %52 : vector<2x128xf32>
    %cst_28 = arith.constant 1.000000e+00 : f32
    %54 = vector.broadcast %cst_28 : f32 to vector<2x128xf32>
    %55 = arith.addf %54, %53 : vector<2x128xf32>
    %56 = arith.divf %54, %55 : vector<2x128xf32>
    %57 = vector.extract_strided_slice %49 {offsets = [0, 128], sizes = [2, 128], strides = [1, 1]} : vector<2x384xf32> to vector<2x128xf32>
    %58 = arith.addf %57, %33 : vector<2x128xf32>
    %59 = arith.negf %58 : vector<2x128xf32>
    %60 = math.exp %59 : vector<2x128xf32>
    %cst_29 = arith.constant 1.000000e+00 : f32
    %61 = vector.broadcast %cst_29 : f32 to vector<2x128xf32>
    %62 = arith.addf %61, %60 : vector<2x128xf32>
    %63 = arith.divf %61, %62 : vector<2x128xf32>
    %64 = vector.extract_strided_slice %49 {offsets = [0, 256], sizes = [2, 128], strides = [1, 1]} : vector<2x384xf32> to vector<2x128xf32>
    %65 = arith.addf %64, %37 : vector<2x128xf32>
    %66 = arith.mulf %56, %34 : vector<2x128xf32>
    %67 = arith.addf %65, %66 : vector<2x128xf32>
    %68 = math.tanh %67 : vector<2x128xf32>
    %cst_30 = arith.constant 1.000000e+00 : f32
    %69 = vector.broadcast %cst_30 : f32 to vector<2x128xf32>
    %70 = arith.subf %69, %63 : vector<2x128xf32>
    %71 = arith.mulf %70, %68 : vector<2x128xf32>
    %72 = arith.mulf %63, %26 : vector<2x128xf32>
    %73 = arith.addf %71, %72 : vector<2x128xf32>
    %c0_31 = arith.constant 0 : index
    %c0_32 = arith.constant 0 : index
    %74 = vector.load %arg8[%c0_31, %c0_32] : memref<128x256xf32, #tpu.memory_space<vmem>>, vector<128x256xf32>
    %cst_33 = arith.constant dense<0.000000e+00> : vector<2x256xf32>
    %75 = tpu.matmul %73, %74, %cst_33 {dimension_numbers = #tpu.dot_dimension_numbers<[1], [0], [0], [1], [0, 0, 1, 1], [], []>} : vector<2x128xf32>, vector<128x256xf32>, vector<2x256xf32> -> vector<2x256xf32>
    %76 = arith.addf %75, %40 : vector<2x256xf32>
    %77 = vector.extract_strided_slice %76 {offsets = [0, 0], sizes = [2, 128], strides = [1, 1]} : vector<2x256xf32> to vector<2x128xf32>
    %78 = arith.index_cast %c1_i32 : i32 to index
    %c0_34 = arith.constant 0 : index
    %c0_35 = arith.constant 0 : index
    %79 = vector.load %arg11[%78, %c0_34, %c0_35] : memref<8x2x128xf32, #tpu.memory_space<vmem>>, vector<1x2x128xf32>
    %80 = vector.shape_cast %79 : vector<1x2x128xf32> to vector<2x128xf32>
    %81 = vector.shape_cast %77 : vector<2x128xf32> to vector<1x2x128xf32>
    tpu.vector_store %arg11[%78, %c0_34, %c0_35], %81 {strides = array<i32>} : memref<8x2x128xf32, #tpu.memory_space<vmem>>, vector<1x2x128xf32>,
    %82 = vector.extract_strided_slice %76 {offsets = [0, 128], sizes = [2, 128], strides = [1, 1]} : vector<2x256xf32> to vector<2x128xf32>
    %cst_36 = arith.constant 0.000000e+00 : f32
    %83 = vector.broadcast %cst_36 : f32 to vector<2x128xf32>
    %84 = arith.maximumf %82, %83 : vector<2x128xf32>
    %c2_i32 = arith.constant 2 : i32
    %c0_37 = arith.constant 0 : index
    %c0_38 = arith.constant 0 : index
    %85 = vector.load %arg4[%c0_37, %c0_38] : memref<128x384xf32, #tpu.memory_space<vmem>>, vector<128x384xf32>
    %cst_39 = arith.constant dense<0.000000e+00> : vector<2x384xf32>
    %86 = tpu.matmul %84, %85, %cst_39 {dimension_numbers = #tpu.dot_dimension_numbers<[1], [0], [0], [1], [0, 0, 1, 1], [], []>} : vector<2x128xf32>, vector<128x384xf32>, vector<2x384xf32> -> vector<2x384xf32>
    %87 = vector.extract_strided_slice %86 {offsets = [0, 0], sizes = [2, 128], strides = [1, 1]} : vector<2x384xf32> to vector<2x128xf32>
    %88 = arith.addf %87, %32 : vector<2x128xf32>
    %89 = arith.negf %88 : vector<2x128xf32>
    %90 = math.exp %89 : vector<2x128xf32>
    %cst_40 = arith.constant 1.000000e+00 : f32
    %91 = vector.broadcast %cst_40 : f32 to vector<2x128xf32>
    %92 = arith.addf %91, %90 : vector<2x128xf32>
    %93 = arith.divf %91, %92 : vector<2x128xf32>
    %94 = vector.extract_strided_slice %86 {offsets = [0, 128], sizes = [2, 128], strides = [1, 1]} : vector<2x384xf32> to vector<2x128xf32>
    %95 = arith.addf %94, %33 : vector<2x128xf32>
    %96 = arith.negf %95 : vector<2x128xf32>
    %97 = math.exp %96 : vector<2x128xf32>
    %cst_41 = arith.constant 1.000000e+00 : f32
    %98 = vector.broadcast %cst_41 : f32 to vector<2x128xf32>
    %99 = arith.addf %98, %97 : vector<2x128xf32>
    %100 = arith.divf %98, %99 : vector<2x128xf32>
    %101 = vector.extract_strided_slice %86 {offsets = [0, 256], sizes = [2, 128], strides = [1, 1]} : vector<2x384xf32> to vector<2x128xf32>
    %102 = arith.addf %101, %37 : vector<2x128xf32>
    %103 = arith.mulf %93, %34 : vector<2x128xf32>
    %104 = arith.addf %102, %103 : vector<2x128xf32>
    %105 = math.tanh %104 : vector<2x128xf32>
    %cst_42 = arith.constant 1.000000e+00 : f32
    %106 = vector.broadcast %cst_42 : f32 to vector<2x128xf32>
    %107 = arith.subf %106, %100 : vector<2x128xf32>
    %108 = arith.mulf %107, %105 : vector<2x128xf32>
    %109 = arith.mulf %100, %26 : vector<2x128xf32>
    %110 = arith.addf %108, %109 : vector<2x128xf32>
    %c0_43 = arith.constant 0 : index
    %c0_44 = arith.constant 0 : index
    %111 = vector.load %arg8[%c0_43, %c0_44] : memref<128x256xf32, #tpu.memory_space<vmem>>, vector<128x256xf32>
    %cst_45 = arith.constant dense<0.000000e+00> : vector<2x256xf32>
    %112 = tpu.matmul %110, %111, %cst_45 {dimension_numbers = #tpu.dot_dimension_numbers<[1], [0], [0], [1], [0, 0, 1, 1], [], []>} : vector<2x128xf32>, vector<128x256xf32>, vector<2x256xf32> -> vector<2x256xf32>
    %113 = arith.addf %112, %40 : vector<2x256xf32>
    %114 = vector.extract_strided_slice %113 {offsets = [0, 0], sizes = [2, 128], strides = [1, 1]} : vector<2x256xf32> to vector<2x128xf32>
    %115 = arith.index_cast %c2_i32 : i32 to index
    %c0_46 = arith.constant 0 : index
    %c0_47 = arith.constant 0 : index
    %116 = vector.load %arg11[%115, %c0_46, %c0_47] : memref<8x2x128xf32, #tpu.memory_space<vmem>>, vector<1x2x128xf32>
    %117 = vector.shape_cast %116 : vector<1x2x128xf32> to vector<2x128xf32>
    %118 = vector.shape_cast %114 : vector<2x128xf32> to vector<1x2x128xf32>
    tpu.vector_store %arg11[%115, %c0_46, %c0_47], %118 {strides = array<i32>} : memref<8x2x128xf32, #tpu.memory_space<vmem>>, vector<1x2x128xf32>,
    %119 = vector.extract_strided_slice %113 {offsets = [0, 128], sizes = [2, 128], strides = [1, 1]} : vector<2x256xf32> to vector<2x128xf32>
    %cst_48 = arith.constant 0.000000e+00 : f32
    %120 = vector.broadcast %cst_48 : f32 to vector<2x128xf32>
    %121 = arith.maximumf %119, %120 : vector<2x128xf32>
    %c3_i32 = arith.constant 3 : i32
    %c0_49 = arith.constant 0 : index
    %c0_50 = arith.constant 0 : index
    %122 = vector.load %arg4[%c0_49, %c0_50] : memref<128x384xf32, #tpu.memory_space<vmem>>, vector<128x384xf32>
    %cst_51 = arith.constant dense<0.000000e+00> : vector<2x384xf32>
    %123 = tpu.matmul %121, %122, %cst_51 {dimension_numbers = #tpu.dot_dimension_numbers<[1], [0], [0], [1], [0, 0, 1, 1], [], []>} : vector<2x128xf32>, vector<128x384xf32>, vector<2x384xf32> -> vector<2x384xf32>
    %124 = vector.extract_strided_slice %123 {offsets = [0, 0], sizes = [2, 128], strides = [1, 1]} : vector<2x384xf32> to vector<2x128xf32>
    %125 = arith.addf %124, %32 : vector<2x128xf32>
    %126 = arith.negf %125 : vector<2x128xf32>
    %127 = math.exp %126 : vector<2x128xf32>
    %cst_52 = arith.constant 1.000000e+00 : f32
    %128 = vector.broadcast %cst_52 : f32 to vector<2x128xf32>
    %129 = arith.addf %128, %127 : vector<2x128xf32>
    %130 = arith.divf %128, %129 : vector<2x128xf32>
    %131 = vector.extract_strided_slice %123 {offsets = [0, 128], sizes = [2, 128], strides = [1, 1]} : vector<2x384xf32> to vector<2x128xf32>
    %132 = arith.addf %131, %33 : vector<2x128xf32>
    %133 = arith.negf %132 : vector<2x128xf32>
    %134 = math.exp %133 : vector<2x128xf32>
    %cst_53 = arith.constant 1.000000e+00 : f32
    %135 = vector.broadcast %cst_53 : f32 to vector<2x128xf32>
    %136 = arith.addf %135, %134 : vector<2x128xf32>
    %137 = arith.divf %135, %136 : vector<2x128xf32>
    %138 = vector.extract_strided_slice %123 {offsets = [0, 256], sizes = [2, 128], strides = [1, 1]} : vector<2x384xf32> to vector<2x128xf32>
    %139 = arith.addf %138, %37 : vector<2x128xf32>
    %140 = arith.mulf %130, %34 : vector<2x128xf32>
    %141 = arith.addf %139, %140 : vector<2x128xf32>
    %142 = math.tanh %141 : vector<2x128xf32>
    %cst_54 = arith.constant 1.000000e+00 : f32
    %143 = vector.broadcast %cst_54 : f32 to vector<2x128xf32>
    %144 = arith.subf %143, %137 : vector<2x128xf32>
    %145 = arith.mulf %144, %142 : vector<2x128xf32>
    %146 = arith.mulf %137, %26 : vector<2x128xf32>
    %147 = arith.addf %145, %146 : vector<2x128xf32>
    %c0_55 = arith.constant 0 : index
    %c0_56 = arith.constant 0 : index
    %148 = vector.load %arg8[%c0_55, %c0_56] : memref<128x256xf32, #tpu.memory_space<vmem>>, vector<128x256xf32>
    %cst_57 = arith.constant dense<0.000000e+00> : vector<2x256xf32>
    %149 = tpu.matmul %147, %148, %cst_57 {dimension_numbers = #tpu.dot_dimension_numbers<[1], [0], [0], [1], [0, 0, 1, 1], [], []>} : vector<2x128xf32>, vector<128x256xf32>, vector<2x256xf32> -> vector<2x256xf32>
    %150 = arith.addf %149, %40 : vector<2x256xf32>
    %151 = vector.extract_strided_slice %150 {offsets = [0, 0], sizes = [2, 128], strides = [1, 1]} : vector<2x256xf32> to vector<2x128xf32>
    %152 = arith.index_cast %c3_i32 : i32 to index
    %c0_58 = arith.constant 0 : index
    %c0_59 = arith.constant 0 : index
    %153 = vector.load %arg11[%152, %c0_58, %c0_59] : memref<8x2x128xf32, #tpu.memory_space<vmem>>, vector<1x2x128xf32>
    %154 = vector.shape_cast %153 : vector<1x2x128xf32> to vector<2x128xf32>
    %155 = vector.shape_cast %151 : vector<2x128xf32> to vector<1x2x128xf32>
    tpu.vector_store %arg11[%152, %c0_58, %c0_59], %155 {strides = array<i32>} : memref<8x2x128xf32, #tpu.memory_space<vmem>>, vector<1x2x128xf32>,
    %156 = vector.extract_strided_slice %150 {offsets = [0, 128], sizes = [2, 128], strides = [1, 1]} : vector<2x256xf32> to vector<2x128xf32>
    %cst_60 = arith.constant 0.000000e+00 : f32
    %157 = vector.broadcast %cst_60 : f32 to vector<2x128xf32>
    %158 = arith.maximumf %156, %157 : vector<2x128xf32>
    %c4_i32 = arith.constant 4 : i32
    %c0_61 = arith.constant 0 : index
    %c0_62 = arith.constant 0 : index
    %159 = vector.load %arg4[%c0_61, %c0_62] : memref<128x384xf32, #tpu.memory_space<vmem>>, vector<128x384xf32>
    %cst_63 = arith.constant dense<0.000000e+00> : vector<2x384xf32>
    %160 = tpu.matmul %158, %159, %cst_63 {dimension_numbers = #tpu.dot_dimension_numbers<[1], [0], [0], [1], [0, 0, 1, 1], [], []>} : vector<2x128xf32>, vector<128x384xf32>, vector<2x384xf32> -> vector<2x384xf32>
    %161 = vector.extract_strided_slice %160 {offsets = [0, 0], sizes = [2, 128], strides = [1, 1]} : vector<2x384xf32> to vector<2x128xf32>
    %162 = arith.addf %161, %32 : vector<2x128xf32>
    %163 = arith.negf %162 : vector<2x128xf32>
    %164 = math.exp %163 : vector<2x128xf32>
    %cst_64 = arith.constant 1.000000e+00 : f32
    %165 = vector.broadcast %cst_64 : f32 to vector<2x128xf32>
    %166 = arith.addf %165, %164 : vector<2x128xf32>
    %167 = arith.divf %165, %166 : vector<2x128xf32>
    %168 = vector.extract_strided_slice %160 {offsets = [0, 128], sizes = [2, 128], strides = [1, 1]} : vector<2x384xf32> to vector<2x128xf32>
    %169 = arith.addf %168, %33 : vector<2x128xf32>
    %170 = arith.negf %169 : vector<2x128xf32>
    %171 = math.exp %170 : vector<2x128xf32>
    %cst_65 = arith.constant 1.000000e+00 : f32
    %172 = vector.broadcast %cst_65 : f32 to vector<2x128xf32>
    %173 = arith.addf %172, %171 : vector<2x128xf32>
    %174 = arith.divf %172, %173 : vector<2x128xf32>
    %175 = vector.extract_strided_slice %160 {offsets = [0, 256], sizes = [2, 128], strides = [1, 1]} : vector<2x384xf32> to vector<2x128xf32>
    %176 = arith.addf %175, %37 : vector<2x128xf32>
    %177 = arith.mulf %167, %34 : vector<2x128xf32>
    %178 = arith.addf %176, %177 : vector<2x128xf32>
    %179 = math.tanh %178 : vector<2x128xf32>
    %cst_66 = arith.constant 1.000000e+00 : f32
    %180 = vector.broadcast %cst_66 : f32 to vector<2x128xf32>
    %181 = arith.subf %180, %174 : vector<2x128xf32>
    %182 = arith.mulf %181, %179 : vector<2x128xf32>
    %183 = arith.mulf %174, %26 : vector<2x128xf32>
    %184 = arith.addf %182, %183 : vector<2x128xf32>
    %c0_67 = arith.constant 0 : index
    %c0_68 = arith.constant 0 : index
    %185 = vector.load %arg8[%c0_67, %c0_68] : memref<128x256xf32, #tpu.memory_space<vmem>>, vector<128x256xf32>
    %cst_69 = arith.constant dense<0.000000e+00> : vector<2x256xf32>
    %186 = tpu.matmul %184, %185, %cst_69 {dimension_numbers = #tpu.dot_dimension_numbers<[1], [0], [0], [1], [0, 0, 1, 1], [], []>} : vector<2x128xf32>, vector<128x256xf32>, vector<2x256xf32> -> vector<2x256xf32>
    %187 = arith.addf %186, %40 : vector<2x256xf32>
    %188 = vector.extract_strided_slice %187 {offsets = [0, 0], sizes = [2, 128], strides = [1, 1]} : vector<2x256xf32> to vector<2x128xf32>
    %189 = arith.index_cast %c4_i32 : i32 to index
    %c0_70 = arith.constant 0 : index
    %c0_71 = arith.constant 0 : index
    %190 = vector.load %arg11[%189, %c0_70, %c0_71] : memref<8x2x128xf32, #tpu.memory_space<vmem>>, vector<1x2x128xf32>
    %191 = vector.shape_cast %190 : vector<1x2x128xf32> to vector<2x128xf32>
    %192 = vector.shape_cast %188 : vector<2x128xf32> to vector<1x2x128xf32>
    tpu.vector_store %arg11[%189, %c0_70, %c0_71], %192 {strides = array<i32>} : memref<8x2x128xf32, #tpu.memory_space<vmem>>, vector<1x2x128xf32>,
    %193 = vector.extract_strided_slice %187 {offsets = [0, 128], sizes = [2, 128], strides = [1, 1]} : vector<2x256xf32> to vector<2x128xf32>
    %cst_72 = arith.constant 0.000000e+00 : f32
    %194 = vector.broadcast %cst_72 : f32 to vector<2x128xf32>
    %195 = arith.maximumf %193, %194 : vector<2x128xf32>
    %c5_i32 = arith.constant 5 : i32
    %c0_73 = arith.constant 0 : index
    %c0_74 = arith.constant 0 : index
    %196 = vector.load %arg4[%c0_73, %c0_74] : memref<128x384xf32, #tpu.memory_space<vmem>>, vector<128x384xf32>
    %cst_75 = arith.constant dense<0.000000e+00> : vector<2x384xf32>
    %197 = tpu.matmul %195, %196, %cst_75 {dimension_numbers = #tpu.dot_dimension_numbers<[1], [0], [0], [1], [0, 0, 1, 1], [], []>} : vector<2x128xf32>, vector<128x384xf32>, vector<2x384xf32> -> vector<2x384xf32>
    %198 = vector.extract_strided_slice %197 {offsets = [0, 0], sizes = [2, 128], strides = [1, 1]} : vector<2x384xf32> to vector<2x128xf32>
    %199 = arith.addf %198, %32 : vector<2x128xf32>
    %200 = arith.negf %199 : vector<2x128xf32>
    %201 = math.exp %200 : vector<2x128xf32>
    %cst_76 = arith.constant 1.000000e+00 : f32
    %202 = vector.broadcast %cst_76 : f32 to vector<2x128xf32>
    %203 = arith.addf %202, %201 : vector<2x128xf32>
    %204 = arith.divf %202, %203 : vector<2x128xf32>
    %205 = vector.extract_strided_slice %197 {offsets = [0, 128], sizes = [2, 128], strides = [1, 1]} : vector<2x384xf32> to vector<2x128xf32>
    %206 = arith.addf %205, %33 : vector<2x128xf32>
    %207 = arith.negf %206 : vector<2x128xf32>
    %208 = math.exp %207 : vector<2x128xf32>
    %cst_77 = arith.constant 1.000000e+00 : f32
    %209 = vector.broadcast %cst_77 : f32 to vector<2x128xf32>
    %210 = arith.addf %209, %208 : vector<2x128xf32>
    %211 = arith.divf %209, %210 : vector<2x128xf32>
    %212 = vector.extract_strided_slice %197 {offsets = [0, 256], sizes = [2, 128], strides = [1, 1]} : vector<2x384xf32> to vector<2x128xf32>
    %213 = arith.addf %212, %37 : vector<2x128xf32>
    %214 = arith.mulf %204, %34 : vector<2x128xf32>
    %215 = arith.addf %213, %214 : vector<2x128xf32>
    %216 = math.tanh %215 : vector<2x128xf32>
    %cst_78 = arith.constant 1.000000e+00 : f32
    %217 = vector.broadcast %cst_78 : f32 to vector<2x128xf32>
    %218 = arith.subf %217, %211 : vector<2x128xf32>
    %219 = arith.mulf %218, %216 : vector<2x128xf32>
    %220 = arith.mulf %211, %26 : vector<2x128xf32>
    %221 = arith.addf %219, %220 : vector<2x128xf32>
    %c0_79 = arith.constant 0 : index
    %c0_80 = arith.constant 0 : index
    %222 = vector.load %arg8[%c0_79, %c0_80] : memref<128x256xf32, #tpu.memory_space<vmem>>, vector<128x256xf32>
    %cst_81 = arith.constant dense<0.000000e+00> : vector<2x256xf32>
    %223 = tpu.matmul %221, %222, %cst_81 {dimension_numbers = #tpu.dot_dimension_numbers<[1], [0], [0], [1], [0, 0, 1, 1], [], []>} : vector<2x128xf32>, vector<128x256xf32>, vector<2x256xf32> -> vector<2x256xf32>
    %224 = arith.addf %223, %40 : vector<2x256xf32>
    %225 = vector.extract_strided_slice %224 {offsets = [0, 0], sizes = [2, 128], strides = [1, 1]} : vector<2x256xf32> to vector<2x128xf32>
    %226 = arith.index_cast %c5_i32 : i32 to index
    %c0_82 = arith.constant 0 : index
    %c0_83 = arith.constant 0 : index
    %227 = vector.load %arg11[%226, %c0_82, %c0_83] : memref<8x2x128xf32, #tpu.memory_space<vmem>>, vector<1x2x128xf32>
    %228 = vector.shape_cast %227 : vector<1x2x128xf32> to vector<2x128xf32>
    %229 = vector.shape_cast %225 : vector<2x128xf32> to vector<1x2x128xf32>
    tpu.vector_store %arg11[%226, %c0_82, %c0_83], %229 {strides = array<i32>} : memref<8x2x128xf32, #tpu.memory_space<vmem>>, vector<1x2x128xf32>,
    %230 = vector.extract_strided_slice %224 {offsets = [0, 128], sizes = [2, 128], strides = [1, 1]} : vector<2x256xf32> to vector<2x128xf32>
    %cst_84 = arith.constant 0.000000e+00 : f32
    %231 = vector.broadcast %cst_84 : f32 to vector<2x128xf32>
    %232 = arith.maximumf %230, %231 : vector<2x128xf32>
    %c6_i32 = arith.constant 6 : i32
    %c0_85 = arith.constant 0 : index
    %c0_86 = arith.constant 0 : index
    %233 = vector.load %arg4[%c0_85, %c0_86] : memref<128x384xf32, #tpu.memory_space<vmem>>, vector<128x384xf32>
    %cst_87 = arith.constant dense<0.000000e+00> : vector<2x384xf32>
    %234 = tpu.matmul %232, %233, %cst_87 {dimension_numbers = #tpu.dot_dimension_numbers<[1], [0], [0], [1], [0, 0, 1, 1], [], []>} : vector<2x128xf32>, vector<128x384xf32>, vector<2x384xf32> -> vector<2x384xf32>
    %235 = vector.extract_strided_slice %234 {offsets = [0, 0], sizes = [2, 128], strides = [1, 1]} : vector<2x384xf32> to vector<2x128xf32>
    %236 = arith.addf %235, %32 : vector<2x128xf32>
    %237 = arith.negf %236 : vector<2x128xf32>
    %238 = math.exp %237 : vector<2x128xf32>
    %cst_88 = arith.constant 1.000000e+00 : f32
    %239 = vector.broadcast %cst_88 : f32 to vector<2x128xf32>
    %240 = arith.addf %239, %238 : vector<2x128xf32>
    %241 = arith.divf %239, %240 : vector<2x128xf32>
    %242 = vector.extract_strided_slice %234 {offsets = [0, 128], sizes = [2, 128], strides = [1, 1]} : vector<2x384xf32> to vector<2x128xf32>
    %243 = arith.addf %242, %33 : vector<2x128xf32>
    %244 = arith.negf %243 : vector<2x128xf32>
    %245 = math.exp %244 : vector<2x128xf32>
    %cst_89 = arith.constant 1.000000e+00 : f32
    %246 = vector.broadcast %cst_89 : f32 to vector<2x128xf32>
    %247 = arith.addf %246, %245 : vector<2x128xf32>
    %248 = arith.divf %246, %247 : vector<2x128xf32>
    %249 = vector.extract_strided_slice %234 {offsets = [0, 256], sizes = [2, 128], strides = [1, 1]} : vector<2x384xf32> to vector<2x128xf32>
    %250 = arith.addf %249, %37 : vector<2x128xf32>
    %251 = arith.mulf %241, %34 : vector<2x128xf32>
    %252 = arith.addf %250, %251 : vector<2x128xf32>
    %253 = math.tanh %252 : vector<2x128xf32>
    %cst_90 = arith.constant 1.000000e+00 : f32
    %254 = vector.broadcast %cst_90 : f32 to vector<2x128xf32>
    %255 = arith.subf %254, %248 : vector<2x128xf32>
    %256 = arith.mulf %255, %253 : vector<2x128xf32>
    %257 = arith.mulf %248, %26 : vector<2x128xf32>
    %258 = arith.addf %256, %257 : vector<2x128xf32>
    %c0_91 = arith.constant 0 : index
    %c0_92 = arith.constant 0 : index
    %259 = vector.load %arg8[%c0_91, %c0_92] : memref<128x256xf32, #tpu.memory_space<vmem>>, vector<128x256xf32>
    %cst_93 = arith.constant dense<0.000000e+00> : vector<2x256xf32>
    %260 = tpu.matmul %258, %259, %cst_93 {dimension_numbers = #tpu.dot_dimension_numbers<[1], [0], [0], [1], [0, 0, 1, 1], [], []>} : vector<2x128xf32>, vector<128x256xf32>, vector<2x256xf32> -> vector<2x256xf32>
    %261 = arith.addf %260, %40 : vector<2x256xf32>
    %262 = vector.extract_strided_slice %261 {offsets = [0, 0], sizes = [2, 128], strides = [1, 1]} : vector<2x256xf32> to vector<2x128xf32>
    %263 = arith.index_cast %c6_i32 : i32 to index
    %c0_94 = arith.constant 0 : index
    %c0_95 = arith.constant 0 : index
    %264 = vector.load %arg11[%263, %c0_94, %c0_95] : memref<8x2x128xf32, #tpu.memory_space<vmem>>, vector<1x2x128xf32>
    %265 = vector.shape_cast %264 : vector<1x2x128xf32> to vector<2x128xf32>
    %266 = vector.shape_cast %262 : vector<2x128xf32> to vector<1x2x128xf32>
    tpu.vector_store %arg11[%263, %c0_94, %c0_95], %266 {strides = array<i32>} : memref<8x2x128xf32, #tpu.memory_space<vmem>>, vector<1x2x128xf32>,
    %267 = vector.extract_strided_slice %261 {offsets = [0, 128], sizes = [2, 128], strides = [1, 1]} : vector<2x256xf32> to vector<2x128xf32>
    %cst_96 = arith.constant 0.000000e+00 : f32
    %268 = vector.broadcast %cst_96 : f32 to vector<2x128xf32>
    %269 = arith.maximumf %267, %268 : vector<2x128xf32>
    %c7_i32 = arith.constant 7 : i32
    %c0_97 = arith.constant 0 : index
    %c0_98 = arith.constant 0 : index
    %270 = vector.load %arg4[%c0_97, %c0_98] : memref<128x384xf32, #tpu.memory_space<vmem>>, vector<128x384xf32>
    %cst_99 = arith.constant dense<0.000000e+00> : vector<2x384xf32>
    %271 = tpu.matmul %269, %270, %cst_99 {dimension_numbers = #tpu.dot_dimension_numbers<[1], [0], [0], [1], [0, 0, 1, 1], [], []>} : vector<2x128xf32>, vector<128x384xf32>, vector<2x384xf32> -> vector<2x384xf32>
    %272 = vector.extract_strided_slice %271 {offsets = [0, 0], sizes = [2, 128], strides = [1, 1]} : vector<2x384xf32> to vector<2x128xf32>
    %273 = arith.addf %272, %32 : vector<2x128xf32>
    %274 = arith.negf %273 : vector<2x128xf32>
    %275 = math.exp %274 : vector<2x128xf32>
    %cst_100 = arith.constant 1.000000e+00 : f32
    %276 = vector.broadcast %cst_100 : f32 to vector<2x128xf32>
    %277 = arith.addf %276, %275 : vector<2x128xf32>
    %278 = arith.divf %276, %277 : vector<2x128xf32>
    %279 = vector.extract_strided_slice %271 {offsets = [0, 128], sizes = [2, 128], strides = [1, 1]} : vector<2x384xf32> to vector<2x128xf32>
    %280 = arith.addf %279, %33 : vector<2x128xf32>
    %281 = arith.negf %280 : vector<2x128xf32>
    %282 = math.exp %281 : vector<2x128xf32>
    %cst_101 = arith.constant 1.000000e+00 : f32
    %283 = vector.broadcast %cst_101 : f32 to vector<2x128xf32>
    %284 = arith.addf %283, %282 : vector<2x128xf32>
    %285 = arith.divf %283, %284 : vector<2x128xf32>
    %286 = vector.extract_strided_slice %271 {offsets = [0, 256], sizes = [2, 128], strides = [1, 1]} : vector<2x384xf32> to vector<2x128xf32>
    %287 = arith.addf %286, %37 : vector<2x128xf32>
    %288 = arith.mulf %278, %34 : vector<2x128xf32>
    %289 = arith.addf %287, %288 : vector<2x128xf32>
    %290 = math.tanh %289 : vector<2x128xf32>
    %cst_102 = arith.constant 1.000000e+00 : f32
    %291 = vector.broadcast %cst_102 : f32 to vector<2x128xf32>
    %292 = arith.subf %291, %285 : vector<2x128xf32>
    %293 = arith.mulf %292, %290 : vector<2x128xf32>
    %294 = arith.mulf %285, %26 : vector<2x128xf32>
    %295 = arith.addf %293, %294 : vector<2x128xf32>
    %c0_103 = arith.constant 0 : index
    %c0_104 = arith.constant 0 : index
    %296 = vector.load %arg8[%c0_103, %c0_104] : memref<128x256xf32, #tpu.memory_space<vmem>>, vector<128x256xf32>
    %cst_105 = arith.constant dense<0.000000e+00> : vector<2x256xf32>
    %297 = tpu.matmul %295, %296, %cst_105 {dimension_numbers = #tpu.dot_dimension_numbers<[1], [0], [0], [1], [0, 0, 1, 1], [], []>} : vector<2x128xf32>, vector<128x256xf32>, vector<2x256xf32> -> vector<2x256xf32>
    %298 = arith.addf %297, %40 : vector<2x256xf32>
    %299 = vector.extract_strided_slice %298 {offsets = [0, 0], sizes = [2, 128], strides = [1, 1]} : vector<2x256xf32> to vector<2x128xf32>
    %300 = arith.index_cast %c7_i32 : i32 to index
    %c0_106 = arith.constant 0 : index
    %c0_107 = arith.constant 0 : index
    %301 = vector.load %arg11[%300, %c0_106, %c0_107] : memref<8x2x128xf32, #tpu.memory_space<vmem>>, vector<1x2x128xf32>
    %302 = vector.shape_cast %301 : vector<1x2x128xf32> to vector<2x128xf32>
    %303 = vector.shape_cast %299 : vector<2x128xf32> to vector<1x2x128xf32>
    tpu.vector_store %arg11[%300, %c0_106, %c0_107], %303 {strides = array<i32>} : memref<8x2x128xf32, #tpu.memory_space<vmem>>, vector<1x2x128xf32>,
    %304 = vector.extract_strided_slice %298 {offsets = [0, 128], sizes = [2, 128], strides = [1, 1]} : vector<2x256xf32> to vector<2x128xf32>
    %cst_108 = arith.constant 0.000000e+00 : f32
    %305 = vector.broadcast %cst_108 : f32 to vector<2x128xf32>
    %306 = arith.maximumf %304, %305 : vector<2x128xf32>
    %c7_i32_109 = arith.constant 7 : i32
    return
  }
}

</mosaic_0001>

<llo_original>
// kernel: cluster2gesture_forward.1
$region0: #{cluster2gesture_forward.1}
  #allocation0 [shape = 'u32[]', space=smem, size = 0x4, offset = 0x4, fixed_abs, tag = 'smem constant byte address 0x4 - core index']
  #allocation1 [shape = 'u32[144,128]{1,0:T(1,128)}', space=vmem, size = 0x12000, scoped, tag = 'internal scratch']
  %s0 = inlined_call_operand.vmem [shape: f32[2,32], index: 0, kind: input, shape index: {}]
  %s1 = inlined_call_operand.vmem [shape: f32[32,384], index: 1, kind: input, shape index: {}]
  %s2 = inlined_call_operand.vmem [shape: f32[1,384], index: 2, kind: input, shape index: {}]
  %s3 = inlined_call_operand.vmem [shape: f32[1,128], index: 3, kind: input, shape index: {}]
  %s4 = inlined_call_operand.vmem [shape: f32[128,384], index: 4, kind: input, shape index: {}]
  %s5 = inlined_call_operand.vmem [shape: f32[1,384], index: 5, kind: input, shape index: {}]
  %s6 = inlined_call_operand.vmem [shape: f32[1,128], index: 6, kind: input, shape index: {}]
  %s7 = inlined_call_operand.vmem [shape: f32[128,384], index: 7, kind: input, shape index: {}]
  %s8 = inlined_call_operand.vmem [shape: f32[128,256], index: 8, kind: input, shape index: {}]
  %s9 = inlined_call_operand.vmem [shape: f32[1,256], index: 9, kind: input, shape index: {}]
  %s10 = inlined_call_operand.vmem [shape: f32[1,128], index: 10, kind: input, shape index: {}]
  %s11 = inlined_call_operand.vmem [shape: f32[8,2,128], index: 11, kind: output, shape index: {}]
  %s12 = sld [smem:[#allocation0]]
  $region54: #{cluster2gesture_forward.1} parent=0
    _
  %s14 = ssub.s32 1, %s12
  %s15 = scalar_select 0, %s14, %s12
  // Predicated region
  $region2: #{cluster2gesture_forward.1} parent=0 // pred_check
    _
  $region3: #{cluster2gesture_forward.1} parent=0 // pred_check_branch
    %17 = sbr.rel (0) target = $region5
  $region4: #{cluster2gesture_forward.1} parent=0 // pred_region
    _
  $region5: #{cluster2gesture_forward.1} parent=0 // pred_fallthru
    _
  // Predicated region
  $region6: #{cluster2gesture_forward.1} parent=0 // pred_check
    _
  $region7: #{cluster2gesture_forward.1} parent=0 // pred_check_branch
    %19 = sbr.rel (0) target = $region9
  $region8: #{cluster2gesture_forward.1} parent=0 // pred_region
    _
  $region9: #{cluster2gesture_forward.1} parent=0 // pred_fallthru
    _
  // Predicated region
  $region10: #{cluster2gesture_forward.1} parent=0 // pred_check
    _
  $region11: #{cluster2gesture_forward.1} parent=0 // pred_check_branch
    %21 = sbr.rel (0) target = $region13
  $region12: #{cluster2gesture_forward.1} parent=0 // pred_region
    _
  $region13: #{cluster2gesture_forward.1} parent=0 // pred_fallthru
    _
  // Predicated region
  $region14: #{cluster2gesture_forward.1} parent=0 // pred_check
    _
  $region15: #{cluster2gesture_forward.1} parent=0 // pred_check_branch
    %23 = sbr.rel (0) target = $region17
  $region16: #{cluster2gesture_forward.1} parent=0 // pred_region
    _
  $region17: #{cluster2gesture_forward.1} parent=0 // pred_fallthru
    _
  // Predicated region
  $region18: #{cluster2gesture_forward.1} parent=0 // pred_check
    _
  $region19: #{cluster2gesture_forward.1} parent=0 // pred_check_branch
    %25 = sbr.rel (0) target = $region21
  $region20: #{cluster2gesture_forward.1} parent=0 // pred_region
    _
  $region21: #{cluster2gesture_forward.1} parent=0 // pred_fallthru
    _
  // Predicated region
  $region22: #{cluster2gesture_forward.1} parent=0 // pred_check
    _
  $region23: #{cluster2gesture_forward.1} parent=0 // pred_check_branch
    %27 = sbr.rel (0) target = $region25
  $region24: #{cluster2gesture_forward.1} parent=0 // pred_region
    _
  $region25: #{cluster2gesture_forward.1} parent=0 // pred_fallthru
    _
  // Predicated region
  $region26: #{cluster2gesture_forward.1} parent=0 // pred_check
    _
  $region27: #{cluster2gesture_forward.1} parent=0 // pred_check_branch
    %29 = sbr.rel (0) target = $region29
  $region28: #{cluster2gesture_forward.1} parent=0 // pred_region
    _
  $region29: #{cluster2gesture_forward.1} parent=0 // pred_fallthru
    _
  // Predicated region
  $region30: #{cluster2gesture_forward.1} parent=0 // pred_check
    _
  $region31: #{cluster2gesture_forward.1} parent=0 // pred_check_branch
    %31 = sbr.rel (0) target = $region33
  $region32: #{cluster2gesture_forward.1} parent=0 // pred_region
    _
  $region33: #{cluster2gesture_forward.1} parent=0 // pred_fallthru
    _
  // Predicated region
  $region34: #{cluster2gesture_forward.1} parent=0 // pred_check
    _
  $region35: #{cluster2gesture_forward.1} parent=0 // pred_check_branch
    %33 = sbr.rel (0) target = $region37
  $region36: #{cluster2gesture_forward.1} parent=0 // pred_region
    _
  $region37: #{cluster2gesture_forward.1} parent=0 // pred_fallthru
    _
  // Predicated region
  $region38: #{cluster2gesture_forward.1} parent=0 // pred_check
    _
  $region39: #{cluster2gesture_forward.1} parent=0 // pred_check_branch
    %35 = sbr.rel (0) target = $region41
  $region40: #{cluster2gesture_forward.1} parent=0 // pred_region
    _
  $region41: #{cluster2gesture_forward.1} parent=0 // pred_fallthru
    _
  // Predicated region
  $region42: #{cluster2gesture_forward.1} parent=0 // pred_check
    _
  $region43: #{cluster2gesture_forward.1} parent=0 // pred_check_branch
    %37 = sbr.rel (0) target = $region45
  $region44: #{cluster2gesture_forward.1} parent=0 // pred_region
    _
  $region45: #{cluster2gesture_forward.1} parent=0 // pred_fallthru
    _
  %v38 = vld [vmem:[%s0] sm:$0x3]
  %v39 = vld [vmem:[%s1] sm:$0xff]
  %v40 = vld [vmem:[%s1 + $0x8] sm:$0xff]
  %v41 = vld [vmem:[%s1 + $0x10] sm:$0xff]
  %v42 = vld [vmem:[%s1 + $0x18] sm:$0xff]
  %v43 = vld [vmem:[%s1 + $0x20] sm:$0xff]
  %v44 = vld [vmem:[%s1 + $0x28] sm:$0xff]
  %v45 = vld [vmem:[%s1 + $0x30] sm:$0xff]
  %v46 = vld [vmem:[%s1 + $0x38] sm:$0xff]
  %v47 = vld [vmem:[%s1 + $0x40] sm:$0xff]
  %v48 = vld [vmem:[%s1 + $0x48] sm:$0xff]
  %v49 = vld [vmem:[%s1 + $0x50] sm:$0xff]
  %v50 = vld [vmem:[%s1 + $0x58] sm:$0xff]
  %v51 = vld [vmem:[%s2] sm:$0x7]
  %v53 = vlaneseq
  %v54 = vshrl.u32 %v53, 7
  %v55 = vsub.s32 0, %v54
  %v56 = vrot.slane %v51, %v55
  %v57 = vlaneseq
  %v58 = vshrl.u32 %v57, 7
  %v59 = vsub.s32 1, %v58
  %v60 = vrot.slane %v51, %v59
  %v61 = vlaneseq
  %v62 = vshrl.u32 %v61, 7
  %v63 = vsub.s32 2, %v62
  %v64 = vrot.slane %v51, %v63
  %vm68 = vcmask 261120
  %v70 = vsel %vm68, %v38, 0
  %72 = vmatprep.subr.mxu0 0.0
  %73 = vmatpush1.msra.mxu0 0.0
  %74 = vmatprep.subr.mxu0 0.0
  %75 = vmatpush1.msra.mxu0 0.0
  %76 = vmatprep.subr.mxu0 0.0
  %77 = vmatpush1.msra.mxu0 0.0
  %78 = vmatprep.subr.mxu0 0.0
  %79 = vmatpush1.msra.mxu0 0.0
  %80 = vmatprep.subr.mxu0 0.0
  %81 = vmatpush1.msra.mxu0 0.0
  %82 = vmatprep.subr.mxu0 0.0
  %83 = vmatpush1.msra.mxu0 0.0
  %84 = vmatprep.subr.mxu0 0.0
  %85 = vmatpush1.msra.mxu0 0.0
  %86 = vmatprep.subr.mxu0 0.0
  %87 = vmatpush1.msra.mxu0 0.0
  %88 = vmatprep.subr.mxu0 0.0
  %89 = vmatpush1.msra.mxu0 0.0
  %90 = vmatprep.subr.mxu0 0.0
  %91 = vmatpush1.msra.mxu0 0.0
  %92 = vmatprep.subr.mxu0 0.0
  %93 = vmatpush1.msra.mxu0 0.0
  %94 = vmatprep.subr.mxu0 0.0
  %95 = vmatpush1.msra.mxu0 0.0
  %96 = vmatprep.subr.mxu0 %v49
  %97 = vmatpush1.msra.mxu0 %v48
  %98 = vmatprep.subr.mxu0 %v46
  %99 = vmatpush1.msra.mxu0 %v45
  %100 = vmatprep.subr.mxu0 %v43
  %101 = vmatpush1.msra.mxu0 %v42
  %102 = vmatprep.subr.mxu0 %v40
  %103 = vmatpush1.msra.mxu0 %v39
  %104 = vmatprep.subr.mxu0 0.0
  %105 = vmatpush2.msra.mxu0 0.0
  %106 = vmatprep.subr.mxu0 0.0
  %107 = vmatpush2.msra.mxu0 0.0
  %108 = vmatprep.subr.mxu0 0.0
  %109 = vmatpush2.msra.mxu0 0.0
  %110 = vmatprep.subr.mxu0 0.0
  %111 = vmatpush2.msra.mxu0 0.0
  %112 = vmatprep.subr.mxu0 0.0
  %113 = vmatpush2.msra.mxu0 0.0
  %114 = vmatprep.subr.mxu0 0.0
  %115 = vmatpush2.msra.mxu0 0.0
  %116 = vmatprep.subr.mxu0 0.0
  %117 = vmatpush2.msra.mxu0 0.0
  %118 = vmatprep.subr.mxu0 0.0
  %119 = vmatpush2.msra.mxu0 0.0
  %120 = vmatprep.subr.mxu0 0.0
  %121 = vmatpush2.msra.mxu0 0.0
  %122 = vmatprep.subr.mxu0 0.0
  %123 = vmatpush2.msra.mxu0 0.0
  %124 = vmatprep.subr.mxu0 0.0
  %125 = vmatpush2.msra.mxu0 0.0
  %126 = vmatprep.subr.mxu0 0.0
  %127 = vmatpush2.msra.mxu0 0.0
  %128 = vmatprep.subr.mxu0 0.0
  %129 = vmatpush2.msra.mxu0 0.0
  %130 = vmatprep.subr.mxu0 0.0
  %131 = vmatpush2.msra.mxu0 0.0
  %132 = vmatprep.subr.mxu0 0.0
  %133 = vmatpush2.msra.mxu0 0.0
  %134 = vmatprep.subr.mxu0 0.0
  %135 = vmatpush2.msra.mxu0 0.0
  %136 = vmatprep.mubr.f32.mxu0 0.0
  %137 = vmatmul.mubr.f32.gmra.mxu0 %v70
  %v138 = vpop.f32.mrf.mxu0
  %v139 = vadd.f32 %v56, %v138
  %v140 = vpop.f32.mrf.mxu0
  %v141 = vadd.f32 %v60, %v140
  %142 = vdwg.mxu0
  %143 = vmatprep.subr.mxu0 0.0
  %144 = vmatpush1.msra.mxu0 0.0
  %145 = vmatprep.subr.mxu0 0.0
  %146 = vmatpush1.msra.mxu0 0.0
  %147 = vmatprep.subr.mxu0 0.0
  %148 = vmatpush1.msra.mxu0 0.0
  %149 = vmatprep.subr.mxu0 0.0
  %150 = vmatpush1.msra.mxu0 0.0
  %151 = vmatprep.subr.mxu0 0.0
  %152 = vmatpush1.msra.mxu0 0.0
  %153 = vmatprep.subr.mxu0 0.0
  %154 = vmatpush1.msra.mxu0 0.0
  %155 = vmatprep.subr.mxu0 0.0
  %156 = vmatpush1.msra.mxu0 0.0
  %157 = vmatprep.subr.mxu0 0.0
  %158 = vmatpush1.msra.mxu0 0.0
  %159 = vmatprep.subr.mxu0 0.0
  %160 = vmatpush1.msra.mxu0 0.0
  %161 = vmatprep.subr.mxu0 0.0
  %162 = vmatpush1.msra.mxu0 0.0
  %163 = vmatprep.subr.mxu0 0.0
  %164 = vmatpush1.msra.mxu0 0.0
  %165 = vmatprep.subr.mxu0 0.0
  %166 = vmatpush1.msra.mxu0 0.0
  %167 = vmatprep.subr.mxu0 0.0
  %168 = vmatpush1.msra.mxu0 %v50
  %169 = vmatprep.subr.mxu0 0.0
  %170 = vmatpush1.msra.mxu0 %v47
  %171 = vmatprep.subr.mxu0 0.0
  %172 = vmatpush1.msra.mxu0 %v44
  %173 = vmatprep.subr.mxu0 0.0
  %174 = vmatpush1.msra.mxu0 %v41
  %175 = vmatprep.subr.mxu0 0.0
  %176 = vmatpush2.msra.mxu0 0.0
  %177 = vmatprep.subr.mxu0 0.0
  %178 = vmatpush2.msra.mxu0 0.0
  %179 = vmatprep.subr.mxu0 0.0
  %180 = vmatpush2.msra.mxu0 0.0
  %181 = vmatprep.subr.mxu0 0.0
  %182 = vmatpush2.msra.mxu0 0.0
  %183 = vmatprep.subr.mxu0 0.0
  %184 = vmatpush2.msra.mxu0 0.0
  %185 = vmatprep.subr.mxu0 0.0
  %186 = vmatpush2.msra.mxu0 0.0
  %187 = vmatprep.subr.mxu0 0.0
  %188 = vmatpush2.msra.mxu0 0.0
  %189 = vmatprep.subr.mxu0 0.0
  %190 = vmatpush2.msra.mxu0 0.0
  %191 = vmatprep.subr.mxu0 0.0
  %192 = vmatpush2.msra.mxu0 0.0
  %193 = vmatprep.subr.mxu0 0.0
  %194 = vmatpush2.msra.mxu0 0.0
  %195 = vmatprep.subr.mxu0 0.0
  %196 = vmatpush2.msra.mxu0 0.0
  %197 = vmatprep.subr.mxu0 0.0
  %198 = vmatpush2.msra.mxu0 0.0
  %199 = vmatprep.subr.mxu0 0.0
  %200 = vmatpush2.msra.mxu0 0.0
  %201 = vmatprep.subr.mxu0 0.0
  %202 = vmatpush2.msra.mxu0 0.0
  %203 = vmatprep.subr.mxu0 0.0
  %204 = vmatpush2.msra.mxu0 0.0
  %205 = vmatprep.subr.mxu0 0.0
  %206 = vmatpush2.msra.mxu0 0.0
  %207 = vmatprep.mubr.f32.mxu0 0.0
  %208 = vmatmul.mubr.f32.gmra.mxu0 %v70
  %v209 = vpop.f32.mrf.mxu0
  %v210 = vadd.f32 %v64, %v209
  %v211 = vpop.f32.mrf.mxu0
  %212 = vdwg.mxu0
  %v213 = vxor.u32 %v139, 2147483648
  %v214 = vmul.f32 %v213, 1.442695
  %v215 = vpow.pop %v214
  %v216 = vadd.f32 %v215, 1.0
  %v217 = vrcp.pop %v216
  %v218 = vmul.f32 1.0, %v217
  %v219 = vxor.u32 %v141, 2147483648
  %v220 = vmul.f32 %v219, 1.442695
  %v221 = vpow.pop %v220
  %v222 = vadd.f32 %v221, 1.0
  %v223 = vrcp.pop %v222
  %v224 = vmul.f32 1.0, %v223
  %v225 = vld [vmem:[%s3] sm:$0x1]
  %v227 = vlaneseq
  %v228 = vshrl.u32 %v227, 7
  %v229 = vsub.s32 0, %v228
  %v230 = vrot.slane %v225, %v229
  %v232 = vmul.f32 %v218, %v230
  %v233 = vadd.f32 %v210, %v232
  %v234 = vtanh.pop %v233
  %v235 = vsub.f32 1.0, %v224
  %v236 = vmul.f32 %v235, %v234
  %v237 = vld [vmem:[%s7] sm:$0xff]
  %v238 = vld [vmem:[%s7 + $0x8] sm:$0xff]
  %v239 = vld [vmem:[%s7 + $0x10] sm:$0xff]
  %v240 = vld [vmem:[%s7 + $0x18] sm:$0xff]
  %v241 = vld [vmem:[%s7 + $0x20] sm:$0xff]
  %v242 = vld [vmem:[%s7 + $0x28] sm:$0xff]
  %v243 = vld [vmem:[%s7 + $0x30] sm:$0xff]
  %v244 = vld [vmem:[%s7 + $0x38] sm:$0xff]
  %v245 = vld [vmem:[%s7 + $0x40] sm:$0xff]
  %v246 = vld [vmem:[%s7 + $0x48] sm:$0xff]
  %v247 = vld [vmem:[%s7 + $0x50] sm:$0xff]
  %v248 = vld [vmem:[%s7 + $0x58] sm:$0xff]
  %v249 = vld [vmem:[%s7 + $0x60] sm:$0xff]
  %v250 = vld [vmem:[%s7 + $0x68] sm:$0xff]
  %v251 = vld [vmem:[%s7 + $0x70] sm:$0xff]
  %v252 = vld [vmem:[%s7 + $0x78] sm:$0xff]
  %v253 = vld [vmem:[%s7 + $0x80] sm:$0xff]
  %v254 = vld [vmem:[%s7 + $0x88] sm:$0xff]
  %v255 = vld [vmem:[%s7 + $0x90] sm:$0xff]
  %v256 = vld [vmem:[%s7 + $0x98] sm:$0xff]
  %v257 = vld [vmem:[%s7 + $0xa0] sm:$0xff]
  %v258 = vld [vmem:[%s7 + $0xa8] sm:$0xff]
  %v259 = vld [vmem:[%s7 + $0xb0] sm:$0xff]
  %v260 = vld [vmem:[%s7 + $0xb8] sm:$0xff]
  %v261 = vld [vmem:[%s7 + $0xc0] sm:$0xff]
  %v262 = vld [vmem:[%s7 + $0xc8] sm:$0xff]
  %v263 = vld [vmem:[%s7 + $0xd0] sm:$0xff]
  %v264 = vld [vmem:[%s7 + $0xd8] sm:$0xff]
  %v265 = vld [vmem:[%s7 + $0xe0] sm:$0xff]
  %v266 = vld [vmem:[%s7 + $0xe8] sm:$0xff]
  %v267 = vld [vmem:[%s7 + $0xf0] sm:$0xff]
  %v268 = vld [vmem:[%s7 + $0xf8] sm:$0xff]
  %v269 = vld [vmem:[%s7 + $0x100] sm:$0xff]
  %v270 = vld [vmem:[%s7 + $0x108] sm:$0xff]
  %v271 = vld [vmem:[%s7 + $0x110] sm:$0xff]
  %v272 = vld [vmem:[%s7 + $0x118] sm:$0xff]
  %v273 = vld [vmem:[%s7 + $0x120] sm:$0xff]
  %v274 = vld [vmem:[%s7 + $0x128] sm:$0xff]
  %v275 = vld [vmem:[%s7 + $0x130] sm:$0xff]
  %v276 = vld [vmem:[%s7 + $0x138] sm:$0xff]
  %v277 = vld [vmem:[%s7 + $0x140] sm:$0xff]
  %v278 = vld [vmem:[%s7 + $0x148] sm:$0xff]
  %v279 = vld [vmem:[%s7 + $0x150] sm:$0xff]
  %v280 = vld [vmem:[%s7 + $0x158] sm:$0xff]
  %v281 = vld [vmem:[%s7 + $0x160] sm:$0xff]
  %v282 = vld [vmem:[%s7 + $0x168] sm:$0xff]
  %v283 = vld [vmem:[%s7 + $0x170] sm:$0xff]
  %v284 = vld [vmem:[%s7 + $0x178] sm:$0xff]
  %v285 = vld [vmem:[%s5] sm:$0x7]
  %v287 = vlaneseq
  %v288 = vshrl.u32 %v287, 7
  %v289 = vsub.s32 0, %v288
  %v290 = vrot.slane %v285, %v289
  %v291 = vlaneseq
  %v292 = vshrl.u32 %v291, 7
  %v293 = vsub.s32 1, %v292
  %v294 = vrot.slane %v285, %v293
  %v295 = vlaneseq
  %v296 = vshrl.u32 %v295, 7
  %v297 = vsub.s32 2, %v296
  %v298 = vrot.slane %v285, %v297
  %302 = vmatprep.subr.mxu0 %v283
  %303 = vmatpush1.msra.mxu0 %v282
  %304 = vmatprep.subr.mxu0 %v280
  %305 = vmatpush1.msra.mxu0 %v279
  %306 = vmatprep.subr.mxu0 %v277
  %307 = vmatpush1.msra.mxu0 %v276
  %308 = vmatprep.subr.mxu0 %v274
  %309 = vmatpush1.msra.mxu0 %v273
  %310 = vmatprep.subr.mxu0 %v271
  %311 = vmatpush1.msra.mxu0 %v270
  %312 = vmatprep.subr.mxu0 %v268
  %313 = vmatpush1.msra.mxu0 %v267
  %314 = vmatprep.subr.mxu0 %v265
  %315 = vmatpush1.msra.mxu0 %v264
  %316 = vmatprep.subr.mxu0 %v262
  %317 = vmatpush1.msra.mxu0 %v261
  %318 = vmatprep.subr.mxu0 %v259
  %319 = vmatpush1.msra.mxu0 %v258
  %320 = vmatprep.subr.mxu0 %v256
  %321 = vmatpush1.msra.mxu0 %v255
  %322 = vmatprep.subr.mxu0 %v253
  %323 = vmatpush1.msra.mxu0 %v252
  %324 = vmatprep.subr.mxu0 %v250
  %325 = vmatpush1.msra.mxu0 %v249
  %326 = vmatprep.subr.mxu0 %v247
  %327 = vmatpush1.msra.mxu0 %v246
  %328 = vmatprep.subr.mxu0 %v244
  %329 = vmatpush1.msra.mxu0 %v243
  %330 = vmatprep.subr.mxu0 %v241
  %331 = vmatpush1.msra.mxu0 %v240
  %332 = vmatprep.subr.mxu0 %v238
  %333 = vmatpush1.msra.mxu0 %v237
  %334 = vmatprep.subr.mxu0 0.0
  %335 = vmatpush2.msra.mxu0 0.0
  %336 = vmatprep.subr.mxu0 0.0
  %337 = vmatpush2.msra.mxu0 0.0
  %338 = vmatprep.subr.mxu0 0.0
  %339 = vmatpush2.msra.mxu0 0.0
  %340 = vmatprep.subr.mxu0 0.0
  %341 = vmatpush2.msra.mxu0 0.0
  %342 = vmatprep.subr.mxu0 0.0
  %343 = vmatpush2.msra.mxu0 0.0
  %344 = vmatprep.subr.mxu0 0.0
  %345 = vmatpush2.msra.mxu0 0.0
  %346 = vmatprep.subr.mxu0 0.0
  %347 = vmatpush2.msra.mxu0 0.0
  %348 = vmatprep.subr.mxu0 0.0
  %349 = vmatpush2.msra.mxu0 0.0
  %350 = vmatprep.subr.mxu0 0.0
  %351 = vmatpush2.msra.mxu0 0.0
  %352 = vmatprep.subr.mxu0 0.0
  %353 = vmatpush2.msra.mxu0 0.0
  %354 = vmatprep.subr.mxu0 0.0
  %355 = vmatpush2.msra.mxu0 0.0
  %356 = vmatprep.subr.mxu0 0.0
  %357 = vmatpush2.msra.mxu0 0.0
  %358 = vmatprep.subr.mxu0 0.0
  %359 = vmatpush2.msra.mxu0 0.0
  %360 = vmatprep.subr.mxu0 0.0
  %361 = vmatpush2.msra.mxu0 0.0
  %362 = vmatprep.subr.mxu0 0.0
  %363 = vmatpush2.msra.mxu0 0.0
  %364 = vmatprep.subr.mxu0 0.0
  %365 = vmatpush2.msra.mxu0 0.0
  %366 = vmatprep.mubr.f32.mxu0 0.0
  %367 = vmatmul.mubr.f32.gmra.mxu0 %v236
  %v368 = vpop.f32.mrf.mxu0
  %v369 = vadd.f32 %v290, %v368
  %v370 = vpop.f32.mrf.mxu0
  %v371 = vadd.f32 %v294, %v370
  %372 = vdwg.mxu0
  %373 = vmatprep.subr.mxu0 0.0
  %374 = vmatpush1.msra.mxu0 %v284
  %375 = vmatprep.subr.mxu0 0.0
  %376 = vmatpush1.msra.mxu0 %v281
  %377 = vmatprep.subr.mxu0 0.0
  %378 = vmatpush1.msra.mxu0 %v278
  %379 = vmatprep.subr.mxu0 0.0
  %380 = vmatpush1.msra.mxu0 %v275
  %381 = vmatprep.subr.mxu0 0.0
  %382 = vmatpush1.msra.mxu0 %v272
  %383 = vmatprep.subr.mxu0 0.0
  %384 = vmatpush1.msra.mxu0 %v269
  %385 = vmatprep.subr.mxu0 0.0
  %386 = vmatpush1.msra.mxu0 %v266
  %387 = vmatprep.subr.mxu0 0.0
  %388 = vmatpush1.msra.mxu0 %v263
  %389 = vmatprep.subr.mxu0 0.0
  %390 = vmatpush1.msra.mxu0 %v260
  %391 = vmatprep.subr.mxu0 0.0
  %392 = vmatpush1.msra.mxu0 %v257
  %393 = vmatprep.subr.mxu0 0.0
  %394 = vmatpush1.msra.mxu0 %v254
  %395 = vmatprep.subr.mxu0 0.0
  %396 = vmatpush1.msra.mxu0 %v251
  %397 = vmatprep.subr.mxu0 0.0
  %398 = vmatpush1.msra.mxu0 %v248
  %399 = vmatprep.subr.mxu0 0.0
  %400 = vmatpush1.msra.mxu0 %v245
  %401 = vmatprep.subr.mxu0 0.0
  %402 = vmatpush1.msra.mxu0 %v242
  %403 = vmatprep.subr.mxu0 0.0
  %404 = vmatpush1.msra.mxu0 %v239
  %405 = vmatprep.subr.mxu0 0.0
  %406 = vmatpush2.msra.mxu0 0.0
  %407 = vmatprep.subr.mxu0 0.0
  %408 = vmatpush2.msra.mxu0 0.0
  %409 = vmatprep.subr.mxu0 0.0
  %410 = vmatpush2.msra.mxu0 0.0
  %411 = vmatprep.subr.mxu0 0.0
  %412 = vmatpush2.msra.mxu0 0.0
  %413 = vmatprep.subr.mxu0 0.0
  %414 = vmatpush2.msra.mxu0 0.0
  %415 = vmatprep.subr.mxu0 0.0
  %416 = vmatpush2.msra.mxu0 0.0
  %417 = vmatprep.subr.mxu0 0.0
  %418 = vmatpush2.msra.mxu0 0.0
  %419 = vmatprep.subr.mxu0 0.0
  %420 = vmatpush2.msra.mxu0 0.0
  %421 = vmatprep.subr.mxu0 0.0
  %422 = vmatpush2.msra.mxu0 0.0
  %423 = vmatprep.subr.mxu0 0.0
  %424 = vmatpush2.msra.mxu0 0.0
  %425 = vmatprep.subr.mxu0 0.0
  %426 = vmatpush2.msra.mxu0 0.0
  %427 = vmatprep.subr.mxu0 0.0
  %428 = vmatpush2.msra.mxu0 0.0
  %429 = vmatprep.subr.mxu0 0.0
  %430 = vmatpush2.msra.mxu0 0.0
  %431 = vmatprep.subr.mxu0 0.0
  %432 = vmatpush2.msra.mxu0 0.0
  %433 = vmatprep.subr.mxu0 0.0
  %434 = vmatpush2.msra.mxu0 0.0
  %435 = vmatprep.subr.mxu0 0.0
  %436 = vmatpush2.msra.mxu0 0.0
  %437 = vmatprep.mubr.f32.mxu0 0.0
  %438 = vmatmul.mubr.f32.gmra.mxu0 %v236
  %v439 = vpop.f32.mrf.mxu0
  %v440 = vadd.f32 %v298, %v439
  %v441 = vpop.f32.mrf.mxu0
  %442 = vdwg.mxu0
  %v443 = vld [vmem:[%s6] sm:$0x1]
  %v445 = vlaneseq
  %v446 = vshrl.u32 %v445, 7
  %v447 = vsub.s32 0, %v446
  %v448 = vrot.slane %v443, %v447
  %v450 = vld [vmem:[%s9] sm:$0x3]
  %v452 = vlaneseq
  %v453 = vshrl.u32 %v452, 7
  %v454 = vsub.s32 0, %v453
  %v455 = vrot.slane %v450, %v454
  %v456 = vlaneseq
  %v457 = vshrl.u32 %v456, 7
  %v458 = vsub.s32 1, %v457
  %v459 = vrot.slane %v450, %v458
  %v462 = vld [vmem:[%s10] sm:$0x1]
  %v464 = vlaneseq
  %v465 = vshrl.u32 %v464, 7
  %v466 = vsub.s32 0, %v465
  %v467 = vrot.slane %v462, %v466
  %469 = vst [vmem:[%s11] sm:$0x3] 0.0
  %v470 = vld [vmem:[%s4] sm:$0xff]
  %v471 = vld [vmem:[%s4 + $0x8] sm:$0xff]
  %v472 = vld [vmem:[%s4 + $0x10] sm:$0xff]
  %v473 = vld [vmem:[%s4 + $0x18] sm:$0xff]
  %v474 = vld [vmem:[%s4 + $0x20] sm:$0xff]
  %v475 = vld [vmem:[%s4 + $0x28] sm:$0xff]
  %v476 = vld [vmem:[%s4 + $0x30] sm:$0xff]
  %v477 = vld [vmem:[%s4 + $0x38] sm:$0xff]
  %v478 = vld [vmem:[%s4 + $0x40] sm:$0xff]
  %v479 = vld [vmem:[%s4 + $0x48] sm:$0xff]
  %v480 = vld [vmem:[%s4 + $0x50] sm:$0xff]
  %v481 = vld [vmem:[%s4 + $0x58] sm:$0xff]
  %v482 = vld [vmem:[%s4 + $0x60] sm:$0xff]
  %v483 = vld [vmem:[%s4 + $0x68] sm:$0xff]
  %v484 = vld [vmem:[%s4 + $0x70] sm:$0xff]
  %v485 = vld [vmem:[%s4 + $0x78] sm:$0xff]
  %v486 = vld [vmem:[%s4 + $0x80] sm:$0xff]
  %v487 = vld [vmem:[%s4 + $0x88] sm:$0xff]
  %v488 = vld [vmem:[%s4 + $0x90] sm:$0xff]
  %v489 = vld [vmem:[%s4 + $0x98] sm:$0xff]
  %v490 = vld [vmem:[%s4 + $0xa0] sm:$0xff]
  %v491 = vld [vmem:[%s4 + $0xa8] sm:$0xff]
  %v492 = vld [vmem:[%s4 + $0xb0] sm:$0xff]
  %v493 = vld [vmem:[%s4 + $0xb8] sm:$0xff]
  %v494 = vld [vmem:[%s4 + $0xc0] sm:$0xff]
  %v495 = vld [vmem:[%s4 + $0xc8] sm:$0xff]
  %v496 = vld [vmem:[%s4 + $0xd0] sm:$0xff]
  %v497 = vld [vmem:[%s4 + $0xd8] sm:$0xff]
  %v498 = vld [vmem:[%s4 + $0xe0] sm:$0xff]
  %v499 = vld [vmem:[%s4 + $0xe8] sm:$0xff]
  %v500 = vld [vmem:[%s4 + $0xf0] sm:$0xff]
  %v501 = vld [vmem:[%s4 + $0xf8] sm:$0xff]
  %v502 = vld [vmem:[%s4 + $0x100] sm:$0xff]
  %v503 = vld [vmem:[%s4 + $0x108] sm:$0xff]
  %v504 = vld [vmem:[%s4 + $0x110] sm:$0xff]
  %v505 = vld [vmem:[%s4 + $0x118] sm:$0xff]
  %v506 = vld [vmem:[%s4 + $0x120] sm:$0xff]
  %v507 = vld [vmem:[%s4 + $0x128] sm:$0xff]
  %v508 = vld [vmem:[%s4 + $0x130] sm:$0xff]
  %v509 = vld [vmem:[%s4 + $0x138] sm:$0xff]
  %v510 = vld [vmem:[%s4 + $0x140] sm:$0xff]
  %v511 = vld [vmem:[%s4 + $0x148] sm:$0xff]
  %v512 = vld [vmem:[%s4 + $0x150] sm:$0xff]
  %v513 = vld [vmem:[%s4 + $0x158] sm:$0xff]
  %v514 = vld [vmem:[%s4 + $0x160] sm:$0xff]
  %v515 = vld [vmem:[%s4 + $0x168] sm:$0xff]
  %v516 = vld [vmem:[%s4 + $0x170] sm:$0xff]
  %v517 = vld [vmem:[%s4 + $0x178] sm:$0xff]
  %518 = vmatprep.subr.mxu0 %v516
  %519 = vmatpush1.msra.mxu0 %v515
  %520 = vmatprep.subr.mxu0 %v513
  %521 = vmatpush1.msra.mxu0 %v512
  %522 = vmatprep.subr.mxu0 %v510
  %523 = vmatpush1.msra.mxu0 %v509
  %524 = vmatprep.subr.mxu0 %v507
  %525 = vmatpush1.msra.mxu0 %v506
  %526 = vmatprep.subr.mxu0 %v504
  %527 = vmatpush1.msra.mxu0 %v503
  %528 = vmatprep.subr.mxu0 %v501
  %529 = vmatpush1.msra.mxu0 %v500
  %530 = vmatprep.subr.mxu0 %v498
  %531 = vmatpush1.msra.mxu0 %v497
  %532 = vmatprep.subr.mxu0 %v495
  %533 = vmatpush1.msra.mxu0 %v494
  %534 = vmatprep.subr.mxu0 %v492
  %535 = vmatpush1.msra.mxu0 %v491
  %536 = vmatprep.subr.mxu0 %v489
  %537 = vmatpush1.msra.mxu0 %v488
  %538 = vmatprep.subr.mxu0 %v486
  %539 = vmatpush1.msra.mxu0 %v485
  %540 = vmatprep.subr.mxu0 %v483
  %541 = vmatpush1.msra.mxu0 %v482
  %542 = vmatprep.subr.mxu0 %v480
  %543 = vmatpush1.msra.mxu0 %v479
  %544 = vmatprep.subr.mxu0 %v477
  %545 = vmatpush1.msra.mxu0 %v476
  %546 = vmatprep.subr.mxu0 %v474
  %547 = vmatpush1.msra.mxu0 %v473
  %548 = vmatprep.subr.mxu0 %v471
  %549 = vmatpush1.msra.mxu0 %v470
  %550 = vmatprep.subr.mxu0 0.0
  %551 = vmatpush2.msra.mxu0 0.0
  %552 = vmatprep.subr.mxu0 0.0
  %553 = vmatpush2.msra.mxu0 0.0
  %554 = vmatprep.subr.mxu0 0.0
  %555 = vmatpush2.msra.mxu0 0.0
  %556 = vmatprep.subr.mxu0 0.0
  %557 = vmatpush2.msra.mxu0 0.0
  %558 = vmatprep.subr.mxu0 0.0
  %559 = vmatpush2.msra.mxu0 0.0
  %560 = vmatprep.subr.mxu0 0.0
  %561 = vmatpush2.msra.mxu0 0.0
  %562 = vmatprep.subr.mxu0 0.0
  %563 = vmatpush2.msra.mxu0 0.0
  %564 = vmatprep.subr.mxu0 0.0
  %565 = vmatpush2.msra.mxu0 0.0
  %566 = vmatprep.subr.mxu0 0.0
  %567 = vmatpush2.msra.mxu0 0.0
  %568 = vmatprep.subr.mxu0 0.0
  %569 = vmatpush2.msra.mxu0 0.0
  %570 = vmatprep.subr.mxu0 0.0
  %571 = vmatpush2.msra.mxu0 0.0
  %572 = vmatprep.subr.mxu0 0.0
  %573 = vmatpush2.msra.mxu0 0.0
  %574 = vmatprep.subr.mxu0 0.0
  %575 = vmatpush2.msra.mxu0 0.0
  %576 = vmatprep.subr.mxu0 0.0
  %577 = vmatpush2.msra.mxu0 0.0
  %578 = vmatprep.subr.mxu0 0.0
  %579 = vmatpush2.msra.mxu0 0.0
  %580 = vmatprep.subr.mxu0 0.0
  %581 = vmatpush2.msra.mxu0 0.0
  %582 = vmatprep.mubr.f32.mxu0 0.0
  %583 = vmatmul.mubr.f32.gmra.mxu0 %v467
  %v584 = vpop.f32.mrf.mxu0
  %v585 = vadd.f32 0.0, %v584
  %v586 = vpop.f32.mrf.mxu0
  %v587 = vadd.f32 0.0, %v586
  %588 = vdwg.mxu0
  %589 = vmatprep.subr.mxu0 0.0
  %590 = vmatpush1.msra.mxu0 %v517
  %591 = vmatprep.subr.mxu0 0.0
  %592 = vmatpush1.msra.mxu0 %v514
  %593 = vmatprep.subr.mxu0 0.0
  %594 = vmatpush1.msra.mxu0 %v511
  %595 = vmatprep.subr.mxu0 0.0
  %596 = vmatpush1.msra.mxu0 %v508
  %597 = vmatprep.subr.mxu0 0.0
  %598 = vmatpush1.msra.mxu0 %v505
  %599 = vmatprep.subr.mxu0 0.0
  %600 = vmatpush1.msra.mxu0 %v502
  %601 = vmatprep.subr.mxu0 0.0
  %602 = vmatpush1.msra.mxu0 %v499
  %603 = vmatprep.subr.mxu0 0.0
  %604 = vmatpush1.msra.mxu0 %v496
  %605 = vmatprep.subr.mxu0 0.0
  %606 = vmatpush1.msra.mxu0 %v493
  %607 = vmatprep.subr.mxu0 0.0
  %608 = vmatpush1.msra.mxu0 %v490
  %609 = vmatprep.subr.mxu0 0.0
  %610 = vmatpush1.msra.mxu0 %v487
  %611 = vmatprep.subr.mxu0 0.0
  %612 = vmatpush1.msra.mxu0 %v484
  %613 = vmatprep.subr.mxu0 0.0
  %614 = vmatpush1.msra.mxu0 %v481
  %615 = vmatprep.subr.mxu0 0.0
  %616 = vmatpush1.msra.mxu0 %v478
  %617 = vmatprep.subr.mxu0 0.0
  %618 = vmatpush1.msra.mxu0 %v475
  %619 = vmatprep.subr.mxu0 0.0
  %620 = vmatpush1.msra.mxu0 %v472
  %621 = vmatprep.subr.mxu0 0.0
  %622 = vmatpush2.msra.mxu0 0.0
  %623 = vmatprep.subr.mxu0 0.0
  %624 = vmatpush2.msra.mxu0 0.0
  %625 = vmatprep.subr.mxu0 0.0
  %626 = vmatpush2.msra.mxu0 0.0
  %627 = vmatprep.subr.mxu0 0.0
  %628 = vmatpush2.msra.mxu0 0.0
  %629 = vmatprep.subr.mxu0 0.0
  %630 = vmatpush2.msra.mxu0 0.0
  %631 = vmatprep.subr.mxu0 0.0
  %632 = vmatpush2.msra.mxu0 0.0
  %633 = vmatprep.subr.mxu0 0.0
  %634 = vmatpush2.msra.mxu0 0.0
  %635 = vmatprep.subr.mxu0 0.0
  %636 = vmatpush2.msra.mxu0 0.0
  %637 = vmatprep.subr.mxu0 0.0
  %638 = vmatpush2.msra.mxu0 0.0
  %639 = vmatprep.subr.mxu0 0.0
  %640 = vmatpush2.msra.mxu0 0.0
  %641 = vmatprep.subr.mxu0 0.0
  %642 = vmatpush2.msra.mxu0 0.0
  %643 = vmatprep.subr.mxu0 0.0
  %644 = vmatpush2.msra.mxu0 0.0
  %645 = vmatprep.subr.mxu0 0.0
  %646 = vmatpush2.msra.mxu0 0.0
  %647 = vmatprep.subr.mxu0 0.0
  %648 = vmatpush2.msra.mxu0 0.0
  %649 = vmatprep.subr.mxu0 0.0
  %650 = vmatpush2.msra.mxu0 0.0
  %651 = vmatprep.subr.mxu0 0.0
  %652 = vmatpush2.msra.mxu0 0.0
  %653 = vmatprep.mubr.f32.mxu0 0.0
  %654 = vmatmul.mubr.f32.gmra.mxu0 %v467
  %v655 = vpop.f32.mrf.mxu0
  %v656 = vadd.f32 0.0, %v655
  %v657 = vpop.f32.mrf.mxu0
  %658 = vdwg.mxu0
  %v659 = vadd.f32 %v585, %v369
  %v660 = vxor.u32 %v659, 2147483648
  %v661 = vmul.f32 %v660, 1.442695
  %v662 = vpow.pop %v661
  %v663 = vadd.f32 %v662, 1.0
  %v664 = vrcp.pop %v663
  %v665 = vmul.f32 1.0, %v664
  %v666 = vadd.f32 %v587, %v371
  %v667 = vxor.u32 %v666, 2147483648
  %v668 = vmul.f32 %v667, 1.442695
  %v669 = vpow.pop %v668
  %v670 = vadd.f32 %v669, 1.0
  %v671 = vrcp.pop %v670
  %v672 = vmul.f32 1.0, %v671
  %v673 = vadd.f32 %v656, %v448
  %v674 = vmul.f32 %v665, %v440
  %v675 = vadd.f32 %v673, %v674
  %v676 = vtanh.pop %v675
  %v677 = vsub.f32 1.0, %v672
  %v678 = vmul.f32 %v677, %v676
  %v679 = vmul.f32 %v672, %v236
  %v680 = vadd.f32 %v678, %v679
  %v681 = vld [vmem:[%s8] sm:$0xff]
  %v682 = vld [vmem:[%s8 + $0x8] sm:$0xff]
  %v683 = vld [vmem:[%s8 + $0x10] sm:$0xff]
  %v684 = vld [vmem:[%s8 + $0x18] sm:$0xff]
  %v685 = vld [vmem:[%s8 + $0x20] sm:$0xff]
  %v686 = vld [vmem:[%s8 + $0x28] sm:$0xff]
  %v687 = vld [vmem:[%s8 + $0x30] sm:$0xff]
  %v688 = vld [vmem:[%s8 + $0x38] sm:$0xff]
  %v689 = vld [vmem:[%s8 + $0x40] sm:$0xff]
  %v690 = vld [vmem:[%s8 + $0x48] sm:$0xff]
  %v691 = vld [vmem:[%s8 + $0x50] sm:$0xff]
  %v692 = vld [vmem:[%s8 + $0x58] sm:$0xff]
  %v693 = vld [vmem:[%s8 + $0x60] sm:$0xff]
  %v694 = vld [vmem:[%s8 + $0x68] sm:$0xff]
  %v695 = vld [vmem:[%s8 + $0x70] sm:$0xff]
  %v696 = vld [vmem:[%s8 + $0x78] sm:$0xff]
  %v697 = vld [vmem:[%s8 + $0x80] sm:$0xff]
  %v698 = vld [vmem:[%s8 + $0x88] sm:$0xff]
  %v699 = vld [vmem:[%s8 + $0x90] sm:$0xff]
  %v700 = vld [vmem:[%s8 + $0x98] sm:$0xff]
  %v701 = vld [vmem:[%s8 + $0xa0] sm:$0xff]
  %v702 = vld [vmem:[%s8 + $0xa8] sm:$0xff]
  %v703 = vld [vmem:[%s8 + $0xb0] sm:$0xff]
  %v704 = vld [vmem:[%s8 + $0xb8] sm:$0xff]
  %v705 = vld [vmem:[%s8 + $0xc0] sm:$0xff]
  %v706 = vld [vmem:[%s8 + $0xc8] sm:$0xff]
  %v707 = vld [vmem:[%s8 + $0xd0] sm:$0xff]
  %v708 = vld [vmem:[%s8 + $0xd8] sm:$0xff]
  %v709 = vld [vmem:[%s8 + $0xe0] sm:$0xff]
  %v710 = vld [vmem:[%s8 + $0xe8] sm:$0xff]
  %v711 = vld [vmem:[%s8 + $0xf0] sm:$0xff]
  %v712 = vld [vmem:[%s8 + $0xf8] sm:$0xff]
  %713 = vmatprep.subr.mxu0 %v712
  %714 = vmatpush1.msra.mxu0 %v711
  %715 = vmatprep.subr.mxu0 %v710
  %716 = vmatpush1.msra.mxu0 %v709
  %717 = vmatprep.subr.mxu0 %v708
  %718 = vmatpush1.msra.mxu0 %v707
  %719 = vmatprep.subr.mxu0 %v706
  %720 = vmatpush1.msra.mxu0 %v705
  %721 = vmatprep.subr.mxu0 %v704
  %722 = vmatpush1.msra.mxu0 %v703
  %723 = vmatprep.subr.mxu0 %v702
  %724 = vmatpush1.msra.mxu0 %v701
  %725 = vmatprep.subr.mxu0 %v700
  %726 = vmatpush1.msra.mxu0 %v699
  %727 = vmatprep.subr.mxu0 %v698
  %728 = vmatpush1.msra.mxu0 %v697
  %729 = vmatprep.subr.mxu0 %v696
  %730 = vmatpush1.msra.mxu0 %v695
  %731 = vmatprep.subr.mxu0 %v694
  %732 = vmatpush1.msra.mxu0 %v693
  %733 = vmatprep.subr.mxu0 %v692
  %734 = vmatpush1.msra.mxu0 %v691
  %735 = vmatprep.subr.mxu0 %v690
  %736 = vmatpush1.msra.mxu0 %v689
  %737 = vmatprep.subr.mxu0 %v688
  %738 = vmatpush1.msra.mxu0 %v687
  %739 = vmatprep.subr.mxu0 %v686
  %740 = vmatpush1.msra.mxu0 %v685
  %741 = vmatprep.subr.mxu0 %v684
  %742 = vmatpush1.msra.mxu0 %v683
  %743 = vmatprep.subr.mxu0 %v682
  %744 = vmatpush1.msra.mxu0 %v681
  %745 = vmatprep.subr.mxu0 0.0
  %746 = vmatpush2.msra.mxu0 0.0
  %747 = vmatprep.subr.mxu0 0.0
  %748 = vmatpush2.msra.mxu0 0.0
  %749 = vmatprep.subr.mxu0 0.0
  %750 = vmatpush2.msra.mxu0 0.0
  %751 = vmatprep.subr.mxu0 0.0
  %752 = vmatpush2.msra.mxu0 0.0
  %753 = vmatprep.subr.mxu0 0.0
  %754 = vmatpush2.msra.mxu0 0.0
  %755 = vmatprep.subr.mxu0 0.0
  %756 = vmatpush2.msra.mxu0 0.0
  %757 = vmatprep.subr.mxu0 0.0
  %758 = vmatpush2.msra.mxu0 0.0
  %759 = vmatprep.subr.mxu0 0.0
  %760 = vmatpush2.msra.mxu0 0.0
  %761 = vmatprep.subr.mxu0 0.0
  %762 = vmatpush2.msra.mxu0 0.0
  %763 = vmatprep.subr.mxu0 0.0
  %764 = vmatpush2.msra.mxu0 0.0
  %765 = vmatprep.subr.mxu0 0.0
  %766 = vmatpush2.msra.mxu0 0.0
  %767 = vmatprep.subr.mxu0 0.0
  %768 = vmatpush2.msra.mxu0 0.0
  %769 = vmatprep.subr.mxu0 0.0
  %770 = vmatpush2.msra.mxu0 0.0
  %771 = vmatprep.subr.mxu0 0.0
  %772 = vmatpush2.msra.mxu0 0.0
  %773 = vmatprep.subr.mxu0 0.0
  %774 = vmatpush2.msra.mxu0 0.0
  %775 = vmatprep.subr.mxu0 0.0
  %776 = vmatpush2.msra.mxu0 0.0
  %777 = vmatprep.mubr.f32.mxu0 0.0
  %778 = vmatmul.mubr.f32.gmra.mxu0 %v680
  %v779 = vpop.f32.mrf.mxu0
  %v780 = vadd.f32 %v455, %v779
  %v781 = vpop.f32.mrf.mxu0
  %v782 = vadd.f32 %v459, %v781
  %783 = vdwg.mxu0
  %s784 = scalar_lea.vmem %s11, 2
  %785 = vst [vmem:[%s784] sm:$0x3] %v780
  %v786 = vmax.f32 %v782, 0.0
  %v787 = vld [vmem:[%s4] sm:$0xff]
  %v788 = vld [vmem:[%s4 + $0x8] sm:$0xff]
  %v789 = vld [vmem:[%s4 + $0x10] sm:$0xff]
  %v790 = vld [vmem:[%s4 + $0x18] sm:$0xff]
  %v791 = vld [vmem:[%s4 + $0x20] sm:$0xff]
  %v792 = vld [vmem:[%s4 + $0x28] sm:$0xff]
  %v793 = vld [vmem:[%s4 + $0x30] sm:$0xff]
  %v794 = vld [vmem:[%s4 + $0x38] sm:$0xff]
  %v795 = vld [vmem:[%s4 + $0x40] sm:$0xff]
  %v796 = vld [vmem:[%s4 + $0x48] sm:$0xff]
  %v797 = vld [vmem:[%s4 + $0x50] sm:$0xff]
  %v798 = vld [vmem:[%s4 + $0x58] sm:$0xff]
  %v799 = vld [vmem:[%s4 + $0x60] sm:$0xff]
  %v800 = vld [vmem:[%s4 + $0x68] sm:$0xff]
  %v801 = vld [vmem:[%s4 + $0x70] sm:$0xff]
  %v802 = vld [vmem:[%s4 + $0x78] sm:$0xff]
  %v803 = vld [vmem:[%s4 + $0x80] sm:$0xff]
  %v804 = vld [vmem:[%s4 + $0x88] sm:$0xff]
  %v805 = vld [vmem:[%s4 + $0x90] sm:$0xff]
  %v806 = vld [vmem:[%s4 + $0x98] sm:$0xff]
  %v807 = vld [vmem:[%s4 + $0xa0] sm:$0xff]
  %v808 = vld [vmem:[%s4 + $0xa8] sm:$0xff]
  %v809 = vld [vmem:[%s4 + $0xb0] sm:$0xff]
  %v810 = vld [vmem:[%s4 + $0xb8] sm:$0xff]
  %v811 = vld [vmem:[%s4 + $0xc0] sm:$0xff]
  %v812 = vld [vmem:[%s4 + $0xc8] sm:$0xff]
  %v813 = vld [vmem:[%s4 + $0xd0] sm:$0xff]
  %v814 = vld [vmem:[%s4 + $0xd8] sm:$0xff]
  %v815 = vld [vmem:[%s4 + $0xe0] sm:$0xff]
  %v816 = vld [vmem:[%s4 + $0xe8] sm:$0xff]
  %v817 = vld [vmem:[%s4 + $0xf0] sm:$0xff]
  %v818 = vld [vmem:[%s4 + $0xf8] sm:$0xff]
  %v819 = vld [vmem:[%s4 + $0x100] sm:$0xff]
  %v820 = vld [vmem:[%s4 + $0x108] sm:$0xff]
  %v821 = vld [vmem:[%s4 + $0x110] sm:$0xff]
  %v822 = vld [vmem:[%s4 + $0x118] sm:$0xff]
  %v823 = vld [vmem:[%s4 + $0x120] sm:$0xff]
  %v824 = vld [vmem:[%s4 + $0x128] sm:$0xff]
  %v825 = vld [vmem:[%s4 + $0x130] sm:$0xff]
  %v826 = vld [vmem:[%s4 + $0x138] sm:$0xff]
  %v827 = vld [vmem:[%s4 + $0x140] sm:$0xff]
  %v828 = vld [vmem:[%s4 + $0x148] sm:$0xff]
  %v829 = vld [vmem:[%s4 + $0x150] sm:$0xff]
  %v830 = vld [vmem:[%s4 + $0x158] sm:$0xff]
  %v831 = vld [vmem:[%s4 + $0x160] sm:$0xff]
  %v832 = vld [vmem:[%s4 + $0x168] sm:$0xff]
  %v833 = vld [vmem:[%s4 + $0x170] sm:$0xff]
  %v834 = vld [vmem:[%s4 + $0x178] sm:$0xff]
  %835 = vmatprep.subr.mxu0 %v833
  %836 = vmatpush1.msra.mxu0 %v832
  %837 = vmatprep.subr.mxu0 %v830
  %838 = vmatpush1.msra.mxu0 %v829
  %839 = vmatprep.subr.mxu0 %v827
  %840 = vmatpush1.msra.mxu0 %v826
  %841 = vmatprep.subr.mxu0 %v824
  %842 = vmatpush1.msra.mxu0 %v823
  %843 = vmatprep.subr.mxu0 %v821
  %844 = vmatpush1.msra.mxu0 %v820
  %845 = vmatprep.subr.mxu0 %v818
  %846 = vmatpush1.msra.mxu0 %v817
  %847 = vmatprep.subr.mxu0 %v815
  %848 = vmatpush1.msra.mxu0 %v814
  %849 = vmatprep.subr.mxu0 %v812
  %850 = vmatpush1.msra.mxu0 %v811
  %851 = vmatprep.subr.mxu0 %v809
  %852 = vmatpush1.msra.mxu0 %v808
  %853 = vmatprep.subr.mxu0 %v806
  %854 = vmatpush1.msra.mxu0 %v805
  %855 = vmatprep.subr.mxu0 %v803
  %856 = vmatpush1.msra.mxu0 %v802
  %857 = vmatprep.subr.mxu0 %v800
  %858 = vmatpush1.msra.mxu0 %v799
  %859 = vmatprep.subr.mxu0 %v797
  %860 = vmatpush1.msra.mxu0 %v796
  %861 = vmatprep.subr.mxu0 %v794
  %862 = vmatpush1.msra.mxu0 %v793
  %863 = vmatprep.subr.mxu0 %v791
  %864 = vmatpush1.msra.mxu0 %v790
  %865 = vmatprep.subr.mxu0 %v788
  %866 = vmatpush1.msra.mxu0 %v787
  %867 = vmatprep.subr.mxu0 0.0
  %868 = vmatpush2.msra.mxu0 0.0
  %869 = vmatprep.subr.mxu0 0.0
  %870 = vmatpush2.msra.mxu0 0.0
  %871 = vmatprep.subr.mxu0 0.0
  %872 = vmatpush2.msra.mxu0 0.0
  %873 = vmatprep.subr.mxu0 0.0
  %874 = vmatpush2.msra.mxu0 0.0
  %875 = vmatprep.subr.mxu0 0.0
  %876 = vmatpush2.msra.mxu0 0.0
  %877 = vmatprep.subr.mxu0 0.0
  %878 = vmatpush2.msra.mxu0 0.0
  %879 = vmatprep.subr.mxu0 0.0
  %880 = vmatpush2.msra.mxu0 0.0
  %881 = vmatprep.subr.mxu0 0.0
  %882 = vmatpush2.msra.mxu0 0.0
  %883 = vmatprep.subr.mxu0 0.0
  %884 = vmatpush2.msra.mxu0 0.0
  %885 = vmatprep.subr.mxu0 0.0
  %886 = vmatpush2.msra.mxu0 0.0
  %887 = vmatprep.subr.mxu0 0.0
  %888 = vmatpush2.msra.mxu0 0.0
  %889 = vmatprep.subr.mxu0 0.0
  %890 = vmatpush2.msra.mxu0 0.0
  %891 = vmatprep.subr.mxu0 0.0
  %892 = vmatpush2.msra.mxu0 0.0
  %893 = vmatprep.subr.mxu0 0.0
  %894 = vmatpush2.msra.mxu0 0.0
  %895 = vmatprep.subr.mxu0 0.0
  %896 = vmatpush2.msra.mxu0 0.0
  %897 = vmatprep.subr.mxu0 0.0
  %898 = vmatpush2.msra.mxu0 0.0
  %899 = vmatprep.mubr.f32.mxu0 0.0
  %900 = vmatmul.mubr.f32.gmra.mxu0 %v786
  %v901 = vpop.f32.mrf.mxu0
  %v902 = vadd.f32 0.0, %v901
  %v903 = vpop.f32.mrf.mxu0
  %v904 = vadd.f32 0.0, %v903
  %905 = vdwg.mxu0
  %906 = vmatprep.subr.mxu0 0.0
  %907 = vmatpush1.msra.mxu0 %v834
  %908 = vmatprep.subr.mxu0 0.0
  %909 = vmatpush1.msra.mxu0 %v831
  %910 = vmatprep.subr.mxu0 0.0
  %911 = vmatpush1.msra.mxu0 %v828
  %912 = vmatprep.subr.mxu0 0.0
  %913 = vmatpush1.msra.mxu0 %v825
  %914 = vmatprep.subr.mxu0 0.0
  %915 = vmatpush1.msra.mxu0 %v822
  %916 = vmatprep.subr.mxu0 0.0
  %917 = vmatpush1.msra.mxu0 %v819
  %918 = vmatprep.subr.mxu0 0.0
  %919 = vmatpush1.msra.mxu0 %v816
  %920 = vmatprep.subr.mxu0 0.0
  %921 = vmatpush1.msra.mxu0 %v813
  %922 = vmatprep.subr.mxu0 0.0
  %923 = vmatpush1.msra.mxu0 %v810
  %924 = vmatprep.subr.mxu0 0.0
  %925 = vmatpush1.msra.mxu0 %v807
  %926 = vmatprep.subr.mxu0 0.0
  %927 = vmatpush1.msra.mxu0 %v804
  %928 = vmatprep.subr.mxu0 0.0
  %929 = vmatpush1.msra.mxu0 %v801
  %930 = vmatprep.subr.mxu0 0.0
  %931 = vmatpush1.msra.mxu0 %v798
  %932 = vmatprep.subr.mxu0 0.0
  %933 = vmatpush1.msra.mxu0 %v795
  %934 = vmatprep.subr.mxu0 0.0
  %935 = vmatpush1.msra.mxu0 %v792
  %936 = vmatprep.subr.mxu0 0.0
  %937 = vmatpush1.msra.mxu0 %v789
  %938 = vmatprep.subr.mxu0 0.0
  %939 = vmatpush2.msra.mxu0 0.0
  %940 = vmatprep.subr.mxu0 0.0
  %941 = vmatpush2.msra.mxu0 0.0
  %942 = vmatprep.subr.mxu0 0.0
  %943 = vmatpush2.msra.mxu0 0.0
  %944 = vmatprep.subr.mxu0 0.0
  %945 = vmatpush2.msra.mxu0 0.0
  %946 = vmatprep.subr.mxu0 0.0
  %947 = vmatpush2.msra.mxu0 0.0
  %948 = vmatprep.subr.mxu0 0.0
  %949 = vmatpush2.msra.mxu0 0.0
  %950 = vmatprep.subr.mxu0 0.0
  %951 = vmatpush2.msra.mxu0 0.0
  %952 = vmatprep.subr.mxu0 0.0
  %953 = vmatpush2.msra.mxu0 0.0
  %954 = vmatprep.subr.mxu0 0.0
  %955 = vmatpush2.msra.mxu0 0.0
  %956 = vmatprep.subr.mxu0 0.0
  %957 = vmatpush2.msra.mxu0 0.0
  %958 = vmatprep.subr.mxu0 0.0
  %959 = vmatpush2.msra.mxu0 0.0
  %960 = vmatprep.subr.mxu0 0.0
  %961 = vmatpush2.msra.mxu0 0.0
  %962 = vmatprep.subr.mxu0 0.0
  %963 = vmatpush2.msra.mxu0 0.0
  %964 = vmatprep.subr.mxu0 0.0
  %965 = vmatpush2.msra.mxu0 0.0
  %966 = vmatprep.subr.mxu0 0.0
  %967 = vmatpush2.msra.mxu0 0.0
  %968 = vmatprep.subr.mxu0 0.0
  %969 = vmatpush2.msra.mxu0 0.0
  %970 = vmatprep.mubr.f32.mxu0 0.0
  %971 = vmatmul.mubr.f32.gmra.mxu0 %v786
  %v972 = vpop.f32.mrf.mxu0
  %v973 = vadd.f32 0.0, %v972
  %v974 = vpop.f32.mrf.mxu0
  %975 = vdwg.mxu0
  %v976 = vadd.f32 %v902, %v369
  %v977 = vxor.u32 %v976, 2147483648
  %v978 = vmul.f32 %v977, 1.442695
  %v979 = vpow.pop %v978
  %v980 = vadd.f32 %v979, 1.0
  %v981 = vrcp.pop %v980
  %v982 = vmul.f32 1.0, %v981
  %v983 = vadd.f32 %v904, %v371
  %v984 = vxor.u32 %v983, 2147483648
  %v985 = vmul.f32 %v984, 1.442695
  %v986 = vpow.pop %v985
  %v987 = vadd.f32 %v986, 1.0
  %v988 = vrcp.pop %v987
  %v989 = vmul.f32 1.0, %v988
  %v990 = vadd.f32 %v973, %v448
  %v991 = vmul.f32 %v982, %v440
  %v992 = vadd.f32 %v990, %v991
  %v993 = vtanh.pop %v992
  %v994 = vsub.f32 1.0, %v989
  %v995 = vmul.f32 %v994, %v993
  %v996 = vmul.f32 %v989, %v236
  %v997 = vadd.f32 %v995, %v996
  %v998 = vld [vmem:[%s8] sm:$0xff]
  %v999 = vld [vmem:[%s8 + $0x8] sm:$0xff]
  %v1000 = vld [vmem:[%s8 + $0x10] sm:$0xff]
  %v1001 = vld [vmem:[%s8 + $0x18] sm:$0xff]
  %v1002 = vld [vmem:[%s8 + $0x20] sm:$0xff]
  %v1003 = vld [vmem:[%s8 + $0x28] sm:$0xff]
  %v1004 = vld [vmem:[%s8 + $0x30] sm:$0xff]
  %v1005 = vld [vmem:[%s8 + $0x38] sm:$0xff]
  %v1006 = vld [vmem:[%s8 + $0x40] sm:$0xff]
  %v1007 = vld [vmem:[%s8 + $0x48] sm:$0xff]
  %v1008 = vld [vmem:[%s8 + $0x50] sm:$0xff]
  %v1009 = vld [vmem:[%s8 + $0x58] sm:$0xff]
  %v1010 = vld [vmem:[%s8 + $0x60] sm:$0xff]
  %v1011 = vld [vmem:[%s8 + $0x68] sm:$0xff]
  %v1012 = vld [vmem:[%s8 + $0x70] sm:$0xff]
  %v1013 = vld [vmem:[%s8 + $0x78] sm:$0xff]
  %v1014 = vld [vmem:[%s8 + $0x80] sm:$0xff]
  %v1015 = vld [vmem:[%s8 + $0x88] sm:$0xff]
  %v1016 = vld [vmem:[%s8 + $0x90] sm:$0xff]
  %v1017 = vld [vmem:[%s8 + $0x98] sm:$0xff]
  %v1018 = vld [vmem:[%s8 + $0xa0] sm:$0xff]
  %v1019 = vld [vmem:[%s8 + $0xa8] sm:$0xff]
  %v1020 = vld [vmem:[%s8 + $0xb0] sm:$0xff]
  %v1021 = vld [vmem:[%s8 + $0xb8] sm:$0xff]
  %v1022 = vld [vmem:[%s8 + $0xc0] sm:$0xff]
  %v1023 = vld [vmem:[%s8 + $0xc8] sm:$0xff]
  %v1024 = vld [vmem:[%s8 + $0xd0] sm:$0xff]
  %v1025 = vld [vmem:[%s8 + $0xd8] sm:$0xff]
  %v1026 = vld [vmem:[%s8 + $0xe0] sm:$0xff]
  %v1027 = vld [vmem:[%s8 + $0xe8] sm:$0xff]
  %v1028 = vld [vmem:[%s8 + $0xf0] sm:$0xff]
  %v1029 = vld [vmem:[%s8 + $0xf8] sm:$0xff]
  %1030 = vmatprep.subr.mxu0 %v1029
  %1031 = vmatpush1.msra.mxu0 %v1028
  %1032 = vmatprep.subr.mxu0 %v1027
  %1033 = vmatpush1.msra.mxu0 %v1026
  %1034 = vmatprep.subr.mxu0 %v1025
  %1035 = vmatpush1.msra.mxu0 %v1024
  %1036 = vmatprep.subr.mxu0 %v1023
  %1037 = vmatpush1.msra.mxu0 %v1022
  %1038 = vmatprep.subr.mxu0 %v1021
  %1039 = vmatpush1.msra.mxu0 %v1020
  %1040 = vmatprep.subr.mxu0 %v1019
  %1041 = vmatpush1.msra.mxu0 %v1018
  %1042 = vmatprep.subr.mxu0 %v1017
  %1043 = vmatpush1.msra.mxu0 %v1016
  %1044 = vmatprep.subr.mxu0 %v1015
  %1045 = vmatpush1.msra.mxu0 %v1014
  %1046 = vmatprep.subr.mxu0 %v1013
  %1047 = vmatpush1.msra.mxu0 %v1012
  %1048 = vmatprep.subr.mxu0 %v1011
  %1049 = vmatpush1.msra.mxu0 %v1010
  %1050 = vmatprep.subr.mxu0 %v1009
  %1051 = vmatpush1.msra.mxu0 %v1008
  %1052 = vmatprep.subr.mxu0 %v1007
  %1053 = vmatpush1.msra.mxu0 %v1006
  %1054 = vmatprep.subr.mxu0 %v1005
  %1055 = vmatpush1.msra.mxu0 %v1004
  %1056 = vmatprep.subr.mxu0 %v1003
  %1057 = vmatpush1.msra.mxu0 %v1002
  %1058 = vmatprep.subr.mxu0 %v1001
  %1059 = vmatpush1.msra.mxu0 %v1000
  %1060 = vmatprep.subr.mxu0 %v999
  %1061 = vmatpush1.msra.mxu0 %v998
  %1062 = vmatprep.subr.mxu0 0.0
  %1063 = vmatpush2.msra.mxu0 0.0
  %1064 = vmatprep.subr.mxu0 0.0
  %1065 = vmatpush2.msra.mxu0 0.0
  %1066 = vmatprep.subr.mxu0 0.0
  %1067 = vmatpush2.msra.mxu0 0.0
  %1068 = vmatprep.subr.mxu0 0.0
  %1069 = vmatpush2.msra.mxu0 0.0
  %1070 = vmatprep.subr.mxu0 0.0
  %1071 = vmatpush2.msra.mxu0 0.0
  %1072 = vmatprep.subr.mxu0 0.0
  %1073 = vmatpush2.msra.mxu0 0.0
  %1074 = vmatprep.subr.mxu0 0.0
  %1075 = vmatpush2.msra.mxu0 0.0
  %1076 = vmatprep.subr.mxu0 0.0
  %1077 = vmatpush2.msra.mxu0 0.0
  %1078 = vmatprep.subr.mxu0 0.0
  %1079 = vmatpush2.msra.mxu0 0.0
  %1080 = vmatprep.subr.mxu0 0.0
  %1081 = vmatpush2.msra.mxu0 0.0
  %1082 = vmatprep.subr.mxu0 0.0
  %1083 = vmatpush2.msra.mxu0 0.0
  %1084 = vmatprep.subr.mxu0 0.0
  %1085 = vmatpush2.msra.mxu0 0.0
  %1086 = vmatprep.subr.mxu0 0.0
  %1087 = vmatpush2.msra.mxu0 0.0
  %1088 = vmatprep.subr.mxu0 0.0
  %1089 = vmatpush2.msra.mxu0 0.0
  %1090 = vmatprep.subr.mxu0 0.0
  %1091 = vmatpush2.msra.mxu0 0.0
  %1092 = vmatprep.subr.mxu0 0.0
  %1093 = vmatpush2.msra.mxu0 0.0
  %1094 = vmatprep.mubr.f32.mxu0 0.0
  %1095 = vmatmul.mubr.f32.gmra.mxu0 %v997
  %v1096 = vpop.f32.mrf.mxu0
  %v1097 = vadd.f32 %v455, %v1096
  %v1098 = vpop.f32.mrf.mxu0
  %v1099 = vadd.f32 %v459, %v1098
  %1100 = vdwg.mxu0
  %s1101 = scalar_lea.vmem %s11, 4
  %1102 = vst [vmem:[%s1101] sm:$0x3] %v1097
  %v1103 = vmax.f32 %v1099, 0.0
  %v1104 = vld [vmem:[%s4] sm:$0xff]
  %v1105 = vld [vmem:[%s4 + $0x8] sm:$0xff]
  %v1106 = vld [vmem:[%s4 + $0x10] sm:$0xff]
  %v1107 = vld [vmem:[%s4 + $0x18] sm:$0xff]
  %v1108 = vld [vmem:[%s4 + $0x20] sm:$0xff]
  %v1109 = vld [vmem:[%s4 + $0x28] sm:$0xff]
  %v1110 = vld [vmem:[%s4 + $0x30] sm:$0xff]
  %v1111 = vld [vmem:[%s4 + $0x38] sm:$0xff]
  %v1112 = vld [vmem:[%s4 + $0x40] sm:$0xff]
  %v1113 = vld [vmem:[%s4 + $0x48] sm:$0xff]
  %v1114 = vld [vmem:[%s4 + $0x50] sm:$0xff]
  %v1115 = vld [vmem:[%s4 + $0x58] sm:$0xff]
  %v1116 = vld [vmem:[%s4 + $0x60] sm:$0xff]
  %v1117 = vld [vmem:[%s4 + $0x68] sm:$0xff]
  %v1118 = vld [vmem:[%s4 + $0x70] sm:$0xff]
  %v1119 = vld [vmem:[%s4 + $0x78] sm:$0xff]
  %v1120 = vld [vmem:[%s4 + $0x80] sm:$0xff]
  %v1121 = vld [vmem:[%s4 + $0x88] sm:$0xff]
  %v1122 = vld [vmem:[%s4 + $0x90] sm:$0xff]
  %v1123 = vld [vmem:[%s4 + $0x98] sm:$0xff]
  %v1124 = vld [vmem:[%s4 + $0xa0] sm:$0xff]
  %v1125 = vld [vmem:[%s4 + $0xa8] sm:$0xff]
  %v1126 = vld [vmem:[%s4 + $0xb0] sm:$0xff]
  %v1127 = vld [vmem:[%s4 + $0xb8] sm:$0xff]
  %v1128 = vld [vmem:[%s4 + $0xc0] sm:$0xff]
  %v1129 = vld [vmem:[%s4 + $0xc8] sm:$0xff]
  %v1130 = vld [vmem:[%s4 + $0xd0] sm:$0xff]
  %v1131 = vld [vmem:[%s4 + $0xd8] sm:$0xff]
  %v1132 = vld [vmem:[%s4 + $0xe0] sm:$0xff]
  %v1133 = vld [vmem:[%s4 + $0xe8] sm:$0xff]
  %v1134 = vld [vmem:[%s4 + $0xf0] sm:$0xff]
  %v1135 = vld [vmem:[%s4 + $0xf8] sm:$0xff]
  %v1136 = vld [vmem:[%s4 + $0x100] sm:$0xff]
  %v1137 = vld [vmem:[%s4 + $0x108] sm:$0xff]
  %v1138 = vld [vmem:[%s4 + $0x110] sm:$0xff]
  %v1139 = vld [vmem:[%s4 + $0x118] sm:$0xff]
  %v1140 = vld [vmem:[%s4 + $0x120] sm:$0xff]
  %v1141 = vld [vmem:[%s4 + $0x128] sm:$0xff]
  %v1142 = vld [vmem:[%s4 + $0x130] sm:$0xff]
  %v1143 = vld [vmem:[%s4 + $0x138] sm:$0xff]
  %v1144 = vld [vmem:[%s4 + $0x140] sm:$0xff]
  %v1145 = vld [vmem:[%s4 + $0x148] sm:$0xff]
  %v1146 = vld [vmem:[%s4 + $0x150] sm:$0xff]
  %v1147 = vld [vmem:[%s4 + $0x158] sm:$0xff]
  %v1148 = vld [vmem:[%s4 + $0x160] sm:$0xff]
  %v1149 = vld [vmem:[%s4 + $0x168] sm:$0xff]
  %v1150 = vld [vmem:[%s4 + $0x170] sm:$0xff]
  %v1151 = vld [vmem:[%s4 + $0x178] sm:$0xff]
  %1152 = vmatprep.subr.mxu0 %v1150
  %1153 = vmatpush1.msra.mxu0 %v1149
  %1154 = vmatprep.subr.mxu0 %v1147
  %1155 = vmatpush1.msra.mxu0 %v1146
  %1156 = vmatprep.subr.mxu0 %v1144
  %1157 = vmatpush1.msra.mxu0 %v1143
  %1158 = vmatprep.subr.mxu0 %v1141
  %1159 = vmatpush1.msra.mxu0 %v1140
  %1160 = vmatprep.subr.mxu0 %v1138
  %1161 = vmatpush1.msra.mxu0 %v1137
  %1162 = vmatprep.subr.mxu0 %v1135
  %1163 = vmatpush1.msra.mxu0 %v1134
  %1164 = vmatprep.subr.mxu0 %v1132
  %1165 = vmatpush1.msra.mxu0 %v1131
  %1166 = vmatprep.subr.mxu0 %v1129
  %1167 = vmatpush1.msra.mxu0 %v1128
  %1168 = vmatprep.subr.mxu0 %v1126
  %1169 = vmatpush1.msra.mxu0 %v1125
  %1170 = vmatprep.subr.mxu0 %v1123
  %1171 = vmatpush1.msra.mxu0 %v1122
  %1172 = vmatprep.subr.mxu0 %v1120
  %1173 = vmatpush1.msra.mxu0 %v1119
  %1174 = vmatprep.subr.mxu0 %v1117
  %1175 = vmatpush1.msra.mxu0 %v1116
  %1176 = vmatprep.subr.mxu0 %v1114
  %1177 = vmatpush1.msra.mxu0 %v1113
  %1178 = vmatprep.subr.mxu0 %v1111
  %1179 = vmatpush1.msra.mxu0 %v1110
  %1180 = vmatprep.subr.mxu0 %v1108
  %1181 = vmatpush1.msra.mxu0 %v1107
  %1182 = vmatprep.subr.mxu0 %v1105
  %1183 = vmatpush1.msra.mxu0 %v1104
  %1184 = vmatprep.subr.mxu0 0.0
  %1185 = vmatpush2.msra.mxu0 0.0
  %1186 = vmatprep.subr.mxu0 0.0
  %1187 = vmatpush2.msra.mxu0 0.0
  %1188 = vmatprep.subr.mxu0 0.0
  %1189 = vmatpush2.msra.mxu0 0.0
  %1190 = vmatprep.subr.mxu0 0.0
  %1191 = vmatpush2.msra.mxu0 0.0
  %1192 = vmatprep.subr.mxu0 0.0
  %1193 = vmatpush2.msra.mxu0 0.0
  %1194 = vmatprep.subr.mxu0 0.0
  %1195 = vmatpush2.msra.mxu0 0.0
  %1196 = vmatprep.subr.mxu0 0.0
  %1197 = vmatpush2.msra.mxu0 0.0
  %1198 = vmatprep.subr.mxu0 0.0
  %1199 = vmatpush2.msra.mxu0 0.0
  %1200 = vmatprep.subr.mxu0 0.0
  %1201 = vmatpush2.msra.mxu0 0.0
  %1202 = vmatprep.subr.mxu0 0.0
  %1203 = vmatpush2.msra.mxu0 0.0
  %1204 = vmatprep.subr.mxu0 0.0
  %1205 = vmatpush2.msra.mxu0 0.0
  %1206 = vmatprep.subr.mxu0 0.0
  %1207 = vmatpush2.msra.mxu0 0.0
  %1208 = vmatprep.subr.mxu0 0.0
  %1209 = vmatpush2.msra.mxu0 0.0
  %1210 = vmatprep.subr.mxu0 0.0
  %1211 = vmatpush2.msra.mxu0 0.0
  %1212 = vmatprep.subr.mxu0 0.0
  %1213 = vmatpush2.msra.mxu0 0.0
  %1214 = vmatprep.subr.mxu0 0.0
  %1215 = vmatpush2.msra.mxu0 0.0
  %1216 = vmatprep.mubr.f32.mxu0 0.0
  %1217 = vmatmul.mubr.f32.gmra.mxu0 %v1103
  %v1218 = vpop.f32.mrf.mxu0
  %v1219 = vadd.f32 0.0, %v1218
  %v1220 = vpop.f32.mrf.mxu0
  %v1221 = vadd.f32 0.0, %v1220
  %1222 = vdwg.mxu0
  %1223 = vmatprep.subr.mxu0 0.0
  %1224 = vmatpush1.msra.mxu0 %v1151
  %1225 = vmatprep.subr.mxu0 0.0
  %1226 = vmatpush1.msra.mxu0 %v1148
  %1227 = vmatprep.subr.mxu0 0.0
  %1228 = vmatpush1.msra.mxu0 %v1145
  %1229 = vmatprep.subr.mxu0 0.0
  %1230 = vmatpush1.msra.mxu0 %v1142
  %1231 = vmatprep.subr.mxu0 0.0
  %1232 = vmatpush1.msra.mxu0 %v1139
  %1233 = vmatprep.subr.mxu0 0.0
  %1234 = vmatpush1.msra.mxu0 %v1136
  %1235 = vmatprep.subr.mxu0 0.0
  %1236 = vmatpush1.msra.mxu0 %v1133
  %1237 = vmatprep.subr.mxu0 0.0
  %1238 = vmatpush1.msra.mxu0 %v1130
  %1239 = vmatprep.subr.mxu0 0.0
  %1240 = vmatpush1.msra.mxu0 %v1127
  %1241 = vmatprep.subr.mxu0 0.0
  %1242 = vmatpush1.msra.mxu0 %v1124
  %1243 = vmatprep.subr.mxu0 0.0
  %1244 = vmatpush1.msra.mxu0 %v1121
  %1245 = vmatprep.subr.mxu0 0.0
  %1246 = vmatpush1.msra.mxu0 %v1118
  %1247 = vmatprep.subr.mxu0 0.0
  %1248 = vmatpush1.msra.mxu0 %v1115
  %1249 = vmatprep.subr.mxu0 0.0
  %1250 = vmatpush1.msra.mxu0 %v1112
  %1251 = vmatprep.subr.mxu0 0.0
  %1252 = vmatpush1.msra.mxu0 %v1109
  %1253 = vmatprep.subr.mxu0 0.0
  %1254 = vmatpush1.msra.mxu0 %v1106
  %1255 = vmatprep.subr.mxu0 0.0
  %1256 = vmatpush2.msra.mxu0 0.0
  %1257 = vmatprep.subr.mxu0 0.0
  %1258 = vmatpush2.msra.mxu0 0.0
  %1259 = vmatprep.subr.mxu0 0.0
  %1260 = vmatpush2.msra.mxu0 0.0
  %1261 = vmatprep.subr.mxu0 0.0
  %1262 = vmatpush2.msra.mxu0 0.0
  %1263 = vmatprep.subr.mxu0 0.0
  %1264 = vmatpush2.msra.mxu0 0.0
  %1265 = vmatprep.subr.mxu0 0.0
  %1266 = vmatpush2.msra.mxu0 0.0
  %1267 = vmatprep.subr.mxu0 0.0
  %1268 = vmatpush2.msra.mxu0 0.0
  %1269 = vmatprep.subr.mxu0 0.0
  %1270 = vmatpush2.msra.mxu0 0.0
  %1271 = vmatprep.subr.mxu0 0.0
  %1272 = vmatpush2.msra.mxu0 0.0
  %1273 = vmatprep.subr.mxu0 0.0
  %1274 = vmatpush2.msra.mxu0 0.0
  %1275 = vmatprep.subr.mxu0 0.0
  %1276 = vmatpush2.msra.mxu0 0.0
  %1277 = vmatprep.subr.mxu0 0.0
  %1278 = vmatpush2.msra.mxu0 0.0
  %1279 = vmatprep.subr.mxu0 0.0
  %1280 = vmatpush2.msra.mxu0 0.0
  %1281 = vmatprep.subr.mxu0 0.0
  %1282 = vmatpush2.msra.mxu0 0.0
  %1283 = vmatprep.subr.mxu0 0.0
  %1284 = vmatpush2.msra.mxu0 0.0
  %1285 = vmatprep.subr.mxu0 0.0
  %1286 = vmatpush2.msra.mxu0 0.0
  %1287 = vmatprep.mubr.f32.mxu0 0.0
  %1288 = vmatmul.mubr.f32.gmra.mxu0 %v1103
  %v1289 = vpop.f32.mrf.mxu0
  %v1290 = vadd.f32 0.0, %v1289
  %v1291 = vpop.f32.mrf.mxu0
  %1292 = vdwg.mxu0
  %v1293 = vadd.f32 %v1219, %v369
  %v1294 = vxor.u32 %v1293, 2147483648
  %v1295 = vmul.f32 %v1294, 1.442695
  %v1296 = vpow.pop %v1295
  %v1297 = vadd.f32 %v1296, 1.0
  %v1298 = vrcp.pop %v1297
  %v1299 = vmul.f32 1.0, %v1298
  %v1300 = vadd.f32 %v1221, %v371
  %v1301 = vxor.u32 %v1300, 2147483648
  %v1302 = vmul.f32 %v1301, 1.442695
  %v1303 = vpow.pop %v1302
  %v1304 = vadd.f32 %v1303, 1.0
  %v1305 = vrcp.pop %v1304
  %v1306 = vmul.f32 1.0, %v1305
  %v1307 = vadd.f32 %v1290, %v448
  %v1308 = vmul.f32 %v1299, %v440
  %v1309 = vadd.f32 %v1307, %v1308
  %v1310 = vtanh.pop %v1309
  %v1311 = vsub.f32 1.0, %v1306
  %v1312 = vmul.f32 %v1311, %v1310
  %v1313 = vmul.f32 %v1306, %v236
  %v1314 = vadd.f32 %v1312, %v1313
  %v1315 = vld [vmem:[%s8] sm:$0xff]
  %v1316 = vld [vmem:[%s8 + $0x8] sm:$0xff]
  %v1317 = vld [vmem:[%s8 + $0x10] sm:$0xff]
  %v1318 = vld [vmem:[%s8 + $0x18] sm:$0xff]
  %v1319 = vld [vmem:[%s8 + $0x20] sm:$0xff]
  %v1320 = vld [vmem:[%s8 + $0x28] sm:$0xff]
  %v1321 = vld [vmem:[%s8 + $0x30] sm:$0xff]
  %v1322 = vld [vmem:[%s8 + $0x38] sm:$0xff]
  %v1323 = vld [vmem:[%s8 + $0x40] sm:$0xff]
  %v1324 = vld [vmem:[%s8 + $0x48] sm:$0xff]
  %v1325 = vld [vmem:[%s8 + $0x50] sm:$0xff]
  %v1326 = vld [vmem:[%s8 + $0x58] sm:$0xff]
  %v1327 = vld [vmem:[%s8 + $0x60] sm:$0xff]
  %v1328 = vld [vmem:[%s8 + $0x68] sm:$0xff]
  %v1329 = vld [vmem:[%s8 + $0x70] sm:$0xff]
  %v1330 = vld [vmem:[%s8 + $0x78] sm:$0xff]
  %v1331 = vld [vmem:[%s8 + $0x80] sm:$0xff]
  %v1332 = vld [vmem:[%s8 + $0x88] sm:$0xff]
  %v1333 = vld [vmem:[%s8 + $0x90] sm:$0xff]
  %v1334 = vld [vmem:[%s8 + $0x98] sm:$0xff]
  %v1335 = vld [vmem:[%s8 + $0xa0] sm:$0xff]
  %v1336 = vld [vmem:[%s8 + $0xa8] sm:$0xff]
  %v1337 = vld [vmem:[%s8 + $0xb0] sm:$0xff]
  %v1338 = vld [vmem:[%s8 + $0xb8] sm:$0xff]
  %v1339 = vld [vmem:[%s8 + $0xc0] sm:$0xff]
  %v1340 = vld [vmem:[%s8 + $0xc8] sm:$0xff]
  %v1341 = vld [vmem:[%s8 + $0xd0] sm:$0xff]
  %v1342 = vld [vmem:[%s8 + $0xd8] sm:$0xff]
  %v1343 = vld [vmem:[%s8 + $0xe0] sm:$0xff]
  %v1344 = vld [vmem:[%s8 + $0xe8] sm:$0xff]
  %v1345 = vld [vmem:[%s8 + $0xf0] sm:$0xff]
  %v1346 = vld [vmem:[%s8 + $0xf8] sm:$0xff]
  %1347 = vmatprep.subr.mxu0 %v1346
  %1348 = vmatpush1.msra.mxu0 %v1345
  %1349 = vmatprep.subr.mxu0 %v1344
  %1350 = vmatpush1.msra.mxu0 %v1343
  %1351 = vmatprep.subr.mxu0 %v1342
  %1352 = vmatpush1.msra.mxu0 %v1341
  %1353 = vmatprep.subr.mxu0 %v1340
  %1354 = vmatpush1.msra.mxu0 %v1339
  %1355 = vmatprep.subr.mxu0 %v1338
  %1356 = vmatpush1.msra.mxu0 %v1337
  %1357 = vmatprep.subr.mxu0 %v1336
  %1358 = vmatpush1.msra.mxu0 %v1335
  %1359 = vmatprep.subr.mxu0 %v1334
  %1360 = vmatpush1.msra.mxu0 %v1333
  %1361 = vmatprep.subr.mxu0 %v1332
  %1362 = vmatpush1.msra.mxu0 %v1331
  %1363 = vmatprep.subr.mxu0 %v1330
  %1364 = vmatpush1.msra.mxu0 %v1329
  %1365 = vmatprep.subr.mxu0 %v1328
  %1366 = vmatpush1.msra.mxu0 %v1327
  %1367 = vmatprep.subr.mxu0 %v1326
  %1368 = vmatpush1.msra.mxu0 %v1325
  %1369 = vmatprep.subr.mxu0 %v1324
  %1370 = vmatpush1.msra.mxu0 %v1323
  %1371 = vmatprep.subr.mxu0 %v1322
  %1372 = vmatpush1.msra.mxu0 %v1321
  %1373 = vmatprep.subr.mxu0 %v1320
  %1374 = vmatpush1.msra.mxu0 %v1319
  %1375 = vmatprep.subr.mxu0 %v1318
  %1376 = vmatpush1.msra.mxu0 %v1317
  %1377 = vmatprep.subr.mxu0 %v1316
  %1378 = vmatpush1.msra.mxu0 %v1315
  %1379 = vmatprep.subr.mxu0 0.0
  %1380 = vmatpush2.msra.mxu0 0.0
  %1381 = vmatprep.subr.mxu0 0.0
  %1382 = vmatpush2.msra.mxu0 0.0
  %1383 = vmatprep.subr.mxu0 0.0
  %1384 = vmatpush2.msra.mxu0 0.0
  %1385 = vmatprep.subr.mxu0 0.0
  %1386 = vmatpush2.msra.mxu0 0.0
  %1387 = vmatprep.subr.mxu0 0.0
  %1388 = vmatpush2.msra.mxu0 0.0
  %1389 = vmatprep.subr.mxu0 0.0
  %1390 = vmatpush2.msra.mxu0 0.0
  %1391 = vmatprep.subr.mxu0 0.0
  %1392 = vmatpush2.msra.mxu0 0.0
  %1393 = vmatprep.subr.mxu0 0.0
  %1394 = vmatpush2.msra.mxu0 0.0
  %1395 = vmatprep.subr.mxu0 0.0
  %1396 = vmatpush2.msra.mxu0 0.0
  %1397 = vmatprep.subr.mxu0 0.0
  %1398 = vmatpush2.msra.mxu0 0.0
  %1399 = vmatprep.subr.mxu0 0.0
  %1400 = vmatpush2.msra.mxu0 0.0
  %1401 = vmatprep.subr.mxu0 0.0
  %1402 = vmatpush2.msra.mxu0 0.0
  %1403 = vmatprep.subr.mxu0 0.0
  %1404 = vmatpush2.msra.mxu0 0.0
  %1405 = vmatprep.subr.mxu0 0.0
  %1406 = vmatpush2.msra.mxu0 0.0
  %1407 = vmatprep.subr.mxu0 0.0
  %1408 = vmatpush2.msra.mxu0 0.0
  %1409 = vmatprep.subr.mxu0 0.0
  %1410 = vmatpush2.msra.mxu0 0.0
  %1411 = vmatprep.mubr.f32.mxu0 0.0
  %1412 = vmatmul.mubr.f32.gmra.mxu0 %v1314
  %v1413 = vpop.f32.mrf.mxu0
  %v1414 = vadd.f32 %v455, %v1413
  %v1415 = vpop.f32.mrf.mxu0
  %v1416 = vadd.f32 %v459, %v1415
  %1417 = vdwg.mxu0
  %s1418 = scalar_lea.vmem %s11, 6
  %1419 = vst [vmem:[%s1418] sm:$0x3] %v1414
  %v1420 = vmax.f32 %v1416, 0.0
  %v1421 = vld [vmem:[%s4] sm:$0xff]
  %v1422 = vld [vmem:[%s4 + $0x8] sm:$0xff]
  %v1423 = vld [vmem:[%s4 + $0x10] sm:$0xff]
  %v1424 = vld [vmem:[%s4 + $0x18] sm:$0xff]
  %v1425 = vld [vmem:[%s4 + $0x20] sm:$0xff]
  %v1426 = vld [vmem:[%s4 + $0x28] sm:$0xff]
  %v1427 = vld [vmem:[%s4 + $0x30] sm:$0xff]
  %v1428 = vld [vmem:[%s4 + $0x38] sm:$0xff]
  %v1429 = vld [vmem:[%s4 + $0x40] sm:$0xff]
  %v1430 = vld [vmem:[%s4 + $0x48] sm:$0xff]
  %v1431 = vld [vmem:[%s4 + $0x50] sm:$0xff]
  %v1432 = vld [vmem:[%s4 + $0x58] sm:$0xff]
  %v1433 = vld [vmem:[%s4 + $0x60] sm:$0xff]
  %v1434 = vld [vmem:[%s4 + $0x68] sm:$0xff]
  %v1435 = vld [vmem:[%s4 + $0x70] sm:$0xff]
  %v1436 = vld [vmem:[%s4 + $0x78] sm:$0xff]
  %v1437 = vld [vmem:[%s4 + $0x80] sm:$0xff]
  %v1438 = vld [vmem:[%s4 + $0x88] sm:$0xff]
  %v1439 = vld [vmem:[%s4 + $0x90] sm:$0xff]
  %v1440 = vld [vmem:[%s4 + $0x98] sm:$0xff]
  %v1441 = vld [vmem:[%s4 + $0xa0] sm:$0xff]
  %v1442 = vld [vmem:[%s4 + $0xa8] sm:$0xff]
  %v1443 = vld [vmem:[%s4 + $0xb0] sm:$0xff]
  %v1444 = vld [vmem:[%s4 + $0xb8] sm:$0xff]
  %v1445 = vld [vmem:[%s4 + $0xc0] sm:$0xff]
  %v1446 = vld [vmem:[%s4 + $0xc8] sm:$0xff]
  %v1447 = vld [vmem:[%s4 + $0xd0] sm:$0xff]
  %v1448 = vld [vmem:[%s4 + $0xd8] sm:$0xff]
  %v1449 = vld [vmem:[%s4 + $0xe0] sm:$0xff]
  %v1450 = vld [vmem:[%s4 + $0xe8] sm:$0xff]
  %v1451 = vld [vmem:[%s4 + $0xf0] sm:$0xff]
  %v1452 = vld [vmem:[%s4 + $0xf8] sm:$0xff]
  %v1453 = vld [vmem:[%s4 + $0x100] sm:$0xff]
  %v1454 = vld [vmem:[%s4 + $0x108] sm:$0xff]
  %v1455 = vld [vmem:[%s4 + $0x110] sm:$0xff]
  %v1456 = vld [vmem:[%s4 + $0x118] sm:$0xff]
  %v1457 = vld [vmem:[%s4 + $0x120] sm:$0xff]
  %v1458 = vld [vmem:[%s4 + $0x128] sm:$0xff]
  %v1459 = vld [vmem:[%s4 + $0x130] sm:$0xff]
  %v1460 = vld [vmem:[%s4 + $0x138] sm:$0xff]
  %v1461 = vld [vmem:[%s4 + $0x140] sm:$0xff]
  %v1462 = vld [vmem:[%s4 + $0x148] sm:$0xff]
  %v1463 = vld [vmem:[%s4 + $0x150] sm:$0xff]
  %v1464 = vld [vmem:[%s4 + $0x158] sm:$0xff]
  %v1465 = vld [vmem:[%s4 + $0x160] sm:$0xff]
  %v1466 = vld [vmem:[%s4 + $0x168] sm:$0xff]
  %v1467 = vld [vmem:[%s4 + $0x170] sm:$0xff]
  %v1468 = vld [vmem:[%s4 + $0x178] sm:$0xff]
  %1469 = vmatprep.subr.mxu0 %v1467
  %1470 = vmatpush1.msra.mxu0 %v1466
  %1471 = vmatprep.subr.mxu0 %v1464
  %1472 = vmatpush1.msra.mxu0 %v1463
  %1473 = vmatprep.subr.mxu0 %v1461
  %1474 = vmatpush1.msra.mxu0 %v1460
  %1475 = vmatprep.subr.mxu0 %v1458
  %1476 = vmatpush1.msra.mxu0 %v1457
  %1477 = vmatprep.subr.mxu0 %v1455
  %1478 = vmatpush1.msra.mxu0 %v1454
  %1479 = vmatprep.subr.mxu0 %v1452
  %1480 = vmatpush1.msra.mxu0 %v1451
  %1481 = vmatprep.subr.mxu0 %v1449
  %1482 = vmatpush1.msra.mxu0 %v1448
  %1483 = vmatprep.subr.mxu0 %v1446
  %1484 = vmatpush1.msra.mxu0 %v1445
  %1485 = vmatprep.subr.mxu0 %v1443
  %1486 = vmatpush1.msra.mxu0 %v1442
  %1487 = vmatprep.subr.mxu0 %v1440
  %1488 = vmatpush1.msra.mxu0 %v1439
  %1489 = vmatprep.subr.mxu0 %v1437
  %1490 = vmatpush1.msra.mxu0 %v1436
  %1491 = vmatprep.subr.mxu0 %v1434
  %1492 = vmatpush1.msra.mxu0 %v1433
  %1493 = vmatprep.subr.mxu0 %v1431
  %1494 = vmatpush1.msra.mxu0 %v1430
  %1495 = vmatprep.subr.mxu0 %v1428
  %1496 = vmatpush1.msra.mxu0 %v1427
  %1497 = vmatprep.subr.mxu0 %v1425
  %1498 = vmatpush1.msra.mxu0 %v1424
  %1499 = vmatprep.subr.mxu0 %v1422
  %1500 = vmatpush1.msra.mxu0 %v1421
  %1501 = vmatprep.subr.mxu0 0.0
  %1502 = vmatpush2.msra.mxu0 0.0
  %1503 = vmatprep.subr.mxu0 0.0
  %1504 = vmatpush2.msra.mxu0 0.0
  %1505 = vmatprep.subr.mxu0 0.0
  %1506 = vmatpush2.msra.mxu0 0.0
  %1507 = vmatprep.subr.mxu0 0.0
  %1508 = vmatpush2.msra.mxu0 0.0
  %1509 = vmatprep.subr.mxu0 0.0
  %1510 = vmatpush2.msra.mxu0 0.0
  %1511 = vmatprep.subr.mxu0 0.0
  %1512 = vmatpush2.msra.mxu0 0.0
  %1513 = vmatprep.subr.mxu0 0.0
  %1514 = vmatpush2.msra.mxu0 0.0
  %1515 = vmatprep.subr.mxu0 0.0
  %1516 = vmatpush2.msra.mxu0 0.0
  %1517 = vmatprep.subr.mxu0 0.0
  %1518 = vmatpush2.msra.mxu0 0.0
  %1519 = vmatprep.subr.mxu0 0.0
  %1520 = vmatpush2.msra.mxu0 0.0
  %1521 = vmatprep.subr.mxu0 0.0
  %1522 = vmatpush2.msra.mxu0 0.0
  %1523 = vmatprep.subr.mxu0 0.0
  %1524 = vmatpush2.msra.mxu0 0.0
  %1525 = vmatprep.subr.mxu0 0.0
  %1526 = vmatpush2.msra.mxu0 0.0
  %1527 = vmatprep.subr.mxu0 0.0
  %1528 = vmatpush2.msra.mxu0 0.0
  %1529 = vmatprep.subr.mxu0 0.0
  %1530 = vmatpush2.msra.mxu0 0.0
  %1531 = vmatprep.subr.mxu0 0.0
  %1532 = vmatpush2.msra.mxu0 0.0
  %1533 = vmatprep.mubr.f32.mxu0 0.0
  %1534 = vmatmul.mubr.f32.gmra.mxu0 %v1420
  %v1535 = vpop.f32.mrf.mxu0
  %v1536 = vadd.f32 0.0, %v1535
  %v1537 = vpop.f32.mrf.mxu0
  %v1538 = vadd.f32 0.0, %v1537
  %1539 = vdwg.mxu0
  %1540 = vmatprep.subr.mxu0 0.0
  %1541 = vmatpush1.msra.mxu0 %v1468
  %1542 = vmatprep.subr.mxu0 0.0
  %1543 = vmatpush1.msra.mxu0 %v1465
  %1544 = vmatprep.subr.mxu0 0.0
  %1545 = vmatpush1.msra.mxu0 %v1462
  %1546 = vmatprep.subr.mxu0 0.0
  %1547 = vmatpush1.msra.mxu0 %v1459
  %1548 = vmatprep.subr.mxu0 0.0
  %1549 = vmatpush1.msra.mxu0 %v1456
  %1550 = vmatprep.subr.mxu0 0.0
  %1551 = vmatpush1.msra.mxu0 %v1453
  %1552 = vmatprep.subr.mxu0 0.0
  %1553 = vmatpush1.msra.mxu0 %v1450
  %1554 = vmatprep.subr.mxu0 0.0
  %1555 = vmatpush1.msra.mxu0 %v1447
  %1556 = vmatprep.subr.mxu0 0.0
  %1557 = vmatpush1.msra.mxu0 %v1444
  %1558 = vmatprep.subr.mxu0 0.0
  %1559 = vmatpush1.msra.mxu0 %v1441
  %1560 = vmatprep.subr.mxu0 0.0
  %1561 = vmatpush1.msra.mxu0 %v1438
  %1562 = vmatprep.subr.mxu0 0.0
  %1563 = vmatpush1.msra.mxu0 %v1435
  %1564 = vmatprep.subr.mxu0 0.0
  %1565 = vmatpush1.msra.mxu0 %v1432
  %1566 = vmatprep.subr.mxu0 0.0
  %1567 = vmatpush1.msra.mxu0 %v1429
  %1568 = vmatprep.subr.mxu0 0.0
  %1569 = vmatpush1.msra.mxu0 %v1426
  %1570 = vmatprep.subr.mxu0 0.0
  %1571 = vmatpush1.msra.mxu0 %v1423
  %1572 = vmatprep.subr.mxu0 0.0
  %1573 = vmatpush2.msra.mxu0 0.0
  %1574 = vmatprep.subr.mxu0 0.0
  %1575 = vmatpush2.msra.mxu0 0.0
  %1576 = vmatprep.subr.mxu0 0.0
  %1577 = vmatpush2.msra.mxu0 0.0
  %1578 = vmatprep.subr.mxu0 0.0
  %1579 = vmatpush2.msra.mxu0 0.0
  %1580 = vmatprep.subr.mxu0 0.0
  %1581 = vmatpush2.msra.mxu0 0.0
  %1582 = vmatprep.subr.mxu0 0.0
  %1583 = vmatpush2.msra.mxu0 0.0
  %1584 = vmatprep.subr.mxu0 0.0
  %1585 = vmatpush2.msra.mxu0 0.0
  %1586 = vmatprep.subr.mxu0 0.0
  %1587 = vmatpush2.msra.mxu0 0.0
  %1588 = vmatprep.subr.mxu0 0.0
  %1589 = vmatpush2.msra.mxu0 0.0
  %1590 = vmatprep.subr.mxu0 0.0
  %1591 = vmatpush2.msra.mxu0 0.0
  %1592 = vmatprep.subr.mxu0 0.0
  %1593 = vmatpush2.msra.mxu0 0.0
  %1594 = vmatprep.subr.mxu0 0.0
  %1595 = vmatpush2.msra.mxu0 0.0
  %1596 = vmatprep.subr.mxu0 0.0
  %1597 = vmatpush2.msra.mxu0 0.0
  %1598 = vmatprep.subr.mxu0 0.0
  %1599 = vmatpush2.msra.mxu0 0.0
  %1600 = vmatprep.subr.mxu0 0.0
  %1601 = vmatpush2.msra.mxu0 0.0
  %1602 = vmatprep.subr.mxu0 0.0
  %1603 = vmatpush2.msra.mxu0 0.0
  %1604 = vmatprep.mubr.f32.mxu0 0.0
  %1605 = vmatmul.mubr.f32.gmra.mxu0 %v1420
  %v1606 = vpop.f32.mrf.mxu0
  %v1607 = vadd.f32 0.0, %v1606
  %v1608 = vpop.f32.mrf.mxu0
  %1609 = vdwg.mxu0
  %v1610 = vadd.f32 %v1536, %v369
  %v1611 = vxor.u32 %v1610, 2147483648
  %v1612 = vmul.f32 %v1611, 1.442695
  %v1613 = vpow.pop %v1612
  %v1614 = vadd.f32 %v1613, 1.0
  %v1615 = vrcp.pop %v1614
  %v1616 = vmul.f32 1.0, %v1615
  %v1617 = vadd.f32 %v1538, %v371
  %v1618 = vxor.u32 %v1617, 2147483648
  %v1619 = vmul.f32 %v1618, 1.442695
  %v1620 = vpow.pop %v1619
  %v1621 = vadd.f32 %v1620, 1.0
  %v1622 = vrcp.pop %v1621
  %v1623 = vmul.f32 1.0, %v1622
  %v1624 = vadd.f32 %v1607, %v448
  %v1625 = vmul.f32 %v1616, %v440
  %v1626 = vadd.f32 %v1624, %v1625
  %v1627 = vtanh.pop %v1626
  %v1628 = vsub.f32 1.0, %v1623
  %v1629 = vmul.f32 %v1628, %v1627
  %v1630 = vmul.f32 %v1623, %v236
  %v1631 = vadd.f32 %v1629, %v1630
  %v1632 = vld [vmem:[%s8] sm:$0xff]
  %v1633 = vld [vmem:[%s8 + $0x8] sm:$0xff]
  %v1634 = vld [vmem:[%s8 + $0x10] sm:$0xff]
  %v1635 = vld [vmem:[%s8 + $0x18] sm:$0xff]
  %v1636 = vld [vmem:[%s8 + $0x20] sm:$0xff]
  %v1637 = vld [vmem:[%s8 + $0x28] sm:$0xff]
  %v1638 = vld [vmem:[%s8 + $0x30] sm:$0xff]
  %v1639 = vld [vmem:[%s8 + $0x38] sm:$0xff]
  %v1640 = vld [vmem:[%s8 + $0x40] sm:$0xff]
  %v1641 = vld [vmem:[%s8 + $0x48] sm:$0xff]
  %v1642 = vld [vmem:[%s8 + $0x50] sm:$0xff]
  %v1643 = vld [vmem:[%s8 + $0x58] sm:$0xff]
  %v1644 = vld [vmem:[%s8 + $0x60] sm:$0xff]
  %v1645 = vld [vmem:[%s8 + $0x68] sm:$0xff]
  %v1646 = vld [vmem:[%s8 + $0x70] sm:$0xff]
  %v1647 = vld [vmem:[%s8 + $0x78] sm:$0xff]
  %v1648 = vld [vmem:[%s8 + $0x80] sm:$0xff]
  %v1649 = vld [vmem:[%s8 + $0x88] sm:$0xff]
  %v1650 = vld [vmem:[%s8 + $0x90] sm:$0xff]
  %v1651 = vld [vmem:[%s8 + $0x98] sm:$0xff]
  %v1652 = vld [vmem:[%s8 + $0xa0] sm:$0xff]
  %v1653 = vld [vmem:[%s8 + $0xa8] sm:$0xff]
  %v1654 = vld [vmem:[%s8 + $0xb0] sm:$0xff]
  %v1655 = vld [vmem:[%s8 + $0xb8] sm:$0xff]
  %v1656 = vld [vmem:[%s8 + $0xc0] sm:$0xff]
  %v1657 = vld [vmem:[%s8 + $0xc8] sm:$0xff]
  %v1658 = vld [vmem:[%s8 + $0xd0] sm:$0xff]
  %v1659 = vld [vmem:[%s8 + $0xd8] sm:$0xff]
  %v1660 = vld [vmem:[%s8 + $0xe0] sm:$0xff]
  %v1661 = vld [vmem:[%s8 + $0xe8] sm:$0xff]
  %v1662 = vld [vmem:[%s8 + $0xf0] sm:$0xff]
  %v1663 = vld [vmem:[%s8 + $0xf8] sm:$0xff]
  %1664 = vmatprep.subr.mxu0 %v1663
  %1665 = vmatpush1.msra.mxu0 %v1662
  %1666 = vmatprep.subr.mxu0 %v1661
  %1667 = vmatpush1.msra.mxu0 %v1660
  %1668 = vmatprep.subr.mxu0 %v1659
  %1669 = vmatpush1.msra.mxu0 %v1658
  %1670 = vmatprep.subr.mxu0 %v1657
  %1671 = vmatpush1.msra.mxu0 %v1656
  %1672 = vmatprep.subr.mxu0 %v1655
  %1673 = vmatpush1.msra.mxu0 %v1654
  %1674 = vmatprep.subr.mxu0 %v1653
  %1675 = vmatpush1.msra.mxu0 %v1652
  %1676 = vmatprep.subr.mxu0 %v1651
  %1677 = vmatpush1.msra.mxu0 %v1650
  %1678 = vmatprep.subr.mxu0 %v1649
  %1679 = vmatpush1.msra.mxu0 %v1648
  %1680 = vmatprep.subr.mxu0 %v1647
  %1681 = vmatpush1.msra.mxu0 %v1646
  %1682 = vmatprep.subr.mxu0 %v1645
  %1683 = vmatpush1.msra.mxu0 %v1644
  %1684 = vmatprep.subr.mxu0 %v1643
  %1685 = vmatpush1.msra.mxu0 %v1642
  %1686 = vmatprep.subr.mxu0 %v1641
  %1687 = vmatpush1.msra.mxu0 %v1640
  %1688 = vmatprep.subr.mxu0 %v1639
  %1689 = vmatpush1.msra.mxu0 %v1638
  %1690 = vmatprep.subr.mxu0 %v1637
  %1691 = vmatpush1.msra.mxu0 %v1636
  %1692 = vmatprep.subr.mxu0 %v1635
  %1693 = vmatpush1.msra.mxu0 %v1634
  %1694 = vmatprep.subr.mxu0 %v1633
  %1695 = vmatpush1.msra.mxu0 %v1632
  %1696 = vmatprep.subr.mxu0 0.0
  %1697 = vmatpush2.msra.mxu0 0.0
  %1698 = vmatprep.subr.mxu0 0.0
  %1699 = vmatpush2.msra.mxu0 0.0
  %1700 = vmatprep.subr.mxu0 0.0
  %1701 = vmatpush2.msra.mxu0 0.0
  %1702 = vmatprep.subr.mxu0 0.0
  %1703 = vmatpush2.msra.mxu0 0.0
  %1704 = vmatprep.subr.mxu0 0.0
  %1705 = vmatpush2.msra.mxu0 0.0
  %1706 = vmatprep.subr.mxu0 0.0
  %1707 = vmatpush2.msra.mxu0 0.0
  %1708 = vmatprep.subr.mxu0 0.0
  %1709 = vmatpush2.msra.mxu0 0.0
  %1710 = vmatprep.subr.mxu0 0.0
  %1711 = vmatpush2.msra.mxu0 0.0
  %1712 = vmatprep.subr.mxu0 0.0
  %1713 = vmatpush2.msra.mxu0 0.0
  %1714 = vmatprep.subr.mxu0 0.0
  %1715 = vmatpush2.msra.mxu0 0.0
  %1716 = vmatprep.subr.mxu0 0.0
  %1717 = vmatpush2.msra.mxu0 0.0
  %1718 = vmatprep.subr.mxu0 0.0
  %1719 = vmatpush2.msra.mxu0 0.0
  %1720 = vmatprep.subr.mxu0 0.0
  %1721 = vmatpush2.msra.mxu0 0.0
  %1722 = vmatprep.subr.mxu0 0.0
  %1723 = vmatpush2.msra.mxu0 0.0
  %1724 = vmatprep.subr.mxu0 0.0
  %1725 = vmatpush2.msra.mxu0 0.0
  %1726 = vmatprep.subr.mxu0 0.0
  %1727 = vmatpush2.msra.mxu0 0.0
  %1728 = vmatprep.mubr.f32.mxu0 0.0
  %1729 = vmatmul.mubr.f32.gmra.mxu0 %v1631
  %v1730 = vpop.f32.mrf.mxu0
  %v1731 = vadd.f32 %v455, %v1730
  %v1732 = vpop.f32.mrf.mxu0
  %v1733 = vadd.f32 %v459, %v1732
  %1734 = vdwg.mxu0
  %s1735 = scalar_lea.vmem %s11, 8
  %1736 = vst [vmem:[%s1735] sm:$0x3] %v1731
  %v1737 = vmax.f32 %v1733, 0.0
  %v1738 = vld [vmem:[%s4] sm:$0xff]
  %v1739 = vld [vmem:[%s4 + $0x8] sm:$0xff]
  %v1740 = vld [vmem:[%s4 + $0x10] sm:$0xff]
  %v1741 = vld [vmem:[%s4 + $0x18] sm:$0xff]
  %v1742 = vld [vmem:[%s4 + $0x20] sm:$0xff]
  %v1743 = vld [vmem:[%s4 + $0x28] sm:$0xff]
  %v1744 = vld [vmem:[%s4 + $0x30] sm:$0xff]
  %v1745 = vld [vmem:[%s4 + $0x38] sm:$0xff]
  %v1746 = vld [vmem:[%s4 + $0x40] sm:$0xff]
  %v1747 = vld [vmem:[%s4 + $0x48] sm:$0xff]
  %v1748 = vld [vmem:[%s4 + $0x50] sm:$0xff]
  %v1749 = vld [vmem:[%s4 + $0x58] sm:$0xff]
  %v1750 = vld [vmem:[%s4 + $0x60] sm:$0xff]
  %v1751 = vld [vmem:[%s4 + $0x68] sm:$0xff]
  %v1752 = vld [vmem:[%s4 + $0x70] sm:$0xff]
  %v1753 = vld [vmem:[%s4 + $0x78] sm:$0xff]
  %v1754 = vld [vmem:[%s4 + $0x80] sm:$0xff]
  %v1755 = vld [vmem:[%s4 + $0x88] sm:$0xff]
  %v1756 = vld [vmem:[%s4 + $0x90] sm:$0xff]
  %v1757 = vld [vmem:[%s4 + $0x98] sm:$0xff]
  %v1758 = vld [vmem:[%s4 + $0xa0] sm:$0xff]
  %v1759 = vld [vmem:[%s4 + $0xa8] sm:$0xff]
  %v1760 = vld [vmem:[%s4 + $0xb0] sm:$0xff]
  %v1761 = vld [vmem:[%s4 + $0xb8] sm:$0xff]
  %v1762 = vld [vmem:[%s4 + $0xc0] sm:$0xff]
  %v1763 = vld [vmem:[%s4 + $0xc8] sm:$0xff]
  %v1764 = vld [vmem:[%s4 + $0xd0] sm:$0xff]
  %v1765 = vld [vmem:[%s4 + $0xd8] sm:$0xff]
  %v1766 = vld [vmem:[%s4 + $0xe0] sm:$0xff]
  %v1767 = vld [vmem:[%s4 + $0xe8] sm:$0xff]
  %v1768 = vld [vmem:[%s4 + $0xf0] sm:$0xff]
  %v1769 = vld [vmem:[%s4 + $0xf8] sm:$0xff]
  %v1770 = vld [vmem:[%s4 + $0x100] sm:$0xff]
  %v1771 = vld [vmem:[%s4 + $0x108] sm:$0xff]
  %v1772 = vld [vmem:[%s4 + $0x110] sm:$0xff]
  %v1773 = vld [vmem:[%s4 + $0x118] sm:$0xff]
  %v1774 = vld [vmem:[%s4 + $0x120] sm:$0xff]
  %v1775 = vld [vmem:[%s4 + $0x128] sm:$0xff]
  %v1776 = vld [vmem:[%s4 + $0x130] sm:$0xff]
  %v1777 = vld [vmem:[%s4 + $0x138] sm:$0xff]
  %v1778 = vld [vmem:[%s4 + $0x140] sm:$0xff]
  %v1779 = vld [vmem:[%s4 + $0x148] sm:$0xff]
  %v1780 = vld [vmem:[%s4 + $0x150] sm:$0xff]
  %v1781 = vld [vmem:[%s4 + $0x158] sm:$0xff]
  %v1782 = vld [vmem:[%s4 + $0x160] sm:$0xff]
  %v1783 = vld [vmem:[%s4 + $0x168] sm:$0xff]
  %v1784 = vld [vmem:[%s4 + $0x170] sm:$0xff]
  %v1785 = vld [vmem:[%s4 + $0x178] sm:$0xff]
  %1786 = vmatprep.subr.mxu0 %v1784
  %1787 = vmatpush1.msra.mxu0 %v1783
  %1788 = vmatprep.subr.mxu0 %v1781
  %1789 = vmatpush1.msra.mxu0 %v1780
  %1790 = vmatprep.subr.mxu0 %v1778
  %1791 = vmatpush1.msra.mxu0 %v1777
  %1792 = vmatprep.subr.mxu0 %v1775
  %1793 = vmatpush1.msra.mxu0 %v1774
  %1794 = vmatprep.subr.mxu0 %v1772
  %1795 = vmatpush1.msra.mxu0 %v1771
  %1796 = vmatprep.subr.mxu0 %v1769
  %1797 = vmatpush1.msra.mxu0 %v1768
  %1798 = vmatprep.subr.mxu0 %v1766
  %1799 = vmatpush1.msra.mxu0 %v1765
  %1800 = vmatprep.subr.mxu0 %v1763
  %1801 = vmatpush1.msra.mxu0 %v1762
  %1802 = vmatprep.subr.mxu0 %v1760
  %1803 = vmatpush1.msra.mxu0 %v1759
  %1804 = vmatprep.subr.mxu0 %v1757
  %1805 = vmatpush1.msra.mxu0 %v1756
  %1806 = vmatprep.subr.mxu0 %v1754
  %1807 = vmatpush1.msra.mxu0 %v1753
  %1808 = vmatprep.subr.mxu0 %v1751
  %1809 = vmatpush1.msra.mxu0 %v1750
  %1810 = vmatprep.subr.mxu0 %v1748
  %1811 = vmatpush1.msra.mxu0 %v1747
  %1812 = vmatprep.subr.mxu0 %v1745
  %1813 = vmatpush1.msra.mxu0 %v1744
  %1814 = vmatprep.subr.mxu0 %v1742
  %1815 = vmatpush1.msra.mxu0 %v1741
  %1816 = vmatprep.subr.mxu0 %v1739
  %1817 = vmatpush1.msra.mxu0 %v1738
  %1818 = vmatprep.subr.mxu0 0.0
  %1819 = vmatpush2.msra.mxu0 0.0
  %1820 = vmatprep.subr.mxu0 0.0
  %1821 = vmatpush2.msra.mxu0 0.0
  %1822 = vmatprep.subr.mxu0 0.0
  %1823 = vmatpush2.msra.mxu0 0.0
  %1824 = vmatprep.subr.mxu0 0.0
  %1825 = vmatpush2.msra.mxu0 0.0
  %1826 = vmatprep.subr.mxu0 0.0
  %1827 = vmatpush2.msra.mxu0 0.0
  %1828 = vmatprep.subr.mxu0 0.0
  %1829 = vmatpush2.msra.mxu0 0.0
  %1830 = vmatprep.subr.mxu0 0.0
  %1831 = vmatpush2.msra.mxu0 0.0
  %1832 = vmatprep.subr.mxu0 0.0
  %1833 = vmatpush2.msra.mxu0 0.0
  %1834 = vmatprep.subr.mxu0 0.0
  %1835 = vmatpush2.msra.mxu0 0.0
  %1836 = vmatprep.subr.mxu0 0.0
  %1837 = vmatpush2.msra.mxu0 0.0
  %1838 = vmatprep.subr.mxu0 0.0
  %1839 = vmatpush2.msra.mxu0 0.0
  %1840 = vmatprep.subr.mxu0 0.0
  %1841 = vmatpush2.msra.mxu0 0.0
  %1842 = vmatprep.subr.mxu0 0.0
  %1843 = vmatpush2.msra.mxu0 0.0
  %1844 = vmatprep.subr.mxu0 0.0
  %1845 = vmatpush2.msra.mxu0 0.0
  %1846 = vmatprep.subr.mxu0 0.0
  %1847 = vmatpush2.msra.mxu0 0.0
  %1848 = vmatprep.subr.mxu0 0.0
  %1849 = vmatpush2.msra.mxu0 0.0
  %1850 = vmatprep.mubr.f32.mxu0 0.0
  %1851 = vmatmul.mubr.f32.gmra.mxu0 %v1737
  %v1852 = vpop.f32.mrf.mxu0
  %v1853 = vadd.f32 0.0, %v1852
  %v1854 = vpop.f32.mrf.mxu0
  %v1855 = vadd.f32 0.0, %v1854
  %1856 = vdwg.mxu0
  %1857 = vmatprep.subr.mxu0 0.0
  %1858 = vmatpush1.msra.mxu0 %v1785
  %1859 = vmatprep.subr.mxu0 0.0
  %1860 = vmatpush1.msra.mxu0 %v1782
  %1861 = vmatprep.subr.mxu0 0.0
  %1862 = vmatpush1.msra.mxu0 %v1779
  %1863 = vmatprep.subr.mxu0 0.0
  %1864 = vmatpush1.msra.mxu0 %v1776
  %1865 = vmatprep.subr.mxu0 0.0
  %1866 = vmatpush1.msra.mxu0 %v1773
  %1867 = vmatprep.subr.mxu0 0.0
  %1868 = vmatpush1.msra.mxu0 %v1770
  %1869 = vmatprep.subr.mxu0 0.0
  %1870 = vmatpush1.msra.mxu0 %v1767
  %1871 = vmatprep.subr.mxu0 0.0
  %1872 = vmatpush1.msra.mxu0 %v1764
  %1873 = vmatprep.subr.mxu0 0.0
  %1874 = vmatpush1.msra.mxu0 %v1761
  %1875 = vmatprep.subr.mxu0 0.0
  %1876 = vmatpush1.msra.mxu0 %v1758
  %1877 = vmatprep.subr.mxu0 0.0
  %1878 = vmatpush1.msra.mxu0 %v1755
  %1879 = vmatprep.subr.mxu0 0.0
  %1880 = vmatpush1.msra.mxu0 %v1752
  %1881 = vmatprep.subr.mxu0 0.0
  %1882 = vmatpush1.msra.mxu0 %v1749
  %1883 = vmatprep.subr.mxu0 0.0
  %1884 = vmatpush1.msra.mxu0 %v1746
  %1885 = vmatprep.subr.mxu0 0.0
  %1886 = vmatpush1.msra.mxu0 %v1743
  %1887 = vmatprep.subr.mxu0 0.0
  %1888 = vmatpush1.msra.mxu0 %v1740
  %1889 = vmatprep.subr.mxu0 0.0
  %1890 = vmatpush2.msra.mxu0 0.0
  %1891 = vmatprep.subr.mxu0 0.0
  %1892 = vmatpush2.msra.mxu0 0.0
  %1893 = vmatprep.subr.mxu0 0.0
  %1894 = vmatpush2.msra.mxu0 0.0
  %1895 = vmatprep.subr.mxu0 0.0
  %1896 = vmatpush2.msra.mxu0 0.0
  %1897 = vmatprep.subr.mxu0 0.0
  %1898 = vmatpush2.msra.mxu0 0.0
  %1899 = vmatprep.subr.mxu0 0.0
  %1900 = vmatpush2.msra.mxu0 0.0
  %1901 = vmatprep.subr.mxu0 0.0
  %1902 = vmatpush2.msra.mxu0 0.0
  %1903 = vmatprep.subr.mxu0 0.0
  %1904 = vmatpush2.msra.mxu0 0.0
  %1905 = vmatprep.subr.mxu0 0.0
  %1906 = vmatpush2.msra.mxu0 0.0
  %1907 = vmatprep.subr.mxu0 0.0
  %1908 = vmatpush2.msra.mxu0 0.0
  %1909 = vmatprep.subr.mxu0 0.0
  %1910 = vmatpush2.msra.mxu0 0.0
  %1911 = vmatprep.subr.mxu0 0.0
  %1912 = vmatpush2.msra.mxu0 0.0
  %1913 = vmatprep.subr.mxu0 0.0
  %1914 = vmatpush2.msra.mxu0 0.0
  %1915 = vmatprep.subr.mxu0 0.0
  %1916 = vmatpush2.msra.mxu0 0.0
  %1917 = vmatprep.subr.mxu0 0.0
  %1918 = vmatpush2.msra.mxu0 0.0
  %1919 = vmatprep.subr.mxu0 0.0
  %1920 = vmatpush2.msra.mxu0 0.0
  %1921 = vmatprep.mubr.f32.mxu0 0.0
  %1922 = vmatmul.mubr.f32.gmra.mxu0 %v1737
  %v1923 = vpop.f32.mrf.mxu0
  %v1924 = vadd.f32 0.0, %v1923
  %v1925 = vpop.f32.mrf.mxu0
  %1926 = vdwg.mxu0
  %v1927 = vadd.f32 %v1853, %v369
  %v1928 = vxor.u32 %v1927, 2147483648
  %v1929 = vmul.f32 %v1928, 1.442695
  %v1930 = vpow.pop %v1929
  %v1931 = vadd.f32 %v1930, 1.0
  %v1932 = vrcp.pop %v1931
  %v1933 = vmul.f32 1.0, %v1932
  %v1934 = vadd.f32 %v1855, %v371
  %v1935 = vxor.u32 %v1934, 2147483648
  %v1936 = vmul.f32 %v1935, 1.442695
  %v1937 = vpow.pop %v1936
  %v1938 = vadd.f32 %v1937, 1.0
  %v1939 = vrcp.pop %v1938
  %v1940 = vmul.f32 1.0, %v1939
  %v1941 = vadd.f32 %v1924, %v448
  %v1942 = vmul.f32 %v1933, %v440
  %v1943 = vadd.f32 %v1941, %v1942
  %v1944 = vtanh.pop %v1943
  %v1945 = vsub.f32 1.0, %v1940
  %v1946 = vmul.f32 %v1945, %v1944
  %v1947 = vmul.f32 %v1940, %v236
  %v1948 = vadd.f32 %v1946, %v1947
  %v1949 = vld [vmem:[%s8] sm:$0xff]
  %v1950 = vld [vmem:[%s8 + $0x8] sm:$0xff]
  %v1951 = vld [vmem:[%s8 + $0x10] sm:$0xff]
  %v1952 = vld [vmem:[%s8 + $0x18] sm:$0xff]
  %v1953 = vld [vmem:[%s8 + $0x20] sm:$0xff]
  %v1954 = vld [vmem:[%s8 + $0x28] sm:$0xff]
  %v1955 = vld [vmem:[%s8 + $0x30] sm:$0xff]
  %v1956 = vld [vmem:[%s8 + $0x38] sm:$0xff]
  %v1957 = vld [vmem:[%s8 + $0x40] sm:$0xff]
  %v1958 = vld [vmem:[%s8 + $0x48] sm:$0xff]
  %v1959 = vld [vmem:[%s8 + $0x50] sm:$0xff]
  %v1960 = vld [vmem:[%s8 + $0x58] sm:$0xff]
  %v1961 = vld [vmem:[%s8 + $0x60] sm:$0xff]
  %v1962 = vld [vmem:[%s8 + $0x68] sm:$0xff]
  %v1963 = vld [vmem:[%s8 + $0x70] sm:$0xff]
  %v1964 = vld [vmem:[%s8 + $0x78] sm:$0xff]
  %v1965 = vld [vmem:[%s8 + $0x80] sm:$0xff]
  %v1966 = vld [vmem:[%s8 + $0x88] sm:$0xff]
  %v1967 = vld [vmem:[%s8 + $0x90] sm:$0xff]
  %v1968 = vld [vmem:[%s8 + $0x98] sm:$0xff]
  %v1969 = vld [vmem:[%s8 + $0xa0] sm:$0xff]
  %v1970 = vld [vmem:[%s8 + $0xa8] sm:$0xff]
  %v1971 = vld [vmem:[%s8 + $0xb0] sm:$0xff]
  %v1972 = vld [vmem:[%s8 + $0xb8] sm:$0xff]
  %v1973 = vld [vmem:[%s8 + $0xc0] sm:$0xff]
  %v1974 = vld [vmem:[%s8 + $0xc8] sm:$0xff]
  %v1975 = vld [vmem:[%s8 + $0xd0] sm:$0xff]
  %v1976 = vld [vmem:[%s8 + $0xd8] sm:$0xff]
  %v1977 = vld [vmem:[%s8 + $0xe0] sm:$0xff]
  %v1978 = vld [vmem:[%s8 + $0xe8] sm:$0xff]
  %v1979 = vld [vmem:[%s8 + $0xf0] sm:$0xff]
  %v1980 = vld [vmem:[%s8 + $0xf8] sm:$0xff]
  %1981 = vmatprep.subr.mxu0 %v1980
  %1982 = vmatpush1.msra.mxu0 %v1979
  %1983 = vmatprep.subr.mxu0 %v1978
  %1984 = vmatpush1.msra.mxu0 %v1977
  %1985 = vmatprep.subr.mxu0 %v1976
  %1986 = vmatpush1.msra.mxu0 %v1975
  %1987 = vmatprep.subr.mxu0 %v1974
  %1988 = vmatpush1.msra.mxu0 %v1973
  %1989 = vmatprep.subr.mxu0 %v1972
  %1990 = vmatpush1.msra.mxu0 %v1971
  %1991 = vmatprep.subr.mxu0 %v1970
  %1992 = vmatpush1.msra.mxu0 %v1969
  %1993 = vmatprep.subr.mxu0 %v1968
  %1994 = vmatpush1.msra.mxu0 %v1967
  %1995 = vmatprep.subr.mxu0 %v1966
  %1996 = vmatpush1.msra.mxu0 %v1965
  %1997 = vmatprep.subr.mxu0 %v1964
  %1998 = vmatpush1.msra.mxu0 %v1963
  %1999 = vmatprep.subr.mxu0 %v1962
  %2000 = vmatpush1.msra.mxu0 %v1961
  %2001 = vmatprep.subr.mxu0 %v1960
  %2002 = vmatpush1.msra.mxu0 %v1959
  %2003 = vmatprep.subr.mxu0 %v1958
  %2004 = vmatpush1.msra.mxu0 %v1957
  %2005 = vmatprep.subr.mxu0 %v1956
  %2006 = vmatpush1.msra.mxu0 %v1955
  %2007 = vmatprep.subr.mxu0 %v1954
  %2008 = vmatpush1.msra.mxu0 %v1953
  %2009 = vmatprep.subr.mxu0 %v1952
  %2010 = vmatpush1.msra.mxu0 %v1951
  %2011 = vmatprep.subr.mxu0 %v1950
  %2012 = vmatpush1.msra.mxu0 %v1949
  %2013 = vmatprep.subr.mxu0 0.0
  %2014 = vmatpush2.msra.mxu0 0.0
  %2015 = vmatprep.subr.mxu0 0.0
  %2016 = vmatpush2.msra.mxu0 0.0
  %2017 = vmatprep.subr.mxu0 0.0
  %2018 = vmatpush2.msra.mxu0 0.0
  %2019 = vmatprep.subr.mxu0 0.0
  %2020 = vmatpush2.msra.mxu0 0.0
  %2021 = vmatprep.subr.mxu0 0.0
  %2022 = vmatpush2.msra.mxu0 0.0
  %2023 = vmatprep.subr.mxu0 0.0
  %2024 = vmatpush2.msra.mxu0 0.0
  %2025 = vmatprep.subr.mxu0 0.0
  %2026 = vmatpush2.msra.mxu0 0.0
  %2027 = vmatprep.subr.mxu0 0.0
  %2028 = vmatpush2.msra.mxu0 0.0
  %2029 = vmatprep.subr.mxu0 0.0
  %2030 = vmatpush2.msra.mxu0 0.0
  %2031 = vmatprep.subr.mxu0 0.0
  %2032 = vmatpush2.msra.mxu0 0.0
  %2033 = vmatprep.subr.mxu0 0.0
  %2034 = vmatpush2.msra.mxu0 0.0
  %2035 = vmatprep.subr.mxu0 0.0
  %2036 = vmatpush2.msra.mxu0 0.0
  %2037 = vmatprep.subr.mxu0 0.0
  %2038 = vmatpush2.msra.mxu0 0.0
  %2039 = vmatprep.subr.mxu0 0.0
  %2040 = vmatpush2.msra.mxu0 0.0
  %2041 = vmatprep.subr.mxu0 0.0
  %2042 = vmatpush2.msra.mxu0 0.0
  %2043 = vmatprep.subr.mxu0 0.0
  %2044 = vmatpush2.msra.mxu0 0.0
  %2045 = vmatprep.mubr.f32.mxu0 0.0
  %2046 = vmatmul.mubr.f32.gmra.mxu0 %v1948
  %v2047 = vpop.f32.mrf.mxu0
  %v2048 = vadd.f32 %v455, %v2047
  %v2049 = vpop.f32.mrf.mxu0
  %v2050 = vadd.f32 %v459, %v2049
  %2051 = vdwg.mxu0
  %s2052 = scalar_lea.vmem %s11, 10
  %2053 = vst [vmem:[%s2052] sm:$0x3] %v2048
  %v2054 = vmax.f32 %v2050, 0.0
  %v2055 = vld [vmem:[%s4] sm:$0xff]
  %v2056 = vld [vmem:[%s4 + $0x8] sm:$0xff]
  %v2057 = vld [vmem:[%s4 + $0x10] sm:$0xff]
  %v2058 = vld [vmem:[%s4 + $0x18] sm:$0xff]
  %v2059 = vld [vmem:[%s4 + $0x20] sm:$0xff]
  %v2060 = vld [vmem:[%s4 + $0x28] sm:$0xff]
  %v2061 = vld [vmem:[%s4 + $0x30] sm:$0xff]
  %v2062 = vld [vmem:[%s4 + $0x38] sm:$0xff]
  %v2063 = vld [vmem:[%s4 + $0x40] sm:$0xff]
  %v2064 = vld [vmem:[%s4 + $0x48] sm:$0xff]
  %v2065 = vld [vmem:[%s4 + $0x50] sm:$0xff]
  %v2066 = vld [vmem:[%s4 + $0x58] sm:$0xff]
  %v2067 = vld [vmem:[%s4 + $0x60] sm:$0xff]
  %v2068 = vld [vmem:[%s4 + $0x68] sm:$0xff]
  %v2069 = vld [vmem:[%s4 + $0x70] sm:$0xff]
  %v2070 = vld [vmem:[%s4 + $0x78] sm:$0xff]
  %v2071 = vld [vmem:[%s4 + $0x80] sm:$0xff]
  %v2072 = vld [vmem:[%s4 + $0x88] sm:$0xff]
  %v2073 = vld [vmem:[%s4 + $0x90] sm:$0xff]
  %v2074 = vld [vmem:[%s4 + $0x98] sm:$0xff]
  %v2075 = vld [vmem:[%s4 + $0xa0] sm:$0xff]
  %v2076 = vld [vmem:[%s4 + $0xa8] sm:$0xff]
  %v2077 = vld [vmem:[%s4 + $0xb0] sm:$0xff]
  %v2078 = vld [vmem:[%s4 + $0xb8] sm:$0xff]
  %v2079 = vld [vmem:[%s4 + $0xc0] sm:$0xff]
  %v2080 = vld [vmem:[%s4 + $0xc8] sm:$0xff]
  %v2081 = vld [vmem:[%s4 + $0xd0] sm:$0xff]
  %v2082 = vld [vmem:[%s4 + $0xd8] sm:$0xff]
  %v2083 = vld [vmem:[%s4 + $0xe0] sm:$0xff]
  %v2084 = vld [vmem:[%s4 + $0xe8] sm:$0xff]
  %v2085 = vld [vmem:[%s4 + $0xf0] sm:$0xff]
  %v2086 = vld [vmem:[%s4 + $0xf8] sm:$0xff]
  %v2087 = vld [vmem:[%s4 + $0x100] sm:$0xff]
  %v2088 = vld [vmem:[%s4 + $0x108] sm:$0xff]
  %v2089 = vld [vmem:[%s4 + $0x110] sm:$0xff]
  %v2090 = vld [vmem:[%s4 + $0x118] sm:$0xff]
  %v2091 = vld [vmem:[%s4 + $0x120] sm:$0xff]
  %v2092 = vld [vmem:[%s4 + $0x128] sm:$0xff]
  %v2093 = vld [vmem:[%s4 + $0x130] sm:$0xff]
  %v2094 = vld [vmem:[%s4 + $0x138] sm:$0xff]
  %v2095 = vld [vmem:[%s4 + $0x140] sm:$0xff]
  %v2096 = vld [vmem:[%s4 + $0x148] sm:$0xff]
  %v2097 = vld [vmem:[%s4 + $0x150] sm:$0xff]
  %v2098 = vld [vmem:[%s4 + $0x158] sm:$0xff]
  %v2099 = vld [vmem:[%s4 + $0x160] sm:$0xff]
  %v2100 = vld [vmem:[%s4 + $0x168] sm:$0xff]
  %v2101 = vld [vmem:[%s4 + $0x170] sm:$0xff]
  %v2102 = vld [vmem:[%s4 + $0x178] sm:$0xff]
  %2103 = vmatprep.subr.mxu0 %v2101
  %2104 = vmatpush1.msra.mxu0 %v2100
  %2105 = vmatprep.subr.mxu0 %v2098
  %2106 = vmatpush1.msra.mxu0 %v2097
  %2107 = vmatprep.subr.mxu0 %v2095
  %2108 = vmatpush1.msra.mxu0 %v2094
  %2109 = vmatprep.subr.mxu0 %v2092
  %2110 = vmatpush1.msra.mxu0 %v2091
  %2111 = vmatprep.subr.mxu0 %v2089
  %2112 = vmatpush1.msra.mxu0 %v2088
  %2113 = vmatprep.subr.mxu0 %v2086
  %2114 = vmatpush1.msra.mxu0 %v2085
  %2115 = vmatprep.subr.mxu0 %v2083
  %2116 = vmatpush1.msra.mxu0 %v2082
  %2117 = vmatprep.subr.mxu0 %v2080
  %2118 = vmatpush1.msra.mxu0 %v2079
  %2119 = vmatprep.subr.mxu0 %v2077
  %2120 = vmatpush1.msra.mxu0 %v2076
  %2121 = vmatprep.subr.mxu0 %v2074
  %2122 = vmatpush1.msra.mxu0 %v2073
  %2123 = vmatprep.subr.mxu0 %v2071
  %2124 = vmatpush1.msra.mxu0 %v2070
  %2125 = vmatprep.subr.mxu0 %v2068
  %2126 = vmatpush1.msra.mxu0 %v2067
  %2127 = vmatprep.subr.mxu0 %v2065
  %2128 = vmatpush1.msra.mxu0 %v2064
  %2129 = vmatprep.subr.mxu0 %v2062
  %2130 = vmatpush1.msra.mxu0 %v2061
  %2131 = vmatprep.subr.mxu0 %v2059
  %2132 = vmatpush1.msra.mxu0 %v2058
  %2133 = vmatprep.subr.mxu0 %v2056
  %2134 = vmatpush1.msra.mxu0 %v2055
  %2135 = vmatprep.subr.mxu0 0.0
  %2136 = vmatpush2.msra.mxu0 0.0
  %2137 = vmatprep.subr.mxu0 0.0
  %2138 = vmatpush2.msra.mxu0 0.0
  %2139 = vmatprep.subr.mxu0 0.0
  %2140 = vmatpush2.msra.mxu0 0.0
  %2141 = vmatprep.subr.mxu0 0.0
  %2142 = vmatpush2.msra.mxu0 0.0
  %2143 = vmatprep.subr.mxu0 0.0
  %2144 = vmatpush2.msra.mxu0 0.0
  %2145 = vmatprep.subr.mxu0 0.0
  %2146 = vmatpush2.msra.mxu0 0.0
  %2147 = vmatprep.subr.mxu0 0.0
  %2148 = vmatpush2.msra.mxu0 0.0
  %2149 = vmatprep.subr.mxu0 0.0
  %2150 = vmatpush2.msra.mxu0 0.0
  %2151 = vmatprep.subr.mxu0 0.0
  %2152 = vmatpush2.msra.mxu0 0.0
  %2153 = vmatprep.subr.mxu0 0.0
  %2154 = vmatpush2.msra.mxu0 0.0
  %2155 = vmatprep.subr.mxu0 0.0
  %2156 = vmatpush2.msra.mxu0 0.0
  %2157 = vmatprep.subr.mxu0 0.0
  %2158 = vmatpush2.msra.mxu0 0.0
  %2159 = vmatprep.subr.mxu0 0.0
  %2160 = vmatpush2.msra.mxu0 0.0
  %2161 = vmatprep.subr.mxu0 0.0
  %2162 = vmatpush2.msra.mxu0 0.0
  %2163 = vmatprep.subr.mxu0 0.0
  %2164 = vmatpush2.msra.mxu0 0.0
  %2165 = vmatprep.subr.mxu0 0.0
  %2166 = vmatpush2.msra.mxu0 0.0
  %2167 = vmatprep.mubr.f32.mxu0 0.0
  %2168 = vmatmul.mubr.f32.gmra.mxu0 %v2054
  %v2169 = vpop.f32.mrf.mxu0
  %v2170 = vadd.f32 0.0, %v2169
  %v2171 = vpop.f32.mrf.mxu0
  %v2172 = vadd.f32 0.0, %v2171
  %2173 = vdwg.mxu0
  %2174 = vmatprep.subr.mxu0 0.0
  %2175 = vmatpush1.msra.mxu0 %v2102
  %2176 = vmatprep.subr.mxu0 0.0
  %2177 = vmatpush1.msra.mxu0 %v2099
  %2178 = vmatprep.subr.mxu0 0.0
  %2179 = vmatpush1.msra.mxu0 %v2096
  %2180 = vmatprep.subr.mxu0 0.0
  %2181 = vmatpush1.msra.mxu0 %v2093
  %2182 = vmatprep.subr.mxu0 0.0
  %2183 = vmatpush1.msra.mxu0 %v2090
  %2184 = vmatprep.subr.mxu0 0.0
  %2185 = vmatpush1.msra.mxu0 %v2087
  %2186 = vmatprep.subr.mxu0 0.0
  %2187 = vmatpush1.msra.mxu0 %v2084
  %2188 = vmatprep.subr.mxu0 0.0
  %2189 = vmatpush1.msra.mxu0 %v2081
  %2190 = vmatprep.subr.mxu0 0.0
  %2191 = vmatpush1.msra.mxu0 %v2078
  %2192 = vmatprep.subr.mxu0 0.0
  %2193 = vmatpush1.msra.mxu0 %v2075
  %2194 = vmatprep.subr.mxu0 0.0
  %2195 = vmatpush1.msra.mxu0 %v2072
  %2196 = vmatprep.subr.mxu0 0.0
  %2197 = vmatpush1.msra.mxu0 %v2069
  %2198 = vmatprep.subr.mxu0 0.0
  %2199 = vmatpush1.msra.mxu0 %v2066
  %2200 = vmatprep.subr.mxu0 0.0
  %2201 = vmatpush1.msra.mxu0 %v2063
  %2202 = vmatprep.subr.mxu0 0.0
  %2203 = vmatpush1.msra.mxu0 %v2060
  %2204 = vmatprep.subr.mxu0 0.0
  %2205 = vmatpush1.msra.mxu0 %v2057
  %2206 = vmatprep.subr.mxu0 0.0
  %2207 = vmatpush2.msra.mxu0 0.0
  %2208 = vmatprep.subr.mxu0 0.0
  %2209 = vmatpush2.msra.mxu0 0.0
  %2210 = vmatprep.subr.mxu0 0.0
  %2211 = vmatpush2.msra.mxu0 0.0
  %2212 = vmatprep.subr.mxu0 0.0
  %2213 = vmatpush2.msra.mxu0 0.0
  %2214 = vmatprep.subr.mxu0 0.0
  %2215 = vmatpush2.msra.mxu0 0.0
  %2216 = vmatprep.subr.mxu0 0.0
  %2217 = vmatpush2.msra.mxu0 0.0
  %2218 = vmatprep.subr.mxu0 0.0
  %2219 = vmatpush2.msra.mxu0 0.0
  %2220 = vmatprep.subr.mxu0 0.0
  %2221 = vmatpush2.msra.mxu0 0.0
  %2222 = vmatprep.subr.mxu0 0.0
  %2223 = vmatpush2.msra.mxu0 0.0
  %2224 = vmatprep.subr.mxu0 0.0
  %2225 = vmatpush2.msra.mxu0 0.0
  %2226 = vmatprep.subr.mxu0 0.0
  %2227 = vmatpush2.msra.mxu0 0.0
  %2228 = vmatprep.subr.mxu0 0.0
  %2229 = vmatpush2.msra.mxu0 0.0
  %2230 = vmatprep.subr.mxu0 0.0
  %2231 = vmatpush2.msra.mxu0 0.0
  %2232 = vmatprep.subr.mxu0 0.0
  %2233 = vmatpush2.msra.mxu0 0.0
  %2234 = vmatprep.subr.mxu0 0.0
  %2235 = vmatpush2.msra.mxu0 0.0
  %2236 = vmatprep.subr.mxu0 0.0
  %2237 = vmatpush2.msra.mxu0 0.0
  %2238 = vmatprep.mubr.f32.mxu0 0.0
  %2239 = vmatmul.mubr.f32.gmra.mxu0 %v2054
  %v2240 = vpop.f32.mrf.mxu0
  %v2241 = vadd.f32 0.0, %v2240
  %v2242 = vpop.f32.mrf.mxu0
  %2243 = vdwg.mxu0
  %v2244 = vadd.f32 %v2170, %v369
  %v2245 = vxor.u32 %v2244, 2147483648
  %v2246 = vmul.f32 %v2245, 1.442695
  %v2247 = vpow.pop %v2246
  %v2248 = vadd.f32 %v2247, 1.0
  %v2249 = vrcp.pop %v2248
  %v2250 = vmul.f32 1.0, %v2249
  %v2251 = vadd.f32 %v2172, %v371
  %v2252 = vxor.u32 %v2251, 2147483648
  %v2253 = vmul.f32 %v2252, 1.442695
  %v2254 = vpow.pop %v2253
  %v2255 = vadd.f32 %v2254, 1.0
  %v2256 = vrcp.pop %v2255
  %v2257 = vmul.f32 1.0, %v2256
  %v2258 = vadd.f32 %v2241, %v448
  %v2259 = vmul.f32 %v2250, %v440
  %v2260 = vadd.f32 %v2258, %v2259
  %v2261 = vtanh.pop %v2260
  %v2262 = vsub.f32 1.0, %v2257
  %v2263 = vmul.f32 %v2262, %v2261
  %v2264 = vmul.f32 %v2257, %v236
  %v2265 = vadd.f32 %v2263, %v2264
  %v2266 = vld [vmem:[%s8] sm:$0xff]
  %v2267 = vld [vmem:[%s8 + $0x8] sm:$0xff]
  %v2268 = vld [vmem:[%s8 + $0x10] sm:$0xff]
  %v2269 = vld [vmem:[%s8 + $0x18] sm:$0xff]
  %v2270 = vld [vmem:[%s8 + $0x20] sm:$0xff]
  %v2271 = vld [vmem:[%s8 + $0x28] sm:$0xff]
  %v2272 = vld [vmem:[%s8 + $0x30] sm:$0xff]
  %v2273 = vld [vmem:[%s8 + $0x38] sm:$0xff]
  %v2274 = vld [vmem:[%s8 + $0x40] sm:$0xff]
  %v2275 = vld [vmem:[%s8 + $0x48] sm:$0xff]
  %v2276 = vld [vmem:[%s8 + $0x50] sm:$0xff]
  %v2277 = vld [vmem:[%s8 + $0x58] sm:$0xff]
  %v2278 = vld [vmem:[%s8 + $0x60] sm:$0xff]
  %v2279 = vld [vmem:[%s8 + $0x68] sm:$0xff]
  %v2280 = vld [vmem:[%s8 + $0x70] sm:$0xff]
  %v2281 = vld [vmem:[%s8 + $0x78] sm:$0xff]
  %v2282 = vld [vmem:[%s8 + $0x80] sm:$0xff]
  %v2283 = vld [vmem:[%s8 + $0x88] sm:$0xff]
  %v2284 = vld [vmem:[%s8 + $0x90] sm:$0xff]
  %v2285 = vld [vmem:[%s8 + $0x98] sm:$0xff]
  %v2286 = vld [vmem:[%s8 + $0xa0] sm:$0xff]
  %v2287 = vld [vmem:[%s8 + $0xa8] sm:$0xff]
  %v2288 = vld [vmem:[%s8 + $0xb0] sm:$0xff]
  %v2289 = vld [vmem:[%s8 + $0xb8] sm:$0xff]
  %v2290 = vld [vmem:[%s8 + $0xc0] sm:$0xff]
  %v2291 = vld [vmem:[%s8 + $0xc8] sm:$0xff]
  %v2292 = vld [vmem:[%s8 + $0xd0] sm:$0xff]
  %v2293 = vld [vmem:[%s8 + $0xd8] sm:$0xff]
  %v2294 = vld [vmem:[%s8 + $0xe0] sm:$0xff]
  %v2295 = vld [vmem:[%s8 + $0xe8] sm:$0xff]
  %v2296 = vld [vmem:[%s8 + $0xf0] sm:$0xff]
  %v2297 = vld [vmem:[%s8 + $0xf8] sm:$0xff]
  %2298 = vmatprep.subr.mxu0 %v2297
  %2299 = vmatpush1.msra.mxu0 %v2296
  %2300 = vmatprep.subr.mxu0 %v2295
  %2301 = vmatpush1.msra.mxu0 %v2294
  %2302 = vmatprep.subr.mxu0 %v2293
  %2303 = vmatpush1.msra.mxu0 %v2292
  %2304 = vmatprep.subr.mxu0 %v2291
  %2305 = vmatpush1.msra.mxu0 %v2290
  %2306 = vmatprep.subr.mxu0 %v2289
  %2307 = vmatpush1.msra.mxu0 %v2288
  %2308 = vmatprep.subr.mxu0 %v2287
  %2309 = vmatpush1.msra.mxu0 %v2286
  %2310 = vmatprep.subr.mxu0 %v2285
  %2311 = vmatpush1.msra.mxu0 %v2284
  %2312 = vmatprep.subr.mxu0 %v2283
  %2313 = vmatpush1.msra.mxu0 %v2282
  %2314 = vmatprep.subr.mxu0 %v2281
  %2315 = vmatpush1.msra.mxu0 %v2280
  %2316 = vmatprep.subr.mxu0 %v2279
  %2317 = vmatpush1.msra.mxu0 %v2278
  %2318 = vmatprep.subr.mxu0 %v2277
  %2319 = vmatpush1.msra.mxu0 %v2276
  %2320 = vmatprep.subr.mxu0 %v2275
  %2321 = vmatpush1.msra.mxu0 %v2274
  %2322 = vmatprep.subr.mxu0 %v2273
  %2323 = vmatpush1.msra.mxu0 %v2272
  %2324 = vmatprep.subr.mxu0 %v2271
  %2325 = vmatpush1.msra.mxu0 %v2270
  %2326 = vmatprep.subr.mxu0 %v2269
  %2327 = vmatpush1.msra.mxu0 %v2268
  %2328 = vmatprep.subr.mxu0 %v2267
  %2329 = vmatpush1.msra.mxu0 %v2266
  %2330 = vmatprep.subr.mxu0 0.0
  %2331 = vmatpush2.msra.mxu0 0.0
  %2332 = vmatprep.subr.mxu0 0.0
  %2333 = vmatpush2.msra.mxu0 0.0
  %2334 = vmatprep.subr.mxu0 0.0
  %2335 = vmatpush2.msra.mxu0 0.0
  %2336 = vmatprep.subr.mxu0 0.0
  %2337 = vmatpush2.msra.mxu0 0.0
  %2338 = vmatprep.subr.mxu0 0.0
  %2339 = vmatpush2.msra.mxu0 0.0
  %2340 = vmatprep.subr.mxu0 0.0
  %2341 = vmatpush2.msra.mxu0 0.0
  %2342 = vmatprep.subr.mxu0 0.0
  %2343 = vmatpush2.msra.mxu0 0.0
  %2344 = vmatprep.subr.mxu0 0.0
  %2345 = vmatpush2.msra.mxu0 0.0
  %2346 = vmatprep.subr.mxu0 0.0
  %2347 = vmatpush2.msra.mxu0 0.0
  %2348 = vmatprep.subr.mxu0 0.0
  %2349 = vmatpush2.msra.mxu0 0.0
  %2350 = vmatprep.subr.mxu0 0.0
  %2351 = vmatpush2.msra.mxu0 0.0
  %2352 = vmatprep.subr.mxu0 0.0
  %2353 = vmatpush2.msra.mxu0 0.0
  %2354 = vmatprep.subr.mxu0 0.0
  %2355 = vmatpush2.msra.mxu0 0.0
  %2356 = vmatprep.subr.mxu0 0.0
  %2357 = vmatpush2.msra.mxu0 0.0
  %2358 = vmatprep.subr.mxu0 0.0
  %2359 = vmatpush2.msra.mxu0 0.0
  %2360 = vmatprep.subr.mxu0 0.0
  %2361 = vmatpush2.msra.mxu0 0.0
  %2362 = vmatprep.mubr.f32.mxu0 0.0
  %2363 = vmatmul.mubr.f32.gmra.mxu0 %v2265
  %v2364 = vpop.f32.mrf.mxu0
  %v2365 = vadd.f32 %v455, %v2364
  %v2366 = vpop.f32.mrf.mxu0
  %v2367 = vadd.f32 %v459, %v2366
  %2368 = vdwg.mxu0
  %s2369 = scalar_lea.vmem %s11, 12
  %2370 = vst [vmem:[%s2369] sm:$0x3] %v2365
  %v2371 = vmax.f32 %v2367, 0.0
  %v2372 = vld [vmem:[%s4] sm:$0xff]
  %v2373 = vld [vmem:[%s4 + $0x8] sm:$0xff]
  %v2374 = vld [vmem:[%s4 + $0x10] sm:$0xff]
  %v2375 = vld [vmem:[%s4 + $0x18] sm:$0xff]
  %v2376 = vld [vmem:[%s4 + $0x20] sm:$0xff]
  %v2377 = vld [vmem:[%s4 + $0x28] sm:$0xff]
  %v2378 = vld [vmem:[%s4 + $0x30] sm:$0xff]
  %v2379 = vld [vmem:[%s4 + $0x38] sm:$0xff]
  %v2380 = vld [vmem:[%s4 + $0x40] sm:$0xff]
  %v2381 = vld [vmem:[%s4 + $0x48] sm:$0xff]
  %v2382 = vld [vmem:[%s4 + $0x50] sm:$0xff]
  %v2383 = vld [vmem:[%s4 + $0x58] sm:$0xff]
  %v2384 = vld [vmem:[%s4 + $0x60] sm:$0xff]
  %v2385 = vld [vmem:[%s4 + $0x68] sm:$0xff]
  %v2386 = vld [vmem:[%s4 + $0x70] sm:$0xff]
  %v2387 = vld [vmem:[%s4 + $0x78] sm:$0xff]
  %v2388 = vld [vmem:[%s4 + $0x80] sm:$0xff]
  %v2389 = vld [vmem:[%s4 + $0x88] sm:$0xff]
  %v2390 = vld [vmem:[%s4 + $0x90] sm:$0xff]
  %v2391 = vld [vmem:[%s4 + $0x98] sm:$0xff]
  %v2392 = vld [vmem:[%s4 + $0xa0] sm:$0xff]
  %v2393 = vld [vmem:[%s4 + $0xa8] sm:$0xff]
  %v2394 = vld [vmem:[%s4 + $0xb0] sm:$0xff]
  %v2395 = vld [vmem:[%s4 + $0xb8] sm:$0xff]
  %v2396 = vld [vmem:[%s4 + $0xc0] sm:$0xff]
  %v2397 = vld [vmem:[%s4 + $0xc8] sm:$0xff]
  %v2398 = vld [vmem:[%s4 + $0xd0] sm:$0xff]
  %v2399 = vld [vmem:[%s4 + $0xd8] sm:$0xff]
  %v2400 = vld [vmem:[%s4 + $0xe0] sm:$0xff]
  %v2401 = vld [vmem:[%s4 + $0xe8] sm:$0xff]
  %v2402 = vld [vmem:[%s4 + $0xf0] sm:$0xff]
  %v2403 = vld [vmem:[%s4 + $0xf8] sm:$0xff]
  %v2404 = vld [vmem:[%s4 + $0x100] sm:$0xff]
  %v2405 = vld [vmem:[%s4 + $0x108] sm:$0xff]
  %v2406 = vld [vmem:[%s4 + $0x110] sm:$0xff]
  %v2407 = vld [vmem:[%s4 + $0x118] sm:$0xff]
  %v2408 = vld [vmem:[%s4 + $0x120] sm:$0xff]
  %v2409 = vld [vmem:[%s4 + $0x128] sm:$0xff]
  %v2410 = vld [vmem:[%s4 + $0x130] sm:$0xff]
  %v2411 = vld [vmem:[%s4 + $0x138] sm:$0xff]
  %v2412 = vld [vmem:[%s4 + $0x140] sm:$0xff]
  %v2413 = vld [vmem:[%s4 + $0x148] sm:$0xff]
  %v2414 = vld [vmem:[%s4 + $0x150] sm:$0xff]
  %v2415 = vld [vmem:[%s4 + $0x158] sm:$0xff]
  %v2416 = vld [vmem:[%s4 + $0x160] sm:$0xff]
  %v2417 = vld [vmem:[%s4 + $0x168] sm:$0xff]
  %v2418 = vld [vmem:[%s4 + $0x170] sm:$0xff]
  %v2419 = vld [vmem:[%s4 + $0x178] sm:$0xff]
  %2420 = vmatprep.subr.mxu0 %v2418
  %2421 = vmatpush1.msra.mxu0 %v2417
  %2422 = vmatprep.subr.mxu0 %v2415
  %2423 = vmatpush1.msra.mxu0 %v2414
  %2424 = vmatprep.subr.mxu0 %v2412
  %2425 = vmatpush1.msra.mxu0 %v2411
  %2426 = vmatprep.subr.mxu0 %v2409
  %2427 = vmatpush1.msra.mxu0 %v2408
  %2428 = vmatprep.subr.mxu0 %v2406
  %2429 = vmatpush1.msra.mxu0 %v2405
  %2430 = vmatprep.subr.mxu0 %v2403
  %2431 = vmatpush1.msra.mxu0 %v2402
  %2432 = vmatprep.subr.mxu0 %v2400
  %2433 = vmatpush1.msra.mxu0 %v2399
  %2434 = vmatprep.subr.mxu0 %v2397
  %2435 = vmatpush1.msra.mxu0 %v2396
  %2436 = vmatprep.subr.mxu0 %v2394
  %2437 = vmatpush1.msra.mxu0 %v2393
  %2438 = vmatprep.subr.mxu0 %v2391
  %2439 = vmatpush1.msra.mxu0 %v2390
  %2440 = vmatprep.subr.mxu0 %v2388
  %2441 = vmatpush1.msra.mxu0 %v2387
  %2442 = vmatprep.subr.mxu0 %v2385
  %2443 = vmatpush1.msra.mxu0 %v2384
  %2444 = vmatprep.subr.mxu0 %v2382
  %2445 = vmatpush1.msra.mxu0 %v2381
  %2446 = vmatprep.subr.mxu0 %v2379
  %2447 = vmatpush1.msra.mxu0 %v2378
  %2448 = vmatprep.subr.mxu0 %v2376
  %2449 = vmatpush1.msra.mxu0 %v2375
  %2450 = vmatprep.subr.mxu0 %v2373
  %2451 = vmatpush1.msra.mxu0 %v2372
  %2452 = vmatprep.subr.mxu0 0.0
  %2453 = vmatpush2.msra.mxu0 0.0
  %2454 = vmatprep.subr.mxu0 0.0
  %2455 = vmatpush2.msra.mxu0 0.0
  %2456 = vmatprep.subr.mxu0 0.0
  %2457 = vmatpush2.msra.mxu0 0.0
  %2458 = vmatprep.subr.mxu0 0.0
  %2459 = vmatpush2.msra.mxu0 0.0
  %2460 = vmatprep.subr.mxu0 0.0
  %2461 = vmatpush2.msra.mxu0 0.0
  %2462 = vmatprep.subr.mxu0 0.0
  %2463 = vmatpush2.msra.mxu0 0.0
  %2464 = vmatprep.subr.mxu0 0.0
  %2465 = vmatpush2.msra.mxu0 0.0
  %2466 = vmatprep.subr.mxu0 0.0
  %2467 = vmatpush2.msra.mxu0 0.0
  %2468 = vmatprep.subr.mxu0 0.0
  %2469 = vmatpush2.msra.mxu0 0.0
  %2470 = vmatprep.subr.mxu0 0.0
  %2471 = vmatpush2.msra.mxu0 0.0
  %2472 = vmatprep.subr.mxu0 0.0
  %2473 = vmatpush2.msra.mxu0 0.0
  %2474 = vmatprep.subr.mxu0 0.0
  %2475 = vmatpush2.msra.mxu0 0.0
  %2476 = vmatprep.subr.mxu0 0.0
  %2477 = vmatpush2.msra.mxu0 0.0
  %2478 = vmatprep.subr.mxu0 0.0
  %2479 = vmatpush2.msra.mxu0 0.0
  %2480 = vmatprep.subr.mxu0 0.0
  %2481 = vmatpush2.msra.mxu0 0.0
  %2482 = vmatprep.subr.mxu0 0.0
  %2483 = vmatpush2.msra.mxu0 0.0
  %2484 = vmatprep.mubr.f32.mxu0 0.0
  %2485 = vmatmul.mubr.f32.gmra.mxu0 %v2371
  %v2486 = vpop.f32.mrf.mxu0
  %v2487 = vadd.f32 0.0, %v2486
  %v2488 = vpop.f32.mrf.mxu0
  %v2489 = vadd.f32 0.0, %v2488
  %2490 = vdwg.mxu0
  %2491 = vmatprep.subr.mxu0 0.0
  %2492 = vmatpush1.msra.mxu0 %v2419
  %2493 = vmatprep.subr.mxu0 0.0
  %2494 = vmatpush1.msra.mxu0 %v2416
  %2495 = vmatprep.subr.mxu0 0.0
  %2496 = vmatpush1.msra.mxu0 %v2413
  %2497 = vmatprep.subr.mxu0 0.0
  %2498 = vmatpush1.msra.mxu0 %v2410
  %2499 = vmatprep.subr.mxu0 0.0
  %2500 = vmatpush1.msra.mxu0 %v2407
  %2501 = vmatprep.subr.mxu0 0.0
  %2502 = vmatpush1.msra.mxu0 %v2404
  %2503 = vmatprep.subr.mxu0 0.0
  %2504 = vmatpush1.msra.mxu0 %v2401
  %2505 = vmatprep.subr.mxu0 0.0
  %2506 = vmatpush1.msra.mxu0 %v2398
  %2507 = vmatprep.subr.mxu0 0.0
  %2508 = vmatpush1.msra.mxu0 %v2395
  %2509 = vmatprep.subr.mxu0 0.0
  %2510 = vmatpush1.msra.mxu0 %v2392
  %2511 = vmatprep.subr.mxu0 0.0
  %2512 = vmatpush1.msra.mxu0 %v2389
  %2513 = vmatprep.subr.mxu0 0.0
  %2514 = vmatpush1.msra.mxu0 %v2386
  %2515 = vmatprep.subr.mxu0 0.0
  %2516 = vmatpush1.msra.mxu0 %v2383
  %2517 = vmatprep.subr.mxu0 0.0
  %2518 = vmatpush1.msra.mxu0 %v2380
  %2519 = vmatprep.subr.mxu0 0.0
  %2520 = vmatpush1.msra.mxu0 %v2377
  %2521 = vmatprep.subr.mxu0 0.0
  %2522 = vmatpush1.msra.mxu0 %v2374
  %2523 = vmatprep.subr.mxu0 0.0
  %2524 = vmatpush2.msra.mxu0 0.0
  %2525 = vmatprep.subr.mxu0 0.0
  %2526 = vmatpush2.msra.mxu0 0.0
  %2527 = vmatprep.subr.mxu0 0.0
  %2528 = vmatpush2.msra.mxu0 0.0
  %2529 = vmatprep.subr.mxu0 0.0
  %2530 = vmatpush2.msra.mxu0 0.0
  %2531 = vmatprep.subr.mxu0 0.0
  %2532 = vmatpush2.msra.mxu0 0.0
  %2533 = vmatprep.subr.mxu0 0.0
  %2534 = vmatpush2.msra.mxu0 0.0
  %2535 = vmatprep.subr.mxu0 0.0
  %2536 = vmatpush2.msra.mxu0 0.0
  %2537 = vmatprep.subr.mxu0 0.0
  %2538 = vmatpush2.msra.mxu0 0.0
  %2539 = vmatprep.subr.mxu0 0.0
  %2540 = vmatpush2.msra.mxu0 0.0
  %2541 = vmatprep.subr.mxu0 0.0
  %2542 = vmatpush2.msra.mxu0 0.0
  %2543 = vmatprep.subr.mxu0 0.0
  %2544 = vmatpush2.msra.mxu0 0.0
  %2545 = vmatprep.subr.mxu0 0.0
  %2546 = vmatpush2.msra.mxu0 0.0
  %2547 = vmatprep.subr.mxu0 0.0
  %2548 = vmatpush2.msra.mxu0 0.0
  %2549 = vmatprep.subr.mxu0 0.0
  %2550 = vmatpush2.msra.mxu0 0.0
  %2551 = vmatprep.subr.mxu0 0.0
  %2552 = vmatpush2.msra.mxu0 0.0
  %2553 = vmatprep.subr.mxu0 0.0
  %2554 = vmatpush2.msra.mxu0 0.0
  %2555 = vmatprep.mubr.f32.mxu0 0.0
  %2556 = vmatmul.mubr.f32.gmra.mxu0 %v2371
  %v2557 = vpop.f32.mrf.mxu0
  %v2558 = vadd.f32 0.0, %v2557
  %v2559 = vpop.f32.mrf.mxu0
  %2560 = vdwg.mxu0
  %v2561 = vadd.f32 %v2487, %v369
  %v2562 = vxor.u32 %v2561, 2147483648
  %v2563 = vmul.f32 %v2562, 1.442695
  %v2564 = vpow.pop %v2563
  %v2565 = vadd.f32 %v2564, 1.0
  %v2566 = vrcp.pop %v2565
  %v2567 = vmul.f32 1.0, %v2566
  %v2568 = vadd.f32 %v2489, %v371
  %v2569 = vxor.u32 %v2568, 2147483648
  %v2570 = vmul.f32 %v2569, 1.442695
  %v2571 = vpow.pop %v2570
  %v2572 = vadd.f32 %v2571, 1.0
  %v2573 = vrcp.pop %v2572
  %v2574 = vmul.f32 1.0, %v2573
  %v2575 = vadd.f32 %v2558, %v448
  %v2576 = vmul.f32 %v2567, %v440
  %v2577 = vadd.f32 %v2575, %v2576
  %v2578 = vtanh.pop %v2577
  %v2579 = vsub.f32 1.0, %v2574
  %v2580 = vmul.f32 %v2579, %v2578
  %v2581 = vmul.f32 %v2574, %v236
  %v2582 = vadd.f32 %v2580, %v2581
  %v2583 = vld [vmem:[%s8] sm:$0xff]
  %v2584 = vld [vmem:[%s8 + $0x8] sm:$0xff]
  %v2585 = vld [vmem:[%s8 + $0x10] sm:$0xff]
  %v2586 = vld [vmem:[%s8 + $0x18] sm:$0xff]
  %v2587 = vld [vmem:[%s8 + $0x20] sm:$0xff]
  %v2588 = vld [vmem:[%s8 + $0x28] sm:$0xff]
  %v2589 = vld [vmem:[%s8 + $0x30] sm:$0xff]
  %v2590 = vld [vmem:[%s8 + $0x38] sm:$0xff]
  %v2591 = vld [vmem:[%s8 + $0x40] sm:$0xff]
  %v2592 = vld [vmem:[%s8 + $0x48] sm:$0xff]
  %v2593 = vld [vmem:[%s8 + $0x50] sm:$0xff]
  %v2594 = vld [vmem:[%s8 + $0x58] sm:$0xff]
  %v2595 = vld [vmem:[%s8 + $0x60] sm:$0xff]
  %v2596 = vld [vmem:[%s8 + $0x68] sm:$0xff]
  %v2597 = vld [vmem:[%s8 + $0x70] sm:$0xff]
  %v2598 = vld [vmem:[%s8 + $0x78] sm:$0xff]
  %v2599 = vld [vmem:[%s8 + $0x80] sm:$0xff]
  %v2600 = vld [vmem:[%s8 + $0x88] sm:$0xff]
  %v2601 = vld [vmem:[%s8 + $0x90] sm:$0xff]
  %v2602 = vld [vmem:[%s8 + $0x98] sm:$0xff]
  %v2603 = vld [vmem:[%s8 + $0xa0] sm:$0xff]
  %v2604 = vld [vmem:[%s8 + $0xa8] sm:$0xff]
  %v2605 = vld [vmem:[%s8 + $0xb0] sm:$0xff]
  %v2606 = vld [vmem:[%s8 + $0xb8] sm:$0xff]
  %v2607 = vld [vmem:[%s8 + $0xc0] sm:$0xff]
  %v2608 = vld [vmem:[%s8 + $0xc8] sm:$0xff]
  %v2609 = vld [vmem:[%s8 + $0xd0] sm:$0xff]
  %v2610 = vld [vmem:[%s8 + $0xd8] sm:$0xff]
  %v2611 = vld [vmem:[%s8 + $0xe0] sm:$0xff]
  %v2612 = vld [vmem:[%s8 + $0xe8] sm:$0xff]
  %v2613 = vld [vmem:[%s8 + $0xf0] sm:$0xff]
  %v2614 = vld [vmem:[%s8 + $0xf8] sm:$0xff]
  %2615 = vmatprep.subr.mxu0 %v2614
  %2616 = vmatpush1.msra.mxu0 %v2613
  %2617 = vmatprep.subr.mxu0 %v2612
  %2618 = vmatpush1.msra.mxu0 %v2611
  %2619 = vmatprep.subr.mxu0 %v2610
  %2620 = vmatpush1.msra.mxu0 %v2609
  %2621 = vmatprep.subr.mxu0 %v2608
  %2622 = vmatpush1.msra.mxu0 %v2607
  %2623 = vmatprep.subr.mxu0 %v2606
  %2624 = vmatpush1.msra.mxu0 %v2605
  %2625 = vmatprep.subr.mxu0 %v2604
  %2626 = vmatpush1.msra.mxu0 %v2603
  %2627 = vmatprep.subr.mxu0 %v2602
  %2628 = vmatpush1.msra.mxu0 %v2601
  %2629 = vmatprep.subr.mxu0 %v2600
  %2630 = vmatpush1.msra.mxu0 %v2599
  %2631 = vmatprep.subr.mxu0 %v2598
  %2632 = vmatpush1.msra.mxu0 %v2597
  %2633 = vmatprep.subr.mxu0 %v2596
  %2634 = vmatpush1.msra.mxu0 %v2595
  %2635 = vmatprep.subr.mxu0 %v2594
  %2636 = vmatpush1.msra.mxu0 %v2593
  %2637 = vmatprep.subr.mxu0 %v2592
  %2638 = vmatpush1.msra.mxu0 %v2591
  %2639 = vmatprep.subr.mxu0 %v2590
  %2640 = vmatpush1.msra.mxu0 %v2589
  %2641 = vmatprep.subr.mxu0 %v2588
  %2642 = vmatpush1.msra.mxu0 %v2587
  %2643 = vmatprep.subr.mxu0 %v2586
  %2644 = vmatpush1.msra.mxu0 %v2585
  %2645 = vmatprep.subr.mxu0 %v2584
  %2646 = vmatpush1.msra.mxu0 %v2583
  %2647 = vmatprep.subr.mxu0 0.0
  %2648 = vmatpush2.msra.mxu0 0.0
  %2649 = vmatprep.subr.mxu0 0.0
  %2650 = vmatpush2.msra.mxu0 0.0
  %2651 = vmatprep.subr.mxu0 0.0
  %2652 = vmatpush2.msra.mxu0 0.0
  %2653 = vmatprep.subr.mxu0 0.0
  %2654 = vmatpush2.msra.mxu0 0.0
  %2655 = vmatprep.subr.mxu0 0.0
  %2656 = vmatpush2.msra.mxu0 0.0
  %2657 = vmatprep.subr.mxu0 0.0
  %2658 = vmatpush2.msra.mxu0 0.0
  %2659 = vmatprep.subr.mxu0 0.0
  %2660 = vmatpush2.msra.mxu0 0.0
  %2661 = vmatprep.subr.mxu0 0.0
  %2662 = vmatpush2.msra.mxu0 0.0
  %2663 = vmatprep.subr.mxu0 0.0
  %2664 = vmatpush2.msra.mxu0 0.0
  %2665 = vmatprep.subr.mxu0 0.0
  %2666 = vmatpush2.msra.mxu0 0.0
  %2667 = vmatprep.subr.mxu0 0.0
  %2668 = vmatpush2.msra.mxu0 0.0
  %2669 = vmatprep.subr.mxu0 0.0
  %2670 = vmatpush2.msra.mxu0 0.0
  %2671 = vmatprep.subr.mxu0 0.0
  %2672 = vmatpush2.msra.mxu0 0.0
  %2673 = vmatprep.subr.mxu0 0.0
  %2674 = vmatpush2.msra.mxu0 0.0
  %2675 = vmatprep.subr.mxu0 0.0
  %2676 = vmatpush2.msra.mxu0 0.0
  %2677 = vmatprep.subr.mxu0 0.0
  %2678 = vmatpush2.msra.mxu0 0.0
  %2679 = vmatprep.mubr.f32.mxu0 0.0
  %2680 = vmatmul.mubr.f32.gmra.mxu0 %v2582
  %v2681 = vpop.f32.mrf.mxu0
  %v2682 = vadd.f32 %v455, %v2681
  %v2683 = vpop.f32.mrf.mxu0
  %2684 = vdwg.mxu0
  %s2685 = scalar_lea.vmem %s11, 14
  %2686 = vst [vmem:[%s2685] sm:$0x3] %v2682
  // Predicated region
  $region46: #{cluster2gesture_forward.1} parent=0 // pred_check
    _
  $region47: #{cluster2gesture_forward.1} parent=0 // pred_check_branch
    %2688 = sbr.rel (0) target = $region49
  $region48: #{cluster2gesture_forward.1} parent=0 // pred_region
    _
  $region49: #{cluster2gesture_forward.1} parent=0 // pred_fallthru
    _
  // Predicated region
  $region50: #{cluster2gesture_forward.1} parent=0 // pred_check
    _
  $region51: #{cluster2gesture_forward.1} parent=0 // pred_check_branch
    %2690 = sbr.rel (0) target = $region53
  $region52: #{cluster2gesture_forward.1} parent=0 // pred_region
    _
  $region53: #{cluster2gesture_forward.1} parent=0 // pred_fallthru
    _

</llo_original>
